<compile_context>
chip_gen: v7x
topology: tpu7x:2x2x1
jax: 0.10.0
libtpu: 0.0.40
codegen_flags: <defaults>
</compile_context>

<pallas_src>
import functools
import math

import jax
import jax.numpy as jnp
from jax.experimental import pallas as pl
from jax.experimental.pallas import tpu as pltpu

LN_EPS = 1e-12                 # BertLayerNorm eps
INIT_RANGE = 0.02              # config.initializer_range
_SQRT1_2 = 0.7071067811865476  # 1/sqrt(2) for erf-GELU
_VMEM_LIMIT = 48 * 1024 * 1024  # > v5e 16MiB / v7x 32MiB scoped defaults, < 64MiB physical


def _pick_tile(dim, target, align):
    """Largest t <= target with t % align == 0 and dim % t == 0; else full dim."""
    if dim <= target:
        return dim
    t = (target // align) * align
    while t >= align:
        if dim % t == 0:
            return t
        t -= align
    return dim


def _row_tile(m, target=512, full_upto=1024):
    """bf16-friendly (16-aligned) row tile; keep all of M resident when small."""
    if m <= full_upto:
        return m
    return _pick_tile(m, target, 16)


# ---------------------------------------------------------------------------
# Pallas kernels
# ---------------------------------------------------------------------------
def _mm_bias_kernel(x_ref, w_ref, b_ref, o_ref, acc_ref):
    """Tiled y = x @ w + b, f32 accumulation."""
    k = pl.program_id(2)

    @pl.when(k == 0)
    def _():
        acc_ref[...] = jnp.zeros_like(acc_ref)

    acc_ref[...] += jnp.dot(x_ref[...], w_ref[...],
                            preferred_element_type=jnp.float32)

    @pl.when(k == pl.num_programs(2) - 1)
    def _():
        o_ref[...] = (acc_ref[...] + b_ref[...].astype(jnp.float32)
                      ).astype(o_ref.dtype)


def _mm_bias_res_ln_kernel(x_ref, w_ref, b_ref, r_ref, g_ref, beta_ref,
                           o_ref, acc_ref):
    """Tiled y = LayerNorm(x @ w + b + residual); LN stats in f32."""
    k = pl.program_id(2)

    @pl.when(k == 0)
    def _():
        acc_ref[...] = jnp.zeros_like(acc_ref)

    acc_ref[...] += jnp.dot(x_ref[...], w_ref[...],
                            preferred_element_type=jnp.float32)

    @pl.when(k == pl.num_programs(2) - 1)
    def _():
        h = (acc_ref[...] + b_ref[...].astype(jnp.float32)
             + r_ref[...].astype(jnp.float32))
        mu = jnp.mean(h, axis=-1, keepdims=True)
        var = jnp.mean(jnp.square(h - mu), axis=-1, keepdims=True)
        y = (h - mu) * jax.lax.rsqrt(var + LN_EPS)
        o_ref[...] = (y * g_ref[...].astype(jnp.float32)
                      + beta_ref[...].astype(jnp.float32)).astype(o_ref.dtype)


def _ffn_kernel(x_ref, wi_ref, bi_ref, wo2_ref, b2_ref, g_ref, beta_ref,
                o_ref, acc_ref):
    """Fused FFN: acc += GELU(x @ wi + bi) @ wo2 over intermediate tiles; the
    residual (= x) + bias + LayerNorm epilogue runs on the last tile. The
    [tm, intermediate] activation never leaves VMEM."""
    j = pl.program_id(1)

    @pl.when(j == 0)
    def _():
        acc_ref[...] = jnp.zeros_like(acc_ref)

    h = jnp.dot(x_ref[...], wi_ref[...], preferred_element_type=jnp.float32)
    h = h + bi_ref[...].astype(jnp.float32)
    # original BERT gelu: x * 0.5 * (1 + erf(x / sqrt(2)))
    h = h * 0.5 * (1.0 + jax.lax.erf(h * _SQRT1_2))
    acc_ref[...] += jnp.dot(h.astype(x_ref.dtype), wo2_ref[...],
                            preferred_element_type=jnp.float32)

    @pl.when(j == pl.num_programs(1) - 1)
    def _():
        t = (acc_ref[...] + b2_ref[...].astype(jnp.float32)
             + x_ref[...].astype(jnp.float32))          # residual = FFN input
        mu = jnp.mean(t, axis=-1, keepdims=True)
        var = jnp.mean(jnp.square(t - mu), axis=-1, keepdims=True)
        y = (t - mu) * jax.lax.rsqrt(var + LN_EPS)
        o_ref[...] = (y * g_ref[...].astype(jnp.float32)
                      + beta_ref[...].astype(jnp.float32)).astype(o_ref.dtype)


def _emb_ln_kernel(w_ref, t_ref, p_ref, g_ref, b_ref, o_ref):
    """LayerNorm(word + type + position); bf16 inputs upcast to f32 for stats."""
    h = (w_ref[...].astype(jnp.float32) + t_ref[...].astype(jnp.float32)
         + p_ref[...].astype(jnp.float32))
    mu = jnp.mean(h, axis=-1, keepdims=True)
    var = jnp.mean(jnp.square(h - mu), axis=-1, keepdims=True)
    y = (h - mu) * jax.lax.rsqrt(var + LN_EPS)
    o_ref[...] = (y * g_ref[...].astype(jnp.float32)
                  + b_ref[...].astype(jnp.float32)).astype(o_ref.dtype)


def _attn_kernel(q_ref, k_ref, v_ref, o_ref, m_sc, l_sc, acc_sc, *,
                 heads_per_block, head_dim):
    """Flash-style attention over KV blocks for a lane-dense group of heads.
    1/sqrt(head_dim) is pre-folded into the Q projection weights. Per-head
    contexts are written directly into their output lanes (no concatenate)."""
    kv = pl.program_id(2)

    @pl.when(kv == 0)
    def _():
        m_sc[...] = jnp.full(m_sc.shape, -jnp.inf, dtype=m_sc.dtype)
        l_sc[...] = jnp.zeros(l_sc.shape, dtype=l_sc.dtype)
        acc_sc[...] = jnp.zeros(acc_sc.shape, dtype=acc_sc.dtype)

    k = k_ref[...]
    v = v_ref[...]
    for g in range(heads_per_block):        # G is tiny (<= 2 for head_dim=64)
        lo = g * head_dim
        qg = q_ref[:, lo:lo + head_dim]
        kg = k[:, lo:lo + head_dim]
        vg = v[:, lo:lo + head_dim]
        s = jax.lax.dot_general(qg, kg, (((1,), (1,)), ((), ())),
                                preferred_element_type=jnp.float32)  # [Sq, tkv]
        m_prev = m_sc[g]
        m_new = jnp.maximum(m_prev, jnp.max(s, axis=-1, keepdims=True))
        alpha = jnp.exp(m_prev - m_new)
        p = jnp.exp(s - m_new)
        l_sc[g] = alpha * l_sc[g] + jnp.sum(p, axis=-1, keepdims=True)
        acc_sc[:, lo:lo + head_dim] = (
            alpha * acc_sc[:, lo:lo + head_dim]
            + jnp.dot(p.astype(vg.dtype), vg, preferred_element_type=jnp.float32))
        m_sc[g] = m_new

    @pl.when(kv == pl.num_programs(2) - 1)
    def _():
        for g in range(heads_per_block):
            lo = g * head_dim
            inv = pl.reciprocal(l_sc[g], approx=True)
            o_ref[:, lo:lo + head_dim] = (
                acc_sc[:, lo:lo + head_dim] * inv).astype(o_ref.dtype)


# ---------------------------------------------------------------------------
# Pallas wrappers
# ---------------------------------------------------------------------------
def linear(x, w, b, *, residual=None, gamma=None, beta=None,
           out_dtype=jnp.bfloat16, tm=512, tn=1024, tk=512):
    """Tiled matmul: y = x @ w + b, optionally with residual + LayerNorm epilogue."""
    M, K = x.shape
    N = w.shape[1]
    fuse_ln = residual is not None

    tm = _row_tile(M, tm)
    tk = _pick_tile(K, tk, 256)
    tn = N if fuse_ln else _pick_tile(N, tn, 256)   # LN needs the full hidden dim
    grid = (M // tm, N // tn, K // tk)

    x_spec = pl.BlockSpec((tm, tk), lambda i, j, k: (i, k))
    w_spec = pl.BlockSpec((tk, tn), lambda i, j, k: (k, j))
    b_spec = pl.BlockSpec((1, tn), lambda i, j, k: (0, j))
    o_spec = pl.BlockSpec((tm, tn), lambda i, j, k: (i, j))

    cparams = pltpu.CompilerParams(
        dimension_semantics=("parallel", "parallel", "arbitrary"),
        vmem_limit_bytes=_VMEM_LIMIT)

    if fuse_ln:
        r_spec = pl.BlockSpec((tm, tn), lambda i, j, k: (i, j))
        ln_spec = pl.BlockSpec((1, tn), lambda i, j, k: (0, j))
        kernel = _mm_bias_res_ln_kernel
        in_specs = [x_spec, w_spec, b_spec, r_spec, ln_spec, ln_spec]
        args = (x, w, b.reshape(1, N), residual,
                gamma.reshape(1, N), beta.reshape(1, N))
    else:
        kernel = _mm_bias_kernel
        in_specs = [x_spec, w_spec, b_spec]
        args = (x, w, b.reshape(1, N))

    return pl.pallas_call(
        kernel,
        out_shape=jax.ShapeDtypeStruct((M, N), out_dtype),
        grid=grid,
        in_specs=in_specs,
        out_specs=o_spec,
        scratch_shapes=[pltpu.VMEM((tm, tn), jnp.float32)],
        compiler_params=cparams,
    )(*args)


def ffn(x, wi, bi, wo2, b2, gamma, beta, *, out_dtype=jnp.bfloat16,
        tm=512, tf=512):
    """Fused FFN block: LayerNorm(GELU(x @ wi + bi) @ wo2 + b2 + x)."""
    M, H = x.shape
    I = wi.shape[1]
    tm = _row_tile(M, tm)
    tf = _pick_tile(I, tf, 256)
    grid = (M // tm, I // tf)

    return pl.pallas_call(
        _ffn_kernel,
        out_shape=jax.ShapeDtypeStruct((M, H), out_dtype),
        grid=grid,
        in_specs=[
            pl.BlockSpec((tm, H), lambda i, j: (i, 0)),   # x (also the residual)
            pl.BlockSpec((H, tf), lambda i, j: (0, j)),   # wi
            pl.BlockSpec((1, tf), lambda i, j: (0, j)),   # bi
            pl.BlockSpec((tf, H), lambda i, j: (j, 0)),   # wo2
            pl.BlockSpec((1, H), lambda i, j: (0, 0)),    # b2
            pl.BlockSpec((1, H), lambda i, j: (0, 0)),    # gamma
            pl.BlockSpec((1, H), lambda i, j: (0, 0)),    # beta
        ],
        out_specs=pl.BlockSpec((tm, H), lambda i, j: (i, 0)),
        scratch_shapes=[pltpu.VMEM((tm, H), jnp.float32)],
        compiler_params=pltpu.CompilerParams(
            dimension_semantics=("parallel", "arbitrary"),
            vmem_limit_bytes=_VMEM_LIMIT),
    )(x, wi, bi.reshape(1, I), wo2, b2.reshape(1, H),
      gamma.reshape(1, H), beta.reshape(1, H))


def attention(qkv, B, S, H, num_heads):
    """qkv: [B*S, 3H] (Q already scaled). Returns context [B*S, H], heads on lanes."""
    Dh = H // num_heads
    G = min(num_heads, max(1, 128 // Dh))
    while num_heads % G:
        G -= 1
    blk = G * Dh
    assert blk % 128 == 0, "head group must be lane-dense (G*head_dim % 128 == 0)"
    assert S % 8 == 0, "sequence length must be a multiple of 8"
    NHG = num_heads // G
    tkv = _pick_tile(S, 512, 128)          # KV rows per online-softmax step
    nkv = S // tkv

    q_spec = pl.BlockSpec((S, blk), lambda b, hg, kv: (b, hg))
    k_spec = pl.BlockSpec((tkv, blk), lambda b, hg, kv: (b * nkv + kv, NHG + hg))
    v_spec = pl.BlockSpec((tkv, blk), lambda b, hg, kv: (b * nkv + kv, 2 * NHG + hg))
    o_spec = pl.BlockSpec((S, blk), lambda b, hg, kv: (b, hg))

    return pl.pallas_call(
        functools.partial(_attn_kernel, heads_per_block=G, head_dim=Dh),
        out_shape=jax.ShapeDtypeStruct((B * S, H), qkv.dtype),
        grid=(B, NHG, nkv),
        in_specs=[q_spec, k_spec, v_spec],
        out_specs=o_spec,
        scratch_shapes=[pltpu.VMEM((G, S, 1), jnp.float32),   # running max
                        pltpu.VMEM((G, S, 1), jnp.float32),   # running sum
                        pltpu.VMEM((S, blk), jnp.float32)],   # context accumulator
        compiler_params=pltpu.CompilerParams(
            dimension_semantics=("parallel", "parallel", "arbitrary"),
            vmem_limit_bytes=_VMEM_LIMIT),
    )(qkv, qkv, qkv)


def embed_layernorm(word_g, type_g, pos_emb, gamma, beta, B, S,
                    out_dtype=jnp.bfloat16):
    """LN(word + type + pos); pos_emb is [S, H], re-used for every batch."""
    T, H = word_g.shape
    ts = _pick_tile(S, 512, 16)
    SB = S // ts
    tok_spec = pl.BlockSpec((ts, H), lambda b, sb: (b * SB + sb, 0))
    pos_spec = pl.BlockSpec((ts, H), lambda b, sb: (sb, 0))
    vec_spec = pl.BlockSpec((1, H), lambda b, sb: (0, 0))
    return pl.pallas_call(
        _emb_ln_kernel,
        out_shape=jax.ShapeDtypeStruct((T, H), out_dtype),
        grid=(B, SB),
        in_specs=[tok_spec, tok_spec, pos_spec, vec_spec, vec_spec],
        out_specs=tok_spec,
        compiler_params=pltpu.CompilerParams(
            dimension_semantics=("parallel", "parallel"),
            vmem_limit_bytes=_VMEM_LIMIT),
    )(word_g, type_g, pos_emb, gamma.reshape(1, H), beta.reshape(1, H))


# ---------------------------------------------------------------------------
# Parameter init (mirrors init_bert_weights: normal(0, 0.02) weights,
# zero biases, LayerNorm gamma=1 / beta=0). Matmul weights & embeddings bf16.
# ---------------------------------------------------------------------------
def init_params(key, *, vocab, max_pos, type_vocab, hidden, num_heads,
                intermediate, num_layers):
    def normal(k, shape):
        return jax.random.normal(k, shape, jnp.float32) * INIT_RANGE

    head_dim = hidden // num_heads
    q_scale = 1.0 / math.sqrt(head_dim)

    keys = jax.random.split(key, 3 + num_layers)
    params = {
        "word_emb": normal(keys[0], (vocab, hidden)).astype(jnp.bfloat16),
        "pos_emb": normal(keys[1], (max_pos, hidden)).astype(jnp.bfloat16),
        "type_emb": normal(keys[2], (type_vocab, hidden)).astype(jnp.bfloat16),
        "emb_ln_g": jnp.ones((hidden,), jnp.float32),
        "emb_ln_b": jnp.zeros((hidden,), jnp.float32),
        "layers": [],
    }
    for li in range(num_layers):
        ks = jax.random.split(keys[3 + li], 6)
        # nn.Linear weight is [out, in]; stored transposed ([in, out]) for x @ W.
        wq = normal(ks[0], (hidden, hidden)).T
        wk = normal(ks[1], (hidden, hidden)).T
        wv = normal(ks[2], (hidden, hidden)).T
        # Fused QKV weight; the 1/sqrt(head_dim) score scale is folded into Q
        # (and its bias), mathematically identical to scaling QK^T.
        w_qkv = jnp.concatenate([wq * q_scale, wk, wv], axis=1)
        b_qkv = jnp.zeros((3 * hidden,), jnp.float32)  # zero biases (scale moot)
        layer = {
            "w_qkv": w_qkv.astype(jnp.bfloat16),
            "b_qkv": b_qkv,
            "wo": normal(ks[3], (hidden, hidden)).T.astype(jnp.bfloat16),
            "bo": jnp.zeros((hidden,), jnp.float32),
            "ln1_g": jnp.ones((hidden,), jnp.float32),
            "ln1_b": jnp.zeros((hidden,), jnp.float32),
            "wi": normal(ks[4], (intermediate, hidden)).T.astype(jnp.bfloat16),
            "bi": jnp.zeros((intermediate,), jnp.float32),
            "wo2": normal(ks[5], (hidden, intermediate)).T.astype(jnp.bfloat16),
            "bo2": jnp.zeros((hidden,), jnp.float32),
            "ln2_g": jnp.ones((hidden,), jnp.float32),
            "ln2_b": jnp.zeros((hidden,), jnp.float32),
        }
        params["layers"].append(layer)
    return params


# ---------------------------------------------------------------------------
# Stage0 forward
# ---------------------------------------------------------------------------
def bert_layer(x, p, B, S, num_heads):
    T, H = x.shape
    qkv = linear(x, p["w_qkv"], p["b_qkv"])                       # [T, 3H]
    ctx = attention(qkv, B, S, H, num_heads)                      # [T, H]
    x = linear(ctx, p["wo"], p["bo"], residual=x,                 # out-proj + res + LN
               gamma=p["ln1_g"], beta=p["ln1_b"])
    x = ffn(x, p["wi"], p["bi"], p["wo2"], p["bo2"],              # fused GELU FFN + res + LN
            p["ln2_g"], p["ln2_b"])
    return x


def stage0_forward(params, input_ids, token_type_ids, *, num_heads):
    B, S = input_ids.shape
    H = params["word_emb"].shape[1]

    # TODO(synk): embedding gathers stay in XLA (jnp.take); a Pallas gather would
    # need scalar-prefetch DMA machinery for no bandwidth win here.
    word_g = jnp.take(params["word_emb"], input_ids.reshape(-1), axis=0)       # [T, H]
    type_g = jnp.take(params["type_emb"], token_type_ids.reshape(-1), axis=0)  # [T, H]
    pos = params["pos_emb"][:S]                                                # [S, H]

    x = embed_layernorm(word_g, type_g, pos,
                        params["emb_ln_g"], params["emb_ln_b"], B, S)
    # TODO(synk): dropout layers are identity (eval/inference semantics only).
    # TODO(synk): no attention mask is applied, matching `layer(out)` without a mask.

    for layer in params["layers"]:
        x = bert_layer(x, layer, B, S, num_heads)

    return x.reshape(B, S, H).astype(jnp.float32)


if __name__ == "__main__":
    # Small synthetic config (Stage0 builds num_hidden_layers // 4 BertLayers).
    # Shapes kept TPU-friendly: hidden is lane-aligned, head_dim=64 so two heads
    # form one 128-lane attention block.
    B, S = 2, 16
    VOCAB, MAX_POS, TYPE_VOCAB = 100, 64, 2
    HIDDEN, NUM_HEADS, INTERMEDIATE = 128, 2, 512
    NUM_HIDDEN_LAYERS = 8          # -> 8 // 4 = 2 layers in this stage
    STAGE_LAYERS = NUM_HIDDEN_LAYERS // 4

    key = jax.random.PRNGKey(0)
    k_params, k_ids, k_types = jax.random.split(key, 3)

    params = init_params(
        k_params, vocab=VOCAB, max_pos=MAX_POS, type_vocab=TYPE_VOCAB,
        hidden=HIDDEN, num_heads=NUM_HEADS, intermediate=INTERMEDIATE,
        num_layers=STAGE_LAYERS)

    input_ids = jax.random.randint(k_ids, (B, S), 0, VOCAB, dtype=jnp.int32)
    token_type_ids = jax.random.randint(k_types, (B, S), 0, TYPE_VOCAB,
                                        dtype=jnp.int32)

    forward = jax.jit(functools.partial(stage0_forward, num_heads=NUM_HEADS))
    out = forward(params, input_ids, token_type_ids)
    jax.block_until_ready(out)

    assert out.shape == (B, S, HIDDEN) and out.dtype == jnp.float32
    assert bool(jnp.isfinite(out).all())
    print("KERNEL_OK")
</pallas_src>

<mosaic_0001>
module attributes {stable_mosaic.version = 11 : i64} {
  func.func @_mm_bias_kernel(%arg0: i32, %arg1: i32, %arg2: i32, %arg3: memref<32x128xbf16, #tpu.memory_space<vmem>>, %arg4: memref<128x384xbf16, #tpu.memory_space<vmem>>, %arg5: memref<1x384xf32, #tpu.memory_space<vmem>>, %arg6: memref<32x384xbf16, #tpu.memory_space<vmem>>, %arg7: memref<32x384xf32, #tpu.memory_space<vmem>>) attributes {dimension_semantics = [#tpu.dimension_semantics<parallel>, #tpu.dimension_semantics<parallel>, #tpu.dimension_semantics<arbitrary>], iteration_bounds = array<i64: 1, 1, 1>, scalar_prefetch = 0 : i64, scratch_operands = 1 : i64, tpu.core_type = #tpu.core_type<tc>, window_params = [{transform_indices = @transform_0, window_bounds = array<i64: 32, 128>}, {transform_indices = @transform_1, window_bounds = array<i64: 128, 384>}, {transform_indices = @transform_2, window_bounds = array<i64: 1, 384>}, {transform_indices = @transform_3, window_bounds = array<i64: 32, 384>}]} {
    %c0_i32 = arith.constant 0 : i32
    %0 = arith.cmpi eq, %arg2, %c0_i32 : i32
    %1 = arith.extui %0 : i1 to i32
    %c0_i32_0 = arith.constant 0 : i32
    %2 = arith.cmpi ne, %1, %c0_i32_0 : i32
    scf.if %2 {
      %cst_10 = arith.constant 0.000000e+00 : f32
      %12 = vector.broadcast %cst_10 : f32 to vector<32x384xf32>
      %c0_11 = arith.constant 0 : index
      %c0_12 = arith.constant 0 : index
      %13 = vector.load %arg7[%c0_11, %c0_12] : memref<32x384xf32, #tpu.memory_space<vmem>>, vector<32x384xf32>
      tpu.vector_store %arg7[%c0_11, %c0_12], %12 {strides = array<i32>} : memref<32x384xf32, #tpu.memory_space<vmem>>, vector<32x384xf32>,
    } else {
    }
    %c0 = arith.constant 0 : index
    %c0_1 = arith.constant 0 : index
    %3 = vector.load %arg7[%c0, %c0_1] : memref<32x384xf32, #tpu.memory_space<vmem>>, vector<32x384xf32>
    %c0_2 = arith.constant 0 : index
    %c0_3 = arith.constant 0 : index
    %4 = vector.load %arg3[%c0_2, %c0_3] : memref<32x128xbf16, #tpu.memory_space<vmem>>, vector<32x128xbf16>
    %c0_4 = arith.constant 0 : index
    %c0_5 = arith.constant 0 : index
    %5 = vector.load %arg4[%c0_4, %c0_5] : memref<128x384xbf16, #tpu.memory_space<vmem>>, vector<128x384xbf16>
    %cst = arith.constant dense<0.000000e+00> : vector<32x384xf32>
    %6 = tpu.matmul %4, %5, %cst {dimension_numbers = #tpu.dot_dimension_numbers<[1], [0], [0], [1], [0, 0, 1, 1], [], []>} : vector<32x128xbf16>, vector<128x384xbf16>, vector<32x384xf32> -> vector<32x384xf32>
    %7 = arith.addf %3, %6 : vector<32x384xf32>
    %c0_6 = arith.constant 0 : index
    %c0_7 = arith.constant 0 : index
    %8 = vector.load %arg7[%c0_6, %c0_7] : memref<32x384xf32, #tpu.memory_space<vmem>>, vector<32x384xf32>
    tpu.vector_store %arg7[%c0_6, %c0_7], %7 {strides = array<i32>} : memref<32x384xf32, #tpu.memory_space<vmem>>, vector<32x384xf32>,
    %c0_i32_8 = arith.constant 0 : i32
    %9 = arith.cmpi eq, %arg2, %c0_i32_8 : i32
    %10 = arith.extui %9 : i1 to i32
    %c0_i32_9 = arith.constant 0 : i32
    %11 = arith.cmpi ne, %10, %c0_i32_9 : i32
    scf.if %11 {
      %c0_10 = arith.constant 0 : index
      %c0_11 = arith.constant 0 : index
      %12 = vector.load %arg7[%c0_10, %c0_11] : memref<32x384xf32, #tpu.memory_space<vmem>>, vector<32x384xf32>
      %c0_12 = arith.constant 0 : index
      %c0_13 = arith.constant 0 : index
      %13 = vector.load %arg5[%c0_12, %c0_13] : memref<1x384xf32, #tpu.memory_space<vmem>>, vector<1x384xf32>
      %14 = vector.broadcast %13 : vector<1x384xf32> to vector<32x384xf32>
      %15 = arith.addf %12, %14 : vector<32x384xf32>
      %16 = arith.truncf %15 : vector<32x384xf32> to vector<32x384xbf16>
      %c0_14 = arith.constant 0 : index
      %c0_15 = arith.constant 0 : index
      %17 = vector.load %arg6[%c0_14, %c0_15] : memref<32x384xbf16, #tpu.memory_space<vmem>>, vector<32x384xbf16>
      tpu.vector_store %arg6[%c0_14, %c0_15], %16 {strides = array<i32>} : memref<32x384xbf16, #tpu.memory_space<vmem>>, vector<32x384xbf16>,
    } else {
    }
    return
  }
  func.func @transform_0(%arg0: i32, %arg1: i32, %arg2: i32) -> (i32, i32) {
    %c0_i32 = arith.constant 0 : i32
    return %arg0, %arg2 : i32, i32
  }
  func.func @transform_1(%arg0: i32, %arg1: i32, %arg2: i32) -> (i32, i32) {
    %c0_i32 = arith.constant 0 : i32
    return %arg2, %arg1 : i32, i32
  }
  func.func @transform_2(%arg0: i32, %arg1: i32, %arg2: i32) -> (i32, i32) {
    %c0_i32 = arith.constant 0 : i32
    %c0_i32_0 = arith.constant 0 : i32
    return %c0_i32, %arg1 : i32, i32
  }
  func.func @transform_3(%arg0: i32, %arg1: i32, %arg2: i32) -> (i32, i32) {
    %c0_i32 = arith.constant 0 : i32
    return %arg0, %arg1 : i32, i32
  }
}

module attributes {stable_mosaic.version = 11 : i64} {
  func.func @_emb_ln_kernel(%arg0: i32, %arg1: i32, %arg2: memref<16x128xbf16, #tpu.memory_space<vmem>>, %arg3: memref<16x128xbf16, #tpu.memory_space<vmem>>, %arg4: memref<16x128xbf16, #tpu.memory_space<vmem>>, %arg5: memref<1x128xf32, #tpu.memory_space<vmem>>, %arg6: memref<1x128xf32, #tpu.memory_space<vmem>>, %arg7: memref<16x128xbf16, #tpu.memory_space<vmem>>) attributes {dimension_semantics = [#tpu.dimension_semantics<parallel>, #tpu.dimension_semantics<parallel>], iteration_bounds = array<i64: 2, 1>, scalar_prefetch = 0 : i64, scratch_operands = 0 : i64, tpu.core_type = #tpu.core_type<tc>, window_params = [{transform_indices = @transform_0, window_bounds = array<i64: 16, 128>}, {transform_indices = @transform_1, window_bounds = array<i64: 16, 128>}, {transform_indices = @transform_2, window_bounds = array<i64: 16, 128>}, {pipeline_mode = #tpu.pipeline_mode<synchronous>, transform_indices = @transform_3, window_bounds = array<i64: 1, 128>}, {pipeline_mode = #tpu.pipeline_mode<synchronous>, transform_indices = @transform_4, window_bounds = array<i64: 1, 128>}, {transform_indices = @transform_5, window_bounds = array<i64: 16, 128>}]} {
    %c0 = arith.constant 0 : index
    %c0_0 = arith.constant 0 : index
    %0 = vector.load %arg2[%c0, %c0_0] : memref<16x128xbf16, #tpu.memory_space<vmem>>, vector<16x128xbf16>
    %1 = arith.extf %0 : vector<16x128xbf16> to vector<16x128xf32>
    %c0_1 = arith.constant 0 : index
    %c0_2 = arith.constant 0 : index
    %2 = vector.load %arg3[%c0_1, %c0_2] : memref<16x128xbf16, #tpu.memory_space<vmem>>, vector<16x128xbf16>
    %3 = arith.extf %2 : vector<16x128xbf16> to vector<16x128xf32>
    %4 = arith.addf %1, %3 : vector<16x128xf32>
    %c0_3 = arith.constant 0 : index
    %c0_4 = arith.constant 0 : index
    %5 = vector.load %arg4[%c0_3, %c0_4] : memref<16x128xbf16, #tpu.memory_space<vmem>>, vector<16x128xbf16>
    %6 = arith.extf %5 : vector<16x128xbf16> to vector<16x128xf32>
    %7 = arith.addf %4, %6 : vector<16x128xf32>
    %cst = arith.constant dense<0.000000e+00> : vector<16xf32>
    %8 = vector.multi_reduction <add>, %7, %cst [1] : vector<16x128xf32> to vector<16xf32>
    %9 = vector.shape_cast %8 : vector<16xf32> to vector<16x1xf32>
    %cst_5 = arith.constant 1.280000e+02 : f32
    %10 = vector.broadcast %cst_5 : f32 to vector<16x1xf32>
    %11 = arith.divf %9, %10 : vector<16x1xf32>
    %12 = vector.broadcast %11 : vector<16x1xf32> to vector<16x128xf32>
    %13 = arith.subf %7, %12 : vector<16x128xf32>
    %14 = arith.mulf %13, %13 : vector<16x128xf32>
    %cst_6 = arith.constant dense<0.000000e+00> : vector<16xf32>
    %15 = vector.multi_reduction <add>, %14, %cst_6 [1] : vector<16x128xf32> to vector<16xf32>
    %16 = vector.shape_cast %15 : vector<16xf32> to vector<16x1xf32>
    %cst_7 = arith.constant 1.280000e+02 : f32
    %17 = vector.broadcast %cst_7 : f32 to vector<16x1xf32>
    %18 = arith.divf %16, %17 : vector<16x1xf32>
    %19 = vector.broadcast %11 : vector<16x1xf32> to vector<16x128xf32>
    %20 = arith.subf %7, %19 : vector<16x128xf32>
    %cst_8 = arith.constant 9.99999996E-13 : f32
    %21 = vector.broadcast %cst_8 : f32 to vector<16x1xf32>
    %22 = arith.addf %18, %21 : vector<16x1xf32>
    %23 = math.rsqrt %22 : vector<16x1xf32>
    %24 = vector.broadcast %23 : vector<16x1xf32> to vector<16x128xf32>
    %25 = arith.mulf %20, %24 : vector<16x128xf32>
    %c0_9 = arith.constant 0 : index
    %c0_10 = arith.constant 0 : index
    %26 = vector.load %arg5[%c0_9, %c0_10] : memref<1x128xf32, #tpu.memory_space<vmem>>, vector<1x128xf32>
    %27 = vector.broadcast %26 : vector<1x128xf32> to vector<16x128xf32>
    %28 = arith.mulf %25, %27 : vector<16x128xf32>
    %c0_11 = arith.constant 0 : index
    %c0_12 = arith.constant 0 : index
    %29 = vector.load %arg6[%c0_11, %c0_12] : memref<1x128xf32, #tpu.memory_space<vmem>>, vector<1x128xf32>
    %30 = vector.broadcast %29 : vector<1x128xf32> to vector<16x128xf32>
    %31 = arith.addf %28, %30 : vector<16x128xf32>
    %32 = arith.truncf %31 : vector<16x128xf32> to vector<16x128xbf16>
    %c0_13 = arith.constant 0 : index
    %c0_14 = arith.constant 0 : index
    %33 = vector.load %arg7[%c0_13, %c0_14] : memref<16x128xbf16, #tpu.memory_space<vmem>>, vector<16x128xbf16>
    tpu.vector_store %arg7[%c0_13, %c0_14], %32 {strides = array<i32>} : memref<16x128xbf16, #tpu.memory_space<vmem>>, vector<16x128xbf16>,
    return
  }
  func.func @transform_0(%arg0: i32, %arg1: i32) -> (i32, i32) {
    %c1_i32 = arith.constant 1 : i32
    %0 = arith.muli %arg0, %c1_i32 : i32
    %1 = arith.addi %0, %arg1 : i32
    %c0_i32 = arith.constant 0 : i32
    %c0_i32_0 = arith.constant 0 : i32
    return %1, %c0_i32 : i32, i32
  }
  func.func @transform_1(%arg0: i32, %arg1: i32) -> (i32, i32) {
    %c1_i32 = arith.constant 1 : i32
    %0 = arith.muli %arg0, %c1_i32 : i32
    %1 = arith.addi %0, %arg1 : i32
    %c0_i32 = arith.constant 0 : i32
    %c0_i32_0 = arith.constant 0 : i32
    return %1, %c0_i32 : i32, i32
  }
  func.func @transform_2(%arg0: i32, %arg1: i32) -> (i32, i32) {
    %c0_i32 = arith.constant 0 : i32
    %c0_i32_0 = arith.constant 0 : i32
    return %arg1, %c0_i32 : i32, i32
  }
  func.func @transform_3(%arg0: i32, %arg1: i32) -> (i32, i32) {
    %c0_i32 = arith.constant 0 : i32
    %c0_i32_0 = arith.constant 0 : i32
    %c0_i32_1 = arith.constant 0 : i32
    return %c0_i32, %c0_i32_0 : i32, i32
  }
  func.func @transform_4(%arg0: i32, %arg1: i32) -> (i32, i32) {
    %c0_i32 = arith.constant 0 : i32
    %c0_i32_0 = arith.constant 0 : i32
    %c0_i32_1 = arith.constant 0 : i32
    return %c0_i32, %c0_i32_0 : i32, i32
  }
  func.func @transform_5(%arg0: i32, %arg1: i32) -> (i32, i32) {
    %c1_i32 = arith.constant 1 : i32
    %0 = arith.muli %arg0, %c1_i32 : i32
    %1 = arith.addi %0, %arg1 : i32
    %c0_i32 = arith.constant 0 : i32
    %c0_i32_0 = arith.constant 0 : i32
    return %1, %c0_i32 : i32, i32
  }
}

module attributes {stable_mosaic.version = 11 : i64} {
  func.func @_mm_bias_res_ln_kernel(%arg0: i32, %arg1: i32, %arg2: i32, %arg3: memref<32x128xbf16, #tpu.memory_space<vmem>>, %arg4: memref<128x128xbf16, #tpu.memory_space<vmem>>, %arg5: memref<1x128xf32, #tpu.memory_space<vmem>>, %arg6: memref<32x128xbf16, #tpu.memory_space<vmem>>, %arg7: memref<1x128xf32, #tpu.memory_space<vmem>>, %arg8: memref<1x128xf32, #tpu.memory_space<vmem>>, %arg9: memref<32x128xbf16, #tpu.memory_space<vmem>>, %arg10: memref<32x128xf32, #tpu.memory_space<vmem>>) attributes {dimension_semantics = [#tpu.dimension_semantics<parallel>, #tpu.dimension_semantics<parallel>, #tpu.dimension_semantics<arbitrary>], iteration_bounds = array<i64: 1, 1, 1>, scalar_prefetch = 0 : i64, scratch_operands = 1 : i64, tpu.core_type = #tpu.core_type<tc>, window_params = [{transform_indices = @transform_0, window_bounds = array<i64: 32, 128>}, {transform_indices = @transform_1, window_bounds = array<i64: 128, 128>}, {transform_indices = @transform_2, window_bounds = array<i64: 1, 128>}, {transform_indices = @transform_3, window_bounds = array<i64: 32, 128>}, {transform_indices = @transform_4, window_bounds = array<i64: 1, 128>}, {transform_indices = @transform_5, window_bounds = array<i64: 1, 128>}, {transform_indices = @transform_6, window_bounds = array<i64: 32, 128>}]} {
    %c0_i32 = arith.constant 0 : i32
    %0 = arith.cmpi eq, %arg2, %c0_i32 : i32
    %1 = arith.extui %0 : i1 to i32
    %c0_i32_0 = arith.constant 0 : i32
    %2 = arith.cmpi ne, %1, %c0_i32_0 : i32
    scf.if %2 {
      %cst_10 = arith.constant 0.000000e+00 : f32
      %12 = vector.broadcast %cst_10 : f32 to vector<32x128xf32>
      %c0_11 = arith.constant 0 : index
      %c0_12 = arith.constant 0 : index
      %13 = vector.load %arg10[%c0_11, %c0_12] : memref<32x128xf32, #tpu.memory_space<vmem>>, vector<32x128xf32>
      tpu.vector_store %arg10[%c0_11, %c0_12], %12 {strides = array<i32>} : memref<32x128xf32, #tpu.memory_space<vmem>>, vector<32x128xf32>,
    } else {
    }
    %c0 = arith.constant 0 : index
    %c0_1 = arith.constant 0 : index
    %3 = vector.load %arg10[%c0, %c0_1] : memref<32x128xf32, #tpu.memory_space<vmem>>, vector<32x128xf32>
    %c0_2 = arith.constant 0 : index
    %c0_3 = arith.constant 0 : index
    %4 = vector.load %arg3[%c0_2, %c0_3] : memref<32x128xbf16, #tpu.memory_space<vmem>>, vector<32x128xbf16>
    %c0_4 = arith.constant 0 : index
    %c0_5 = arith.constant 0 : index
    %5 = vector.load %arg4[%c0_4, %c0_5] : memref<128x128xbf16, #tpu.memory_space<vmem>>, vector<128x128xbf16>
    %cst = arith.constant dense<0.000000e+00> : vector<32x128xf32>
    %6 = tpu.matmul %4, %5, %cst {dimension_numbers = #tpu.dot_dimension_numbers<[1], [0], [0], [1], [0, 0, 1, 1], [], []>} : vector<32x128xbf16>, vector<128x128xbf16>, vector<32x128xf32> -> vector<32x128xf32>
    %7 = arith.addf %3, %6 : vector<32x128xf32>
    %c0_6 = arith.constant 0 : index
    %c0_7 = arith.constant 0 : index
    %8 = vector.load %arg10[%c0_6, %c0_7] : memref<32x128xf32, #tpu.memory_space<vmem>>, vector<32x128xf32>
    tpu.vector_store %arg10[%c0_6, %c0_7], %7 {strides = array<i32>} : memref<32x128xf32, #tpu.memory_space<vmem>>, vector<32x128xf32>,
    %c0_i32_8 = arith.constant 0 : i32
    %9 = arith.cmpi eq, %arg2, %c0_i32_8 : i32
    %10 = arith.extui %9 : i1 to i32
    %c0_i32_9 = arith.constant 0 : i32
    %11 = arith.cmpi ne, %10, %c0_i32_9 : i32
    scf.if %11 {
      %c0_10 = arith.constant 0 : index
      %c0_11 = arith.constant 0 : index
      %12 = vector.load %arg10[%c0_10, %c0_11] : memref<32x128xf32, #tpu.memory_space<vmem>>, vector<32x128xf32>
      %c0_12 = arith.constant 0 : index
      %c0_13 = arith.constant 0 : index
      %13 = vector.load %arg5[%c0_12, %c0_13] : memref<1x128xf32, #tpu.memory_space<vmem>>, vector<1x128xf32>
      %14 = vector.broadcast %13 : vector<1x128xf32> to vector<32x128xf32>
      %15 = arith.addf %12, %14 : vector<32x128xf32>
      %c0_14 = arith.constant 0 : index
      %c0_15 = arith.constant 0 : index
      %16 = vector.load %arg6[%c0_14, %c0_15] : memref<32x128xbf16, #tpu.memory_space<vmem>>, vector<32x128xbf16>
      %17 = arith.extf %16 : vector<32x128xbf16> to vector<32x128xf32>
      %18 = arith.addf %15, %17 : vector<32x128xf32>
      %cst_16 = arith.constant dense<0.000000e+00> : vector<32xf32>
      %19 = vector.multi_reduction <add>, %18, %cst_16 [1] : vector<32x128xf32> to vector<32xf32>
      %20 = vector.shape_cast %19 : vector<32xf32> to vector<32x1xf32>
      %cst_17 = arith.constant 1.280000e+02 : f32
      %21 = vector.broadcast %cst_17 : f32 to vector<32x1xf32>
      %22 = arith.divf %20, %21 : vector<32x1xf32>
      %23 = vector.broadcast %22 : vector<32x1xf32> to vector<32x128xf32>
      %24 = arith.subf %18, %23 : vector<32x128xf32>
      %25 = arith.mulf %24, %24 : vector<32x128xf32>
      %cst_18 = arith.constant dense<0.000000e+00> : vector<32xf32>
      %26 = vector.multi_reduction <add>, %25, %cst_18 [1] : vector<32x128xf32> to vector<32xf32>
      %27 = vector.shape_cast %26 : vector<32xf32> to vector<32x1xf32>
      %cst_19 = arith.constant 1.280000e+02 : f32
      %28 = vector.broadcast %cst_19 : f32 to vector<32x1xf32>
      %29 = arith.divf %27, %28 : vector<32x1xf32>
      %30 = vector.broadcast %22 : vector<32x1xf32> to vector<32x128xf32>
      %31 = arith.subf %18, %30 : vector<32x128xf32>
      %cst_20 = arith.constant 9.99999996E-13 : f32
      %32 = vector.broadcast %cst_20 : f32 to vector<32x1xf32>
      %33 = arith.addf %29, %32 : vector<32x1xf32>
      %34 = math.rsqrt %33 : vector<32x1xf32>
      %35 = vector.broadcast %34 : vector<32x1xf32> to vector<32x128xf32>
      %36 = arith.mulf %31, %35 : vector<32x128xf32>
      %c0_21 = arith.constant 0 : index
      %c0_22 = arith.constant 0 : index
      %37 = vector.load %arg7[%c0_21, %c0_22] : memref<1x128xf32, #tpu.memory_space<vmem>>, vector<1x128xf32>
      %38 = vector.broadcast %37 : vector<1x128xf32> to vector<32x128xf32>
      %39 = arith.mulf %36, %38 : vector<32x128xf32>
      %c0_23 = arith.constant 0 : index
      %c0_24 = arith.constant 0 : index
      %40 = vector.load %arg8[%c0_23, %c0_24] : memref<1x128xf32, #tpu.memory_space<vmem>>, vector<1x128xf32>
      %41 = vector.broadcast %40 : vector<1x128xf32> to vector<32x128xf32>
      %42 = arith.addf %39, %41 : vector<32x128xf32>
      %43 = arith.truncf %42 : vector<32x128xf32> to vector<32x128xbf16>
      %c0_25 = arith.constant 0 : index
      %c0_26 = arith.constant 0 : index
      %44 = vector.load %arg9[%c0_25, %c0_26] : memref<32x128xbf16, #tpu.memory_space<vmem>>, vector<32x128xbf16>
      tpu.vector_store %arg9[%c0_25, %c0_26], %43 {strides = array<i32>} : memref<32x128xbf16, #tpu.memory_space<vmem>>, vector<32x128xbf16>,
    } else {
    }
    return
  }
  func.func @transform_0(%arg0: i32, %arg1: i32, %arg2: i32) -> (i32, i32) {
    %c0_i32 = arith.constant 0 : i32
    return %arg0, %arg2 : i32, i32
  }
  func.func @transform_1(%arg0: i32, %arg1: i32, %arg2: i32) -> (i32, i32) {
    %c0_i32 = arith.constant 0 : i32
    return %arg2, %arg1 : i32, i32
  }
  func.func @transform_2(%arg0: i32, %arg1: i32, %arg2: i32) -> (i32, i32) {
    %c0_i32 = arith.constant 0 : i32
    %c0_i32_0 = arith.constant 0 : i32
    return %c0_i32, %arg1 : i32, i32
  }
  func.func @transform_3(%arg0: i32, %arg1: i32, %arg2: i32) -> (i32, i32) {
    %c0_i32 = arith.constant 0 : i32
    return %arg0, %arg1 : i32, i32
  }
  func.func @transform_4(%arg0: i32, %arg1: i32, %arg2: i32) -> (i32, i32) {
    %c0_i32 = arith.constant 0 : i32
    %c0_i32_0 = arith.constant 0 : i32
    return %c0_i32, %arg1 : i32, i32
  }
  func.func @transform_5(%arg0: i32, %arg1: i32, %arg2: i32) -> (i32, i32) {
    %c0_i32 = arith.constant 0 : i32
    %c0_i32_0 = arith.constant 0 : i32
    return %c0_i32, %arg1 : i32, i32
  }
  func.func @transform_6(%arg0: i32, %arg1: i32, %arg2: i32) -> (i32, i32) {
    %c0_i32 = arith.constant 0 : i32
    return %arg0, %arg1 : i32, i32
  }
}

module attributes {stable_mosaic.version = 11 : i64} {
  func.func @_attn_kernel(%arg0: i32, %arg1: i32, %arg2: i32, %arg3: memref<16x128xbf16, #tpu.memory_space<vmem>>, %arg4: memref<16x128xbf16, #tpu.memory_space<vmem>>, %arg5: memref<16x128xbf16, #tpu.memory_space<vmem>>, %arg6: memref<16x128xbf16, #tpu.memory_space<vmem>>, %arg7: memref<2x16x1xf32, #tpu.memory_space<vmem>>, %arg8: memref<2x16x1xf32, #tpu.memory_space<vmem>>, %arg9: memref<16x128xf32, #tpu.memory_space<vmem>>) attributes {dimension_semantics = [#tpu.dimension_semantics<parallel>, #tpu.dimension_semantics<parallel>, #tpu.dimension_semantics<arbitrary>], iteration_bounds = array<i64: 2, 1, 1>, scalar_prefetch = 0 : i64, scratch_operands = 3 : i64, tpu.core_type = #tpu.core_type<tc>, window_params = [{transform_indices = @transform_0, window_bounds = array<i64: 16, 128>}, {transform_indices = @transform_1, window_bounds = array<i64: 16, 128>}, {transform_indices = @transform_2, window_bounds = array<i64: 16, 128>}, {transform_indices = @transform_3, window_bounds = array<i64: 16, 128>}]} {
    %c0_i32 = arith.constant 0 : i32
    %0 = arith.cmpi eq, %arg2, %c0_i32 : i32
    %1 = arith.extui %0 : i1 to i32
    %c0_i32_0 = arith.constant 0 : i32
    %2 = arith.cmpi ne, %1, %c0_i32_0 : i32
    scf.if %2 {
      %cst_47 = arith.constant 0xFF800000 : f32
      %74 = vector.broadcast %cst_47 : f32 to vector<2x16x1xf32>
      %c0_48 = arith.constant 0 : index
      %c0_49 = arith.constant 0 : index
      %c0_50 = arith.constant 0 : index
      %75 = vector.load %arg7[%c0_48, %c0_49, %c0_50] : memref<2x16x1xf32, #tpu.memory_space<vmem>>, vector<2x16x1xf32>
      tpu.vector_store %arg7[%c0_48, %c0_49, %c0_50], %74 {strides = array<i32>} : memref<2x16x1xf32, #tpu.memory_space<vmem>>, vector<2x16x1xf32>,
      %cst_51 = arith.constant 0.000000e+00 : f32
      %76 = vector.broadcast %cst_51 : f32 to vector<2x16x1xf32>
      %c0_52 = arith.constant 0 : index
      %c0_53 = arith.constant 0 : index
      %c0_54 = arith.constant 0 : index
      %77 = vector.load %arg8[%c0_52, %c0_53, %c0_54] : memref<2x16x1xf32, #tpu.memory_space<vmem>>, vector<2x16x1xf32>
      tpu.vector_store %arg8[%c0_52, %c0_53, %c0_54], %76 {strides = array<i32>} : memref<2x16x1xf32, #tpu.memory_space<vmem>>, vector<2x16x1xf32>,
      %cst_55 = arith.constant 0.000000e+00 : f32
      %78 = vector.broadcast %cst_55 : f32 to vector<16x128xf32>
      %c0_56 = arith.constant 0 : index
      %c0_57 = arith.constant 0 : index
      %79 = vector.load %arg9[%c0_56, %c0_57] : memref<16x128xf32, #tpu.memory_space<vmem>>, vector<16x128xf32>
      tpu.vector_store %arg9[%c0_56, %c0_57], %78 {strides = array<i32>} : memref<16x128xf32, #tpu.memory_space<vmem>>, vector<16x128xf32>,
    } else {
    }
    %c0 = arith.constant 0 : index
    %c0_1 = arith.constant 0 : index
    %3 = vector.load %arg4[%c0, %c0_1] : memref<16x128xbf16, #tpu.memory_space<vmem>>, vector<16x128xbf16>
    %c0_2 = arith.constant 0 : index
    %c0_3 = arith.constant 0 : index
    %4 = vector.load %arg5[%c0_2, %c0_3] : memref<16x128xbf16, #tpu.memory_space<vmem>>, vector<16x128xbf16>
    %c0_4 = arith.constant 0 : index
    %c0_5 = arith.constant 0 : index
    %5 = vector.load %arg3[%c0_4, %c0_5] : memref<16x128xbf16, #tpu.memory_space<vmem>>, vector<16x64xbf16>
    %6 = vector.extract_strided_slice %3 {offsets = [0, 0], sizes = [16, 64], strides = [1, 1]} : vector<16x128xbf16> to vector<16x64xbf16>
    %7 = vector.extract_strided_slice %4 {offsets = [0, 0], sizes = [16, 64], strides = [1, 1]} : vector<16x128xbf16> to vector<16x64xbf16>
    %cst = arith.constant dense<0.000000e+00> : vector<16x16xf32>
    %8 = tpu.matmul %5, %6, %cst {dimension_numbers = #tpu.dot_dimension_numbers<[1], [1], [0], [0], [0, 0, 1, 0], [], []>} : vector<16x64xbf16>, vector<16x64xbf16>, vector<16x16xf32> -> vector<16x16xf32>
    %c0_6 = arith.constant 0 : index
    %c0_7 = arith.constant 0 : index
    %c0_8 = arith.constant 0 : index
    %9 = vector.load %arg7[%c0_6, %c0_7, %c0_8] : memref<2x16x1xf32, #tpu.memory_space<vmem>>, vector<1x16x1xf32>
    %10 = vector.shape_cast %9 : vector<1x16x1xf32> to vector<16x1xf32>
    %cst_9 = arith.constant dense<0xFF800000> : vector<16xf32>
    %11 = vector.multi_reduction <maximumf>, %8, %cst_9 [1] : vector<16x16xf32> to vector<16xf32>
    %12 = vector.shape_cast %11 : vector<16xf32> to vector<16x1xf32>
    %13 = arith.maximumf %10, %12 : vector<16x1xf32>
    %14 = arith.subf %10, %13 : vector<16x1xf32>
    %15 = math.exp %14 : vector<16x1xf32>
    %16 = vector.broadcast %13 : vector<16x1xf32> to vector<16x16xf32>
    %17 = arith.subf %8, %16 : vector<16x16xf32>
    %18 = math.exp %17 : vector<16x16xf32>
    %c0_10 = arith.constant 0 : index
    %c0_11 = arith.constant 0 : index
    %c0_12 = arith.constant 0 : index
    %19 = vector.load %arg8[%c0_10, %c0_11, %c0_12] : memref<2x16x1xf32, #tpu.memory_space<vmem>>, vector<1x16x1xf32>
    %20 = vector.shape_cast %19 : vector<1x16x1xf32> to vector<16x1xf32>
    %21 = arith.mulf %15, %20 : vector<16x1xf32>
    %cst_13 = arith.constant dense<0.000000e+00> : vector<16xf32>
    %22 = vector.multi_reduction <add>, %18, %cst_13 [1] : vector<16x16xf32> to vector<16xf32>
    %23 = vector.shape_cast %22 : vector<16xf32> to vector<16x1xf32>
    %24 = arith.addf %21, %23 : vector<16x1xf32>
    %c0_14 = arith.constant 0 : index
    %c0_15 = arith.constant 0 : index
    %c0_16 = arith.constant 0 : index
    %25 = vector.load %arg8[%c0_14, %c0_15, %c0_16] : memref<2x16x1xf32, #tpu.memory_space<vmem>>, vector<1x16x1xf32>
    %26 = vector.shape_cast %25 : vector<1x16x1xf32> to vector<16x1xf32>
    %27 = vector.shape_cast %24 : vector<16x1xf32> to vector<1x16x1xf32>
    tpu.vector_store %arg8[%c0_14, %c0_15, %c0_16], %27 {strides = array<i32>} : memref<2x16x1xf32, #tpu.memory_space<vmem>>, vector<1x16x1xf32>,
    %c0_17 = arith.constant 0 : index
    %c0_18 = arith.constant 0 : index
    %28 = vector.load %arg9[%c0_17, %c0_18] : memref<16x128xf32, #tpu.memory_space<vmem>>, vector<16x64xf32>
    %29 = vector.broadcast %15 : vector<16x1xf32> to vector<16x64xf32>
    %30 = arith.mulf %29, %28 : vector<16x64xf32>
    %31 = arith.truncf %18 : vector<16x16xf32> to vector<16x16xbf16>
    %cst_19 = arith.constant dense<0.000000e+00> : vector<16x64xf32>
    %32 = tpu.matmul %31, %7, %cst_19 {dimension_numbers = #tpu.dot_dimension_numbers<[1], [0], [0], [1], [0, 0, 1, 1], [], []>} : vector<16x16xbf16>, vector<16x64xbf16>, vector<16x64xf32> -> vector<16x64xf32>
    %33 = arith.addf %30, %32 : vector<16x64xf32>
    %c0_20 = arith.constant 0 : index
    %c0_21 = arith.constant 0 : index
    %34 = vector.load %arg9[%c0_20, %c0_21] : memref<16x128xf32, #tpu.memory_space<vmem>>, vector<16x64xf32>
    tpu.vector_store %arg9[%c0_20, %c0_21], %33 {strides = array<i32>} : memref<16x128xf32, #tpu.memory_space<vmem>>, vector<16x64xf32>,
    %c0_22 = arith.constant 0 : index
    %c0_23 = arith.constant 0 : index
    %c0_24 = arith.constant 0 : index
    %35 = vector.load %arg7[%c0_22, %c0_23, %c0_24] : memref<2x16x1xf32, #tpu.memory_space<vmem>>, vector<1x16x1xf32>
    %36 = vector.shape_cast %35 : vector<1x16x1xf32> to vector<16x1xf32>
    %37 = vector.shape_cast %13 : vector<16x1xf32> to vector<1x16x1xf32>
    tpu.vector_store %arg7[%c0_22, %c0_23, %c0_24], %37 {strides = array<i32>} : memref<2x16x1xf32, #tpu.memory_space<vmem>>, vector<1x16x1xf32>,
    %c0_25 = arith.constant 0 : index
    %c64 = arith.constant 64 : index
    %38 = vector.load %arg3[%c0_25, %c64] : memref<16x128xbf16, #tpu.memory_space<vmem>>, vector<16x64xbf16>
    %39 = vector.extract_strided_slice %3 {offsets = [0, 64], sizes = [16, 64], strides = [1, 1]} : vector<16x128xbf16> to vector<16x64xbf16>
    %40 = vector.extract_strided_slice %4 {offsets = [0, 64], sizes = [16, 64], strides = [1, 1]} : vector<16x128xbf16> to vector<16x64xbf16>
    %cst_26 = arith.constant dense<0.000000e+00> : vector<16x16xf32>
    %41 = tpu.matmul %38, %39, %cst_26 {dimension_numbers = #tpu.dot_dimension_numbers<[1], [1], [0], [0], [0, 0, 1, 0], [], []>} : vector<16x64xbf16>, vector<16x64xbf16>, vector<16x16xf32> -> vector<16x16xf32>
    %c1 = arith.constant 1 : index
    %c0_27 = arith.constant 0 : index
    %c0_28 = arith.constant 0 : index
    %42 = vector.load %arg7[%c1, %c0_27, %c0_28] : memref<2x16x1xf32, #tpu.memory_space<vmem>>, vector<1x16x1xf32>
    %43 = vector.shape_cast %42 : vector<1x16x1xf32> to vector<16x1xf32>
    %cst_29 = arith.constant dense<0xFF800000> : vector<16xf32>
    %44 = vector.multi_reduction <maximumf>, %41, %cst_29 [1] : vector<16x16xf32> to vector<16xf32>
    %45 = vector.shape_cast %44 : vector<16xf32> to vector<16x1xf32>
    %46 = arith.maximumf %43, %45 : vector<16x1xf32>
    %47 = arith.subf %43, %46 : vector<16x1xf32>
    %48 = math.exp %47 : vector<16x1xf32>
    %49 = vector.broadcast %46 : vector<16x1xf32> to vector<16x16xf32>
    %50 = arith.subf %41, %49 : vector<16x16xf32>
    %51 = math.exp %50 : vector<16x16xf32>
    %c1_30 = arith.constant 1 : index
    %c0_31 = arith.constant 0 : index
    %c0_32 = arith.constant 0 : index
    %52 = vector.load %arg8[%c1_30, %c0_31, %c0_32] : memref<2x16x1xf32, #tpu.memory_space<vmem>>, vector<1x16x1xf32>
    %53 = vector.shape_cast %52 : vector<1x16x1xf32> to vector<16x1xf32>
    %54 = arith.mulf %48, %53 : vector<16x1xf32>
    %cst_33 = arith.constant dense<0.000000e+00> : vector<16xf32>
    %55 = vector.multi_reduction <add>, %51, %cst_33 [1] : vector<16x16xf32> to vector<16xf32>
    %56 = vector.shape_cast %55 : vector<16xf32> to vector<16x1xf32>
    %57 = arith.addf %54, %56 : vector<16x1xf32>
    %c1_34 = arith.constant 1 : index
    %c0_35 = arith.constant 0 : index
    %c0_36 = arith.constant 0 : index
    %58 = vector.load %arg8[%c1_34, %c0_35, %c0_36] : memref<2x16x1xf32, #tpu.memory_space<vmem>>, vector<1x16x1xf32>
    %59 = vector.shape_cast %58 : vector<1x16x1xf32> to vector<16x1xf32>
    %60 = vector.shape_cast %57 : vector<16x1xf32> to vector<1x16x1xf32>
    tpu.vector_store %arg8[%c1_34, %c0_35, %c0_36], %60 {strides = array<i32>} : memref<2x16x1xf32, #tpu.memory_space<vmem>>, vector<1x16x1xf32>,
    %c0_37 = arith.constant 0 : index
    %c64_38 = arith.constant 64 : index
    %61 = vector.load %arg9[%c0_37, %c64_38] : memref<16x128xf32, #tpu.memory_space<vmem>>, vector<16x64xf32>
    %62 = vector.broadcast %48 : vector<16x1xf32> to vector<16x64xf32>
    %63 = arith.mulf %62, %61 : vector<16x64xf32>
    %64 = arith.truncf %51 : vector<16x16xf32> to vector<16x16xbf16>
    %cst_39 = arith.constant dense<0.000000e+00> : vector<16x64xf32>
    %65 = tpu.matmul %64, %40, %cst_39 {dimension_numbers = #tpu.dot_dimension_numbers<[1], [0], [0], [1], [0, 0, 1, 1], [], []>} : vector<16x16xbf16>, vector<16x64xbf16>, vector<16x64xf32> -> vector<16x64xf32>
    %66 = arith.addf %63, %65 : vector<16x64xf32>
    %c0_40 = arith.constant 0 : index
    %c64_41 = arith.constant 64 : index
    %67 = vector.load %arg9[%c0_40, %c64_41] : memref<16x128xf32, #tpu.memory_space<vmem>>, vector<16x64xf32>
    tpu.vector_store %arg9[%c0_40, %c64_41], %66 {strides = array<i32>} : memref<16x128xf32, #tpu.memory_space<vmem>>, vector<16x64xf32>,
    %c1_42 = arith.constant 1 : index
    %c0_43 = arith.constant 0 : index
    %c0_44 = arith.constant 0 : index
    %68 = vector.load %arg7[%c1_42, %c0_43, %c0_44] : memref<2x16x1xf32, #tpu.memory_space<vmem>>, vector<1x16x1xf32>
    %69 = vector.shape_cast %68 : vector<1x16x1xf32> to vector<16x1xf32>
    %70 = vector.shape_cast %46 : vector<16x1xf32> to vector<1x16x1xf32>
    tpu.vector_store %arg7[%c1_42, %c0_43, %c0_44], %70 {strides = array<i32>} : memref<2x16x1xf32, #tpu.memory_space<vmem>>, vector<1x16x1xf32>,
    %c0_i32_45 = arith.constant 0 : i32
    %71 = arith.cmpi eq, %arg2, %c0_i32_45 : i32
    %72 = arith.extui %71 : i1 to i32
    %c0_i32_46 = arith.constant 0 : i32
    %73 = arith.cmpi ne, %72, %c0_i32_46 : i32
    scf.if %73 {
      %c0_47 = arith.constant 0 : index
      %c0_48 = arith.constant 0 : index
      %c0_49 = arith.constant 0 : index
      %74 = vector.load %arg8[%c0_47, %c0_48, %c0_49] : memref<2x16x1xf32, #tpu.memory_space<vmem>>, vector<1x16x1xf32>
      %75 = vector.shape_cast %74 : vector<1x16x1xf32> to vector<16x1xf32>
      %76 = tpu.reciprocal %75 {approx = true} : vector<16x1xf32> -> vector<16x1xf32>
      %c0_50 = arith.constant 0 : index
      %c0_51 = arith.constant 0 : index
      %77 = vector.load %arg9[%c0_50, %c0_51] : memref<16x128xf32, #tpu.memory_space<vmem>>, vector<16x64xf32>
      %78 = vector.broadcast %76 : vector<16x1xf32> to vector<16x64xf32>
      %79 = arith.mulf %77, %78 : vector<16x64xf32>
      %80 = arith.truncf %79 : vector<16x64xf32> to vector<16x64xbf16>
      %c0_52 = arith.constant 0 : index
      %c0_53 = arith.constant 0 : index
      %81 = vector.load %arg6[%c0_52, %c0_53] : memref<16x128xbf16, #tpu.memory_space<vmem>>, vector<16x64xbf16>
      tpu.vector_store %arg6[%c0_52, %c0_53], %80 {strides = array<i32>} : memref<16x128xbf16, #tpu.memory_space<vmem>>, vector<16x64xbf16>,
      %c1_54 = arith.constant 1 : index
      %c0_55 = arith.constant 0 : index
      %c0_56 = arith.constant 0 : index
      %82 = vector.load %arg8[%c1_54, %c0_55, %c0_56] : memref<2x16x1xf32, #tpu.memory_space<vmem>>, vector<1x16x1xf32>
      %83 = vector.shape_cast %82 : vector<1x16x1xf32> to vector<16x1xf32>
      %84 = tpu.reciprocal %83 {approx = true} : vector<16x1xf32> -> vector<16x1xf32>
      %c0_57 = arith.constant 0 : index
      %c64_58 = arith.constant 64 : index
      %85 = vector.load %arg9[%c0_57, %c64_58] : memref<16x128xf32, #tpu.memory_space<vmem>>, vector<16x64xf32>
      %86 = vector.broadcast %84 : vector<16x1xf32> to vector<16x64xf32>
      %87 = arith.mulf %85, %86 : vector<16x64xf32>
      %88 = arith.truncf %87 : vector<16x64xf32> to vector<16x64xbf16>
      %c0_59 = arith.constant 0 : index
      %c64_60 = arith.constant 64 : index
      %89 = vector.load %arg6[%c0_59, %c64_60] : memref<16x128xbf16, #tpu.memory_space<vmem>>, vector<16x64xbf16>
      tpu.vector_store %arg6[%c0_59, %c64_60], %88 {strides = array<i32>} : memref<16x128xbf16, #tpu.memory_space<vmem>>, vector<16x64xbf16>,
    } else {
    }
    return
  }
  func.func @transform_0(%arg0: i32, %arg1: i32, %arg2: i32) -> (i32, i32) {
    %c0_i32 = arith.constant 0 : i32
    return %arg0, %arg1 : i32, i32
  }
  func.func @transform_1(%arg0: i32, %arg1: i32, %arg2: i32) -> (i32, i32) {
    %c1_i32 = arith.constant 1 : i32
    %0 = arith.muli %arg0, %c1_i32 : i32
    %1 = arith.addi %0, %arg2 : i32
    %c1_i32_0 = arith.constant 1 : i32
    %2 = arith.addi %c1_i32_0, %arg1 : i32
    %c0_i32 = arith.constant 0 : i32
    return %1, %2 : i32, i32
  }
  func.func @transform_2(%arg0: i32, %arg1: i32, %arg2: i32) -> (i32, i32) {
    %c1_i32 = arith.constant 1 : i32
    %0 = arith.muli %arg0, %c1_i32 : i32
    %1 = arith.addi %0, %arg2 : i32
    %c2_i32 = arith.constant 2 : i32
    %2 = arith.addi %c2_i32, %arg1 : i32
    %c0_i32 = arith.constant 0 : i32
    return %1, %2 : i32, i32
  }
  func.func @transform_3(%arg0: i32, %arg1: i32, %arg2: i32) -> (i32, i32) {
    %c0_i32 = arith.constant 0 : i32
    return %arg0, %arg1 : i32, i32
  }
}

module attributes {stable_mosaic.version = 11 : i64} {
  func.func @_ffn_kernel(%arg0: i32, %arg1: i32, %arg2: memref<32x128xbf16, #tpu.memory_space<vmem>>, %arg3: memref<128x512xbf16, #tpu.memory_space<vmem>>, %arg4: memref<1x512xf32, #tpu.memory_space<vmem>>, %arg5: memref<512x128xbf16, #tpu.memory_space<vmem>>, %arg6: memref<1x128xf32, #tpu.memory_space<vmem>>, %arg7: memref<1x128xf32, #tpu.memory_space<vmem>>, %arg8: memref<1x128xf32, #tpu.memory_space<vmem>>, %arg9: memref<32x128xbf16, #tpu.memory_space<vmem>>, %arg10: memref<32x128xf32, #tpu.memory_space<vmem>>) attributes {dimension_semantics = [#tpu.dimension_semantics<parallel>, #tpu.dimension_semantics<arbitrary>], iteration_bounds = array<i64: 1, 1>, scalar_prefetch = 0 : i64, scratch_operands = 1 : i64, tpu.core_type = #tpu.core_type<tc>, window_params = [{transform_indices = @transform_0, window_bounds = array<i64: 32, 128>}, {transform_indices = @transform_1, window_bounds = array<i64: 128, 512>}, {transform_indices = @transform_2, window_bounds = array<i64: 1, 512>}, {transform_indices = @transform_3, window_bounds = array<i64: 512, 128>}, {pipeline_mode = #tpu.pipeline_mode<synchronous>, transform_indices = @transform_4, window_bounds = array<i64: 1, 128>}, {pipeline_mode = #tpu.pipeline_mode<synchronous>, transform_indices = @transform_5, window_bounds = array<i64: 1, 128>}, {pipeline_mode = #tpu.pipeline_mode<synchronous>, transform_indices = @transform_6, window_bounds = array<i64: 1, 128>}, {transform_indices = @transform_7, window_bounds = array<i64: 32, 128>}]} {
    %c0_i32 = arith.constant 0 : i32
    %0 = arith.cmpi eq, %arg1, %c0_i32 : i32
    %1 = arith.extui %0 : i1 to i32
    %c0_i32_0 = arith.constant 0 : i32
    %2 = arith.cmpi ne, %1, %c0_i32_0 : i32
    scf.if %2 {
      %cst_18 = arith.constant 0.000000e+00 : f32
      %26 = vector.broadcast %cst_18 : f32 to vector<32x128xf32>
      %c0_19 = arith.constant 0 : index
      %c0_20 = arith.constant 0 : index
      %27 = vector.load %arg10[%c0_19, %c0_20] : memref<32x128xf32, #tpu.memory_space<vmem>>, vector<32x128xf32>
      tpu.vector_store %arg10[%c0_19, %c0_20], %26 {strides = array<i32>} : memref<32x128xf32, #tpu.memory_space<vmem>>, vector<32x128xf32>,
    } else {
    }
    %c0 = arith.constant 0 : index
    %c0_1 = arith.constant 0 : index
    %3 = vector.load %arg2[%c0, %c0_1] : memref<32x128xbf16, #tpu.memory_space<vmem>>, vector<32x128xbf16>
    %c0_2 = arith.constant 0 : index
    %c0_3 = arith.constant 0 : index
    %4 = vector.load %arg3[%c0_2, %c0_3] : memref<128x512xbf16, #tpu.memory_space<vmem>>, vector<128x512xbf16>
    %cst = arith.constant dense<0.000000e+00> : vector<32x512xf32>
    %5 = tpu.matmul %3, %4, %cst {dimension_numbers = #tpu.dot_dimension_numbers<[1], [0], [0], [1], [0, 0, 1, 1], [], []>} : vector<32x128xbf16>, vector<128x512xbf16>, vector<32x512xf32> -> vector<32x512xf32>
    %c0_4 = arith.constant 0 : index
    %c0_5 = arith.constant 0 : index
    %6 = vector.load %arg4[%c0_4, %c0_5] : memref<1x512xf32, #tpu.memory_space<vmem>>, vector<1x512xf32>
    %7 = vector.broadcast %6 : vector<1x512xf32> to vector<32x512xf32>
    %8 = arith.addf %5, %7 : vector<32x512xf32>
    %cst_6 = arith.constant 5.000000e-01 : f32
    %9 = vector.broadcast %cst_6 : f32 to vector<32x512xf32>
    %10 = arith.mulf %8, %9 : vector<32x512xf32>
    %cst_7 = arith.constant 0.707106769 : f32
    %11 = vector.broadcast %cst_7 : f32 to vector<32x512xf32>
    %12 = arith.mulf %8, %11 : vector<32x512xf32>
    %13 = math.erf %12 : vector<32x512xf32>
    %cst_8 = arith.constant 1.000000e+00 : f32
    %14 = vector.broadcast %cst_8 : f32 to vector<32x512xf32>
    %15 = arith.addf %14, %13 : vector<32x512xf32>
    %16 = arith.mulf %10, %15 : vector<32x512xf32>
    %c0_9 = arith.constant 0 : index
    %c0_10 = arith.constant 0 : index
    %17 = vector.load %arg10[%c0_9, %c0_10] : memref<32x128xf32, #tpu.memory_space<vmem>>, vector<32x128xf32>
    %18 = arith.truncf %16 : vector<32x512xf32> to vector<32x512xbf16>
    %c0_11 = arith.constant 0 : index
    %c0_12 = arith.constant 0 : index
    %19 = vector.load %arg5[%c0_11, %c0_12] : memref<512x128xbf16, #tpu.memory_space<vmem>>, vector<512x128xbf16>
    %cst_13 = arith.constant dense<0.000000e+00> : vector<32x128xf32>
    %20 = tpu.matmul %18, %19, %cst_13 {dimension_numbers = #tpu.dot_dimension_numbers<[1], [0], [0], [1], [0, 0, 1, 1], [], []>} : vector<32x512xbf16>, vector<512x128xbf16>, vector<32x128xf32> -> vector<32x128xf32>
    %21 = arith.addf %17, %20 : vector<32x128xf32>
    %c0_14 = arith.constant 0 : index
    %c0_15 = arith.constant 0 : index
    %22 = vector.load %arg10[%c0_14, %c0_15] : memref<32x128xf32, #tpu.memory_space<vmem>>, vector<32x128xf32>
    tpu.vector_store %arg10[%c0_14, %c0_15], %21 {strides = array<i32>} : memref<32x128xf32, #tpu.memory_space<vmem>>, vector<32x128xf32>,
    %c0_i32_16 = arith.constant 0 : i32
    %23 = arith.cmpi eq, %arg1, %c0_i32_16 : i32
    %24 = arith.extui %23 : i1 to i32
    %c0_i32_17 = arith.constant 0 : i32
    %25 = arith.cmpi ne, %24, %c0_i32_17 : i32
    scf.if %25 {
      %c0_18 = arith.constant 0 : index
      %c0_19 = arith.constant 0 : index
      %26 = vector.load %arg10[%c0_18, %c0_19] : memref<32x128xf32, #tpu.memory_space<vmem>>, vector<32x128xf32>
      %c0_20 = arith.constant 0 : index
      %c0_21 = arith.constant 0 : index
      %27 = vector.load %arg6[%c0_20, %c0_21] : memref<1x128xf32, #tpu.memory_space<vmem>>, vector<1x128xf32>
      %28 = vector.broadcast %27 : vector<1x128xf32> to vector<32x128xf32>
      %29 = arith.addf %26, %28 : vector<32x128xf32>
      %c0_22 = arith.constant 0 : index
      %c0_23 = arith.constant 0 : index
      %30 = vector.load %arg2[%c0_22, %c0_23] : memref<32x128xbf16, #tpu.memory_space<vmem>>, vector<32x128xbf16>
      %31 = arith.extf %30 : vector<32x128xbf16> to vector<32x128xf32>
      %32 = arith.addf %29, %31 : vector<32x128xf32>
      %cst_24 = arith.constant dense<0.000000e+00> : vector<32xf32>
      %33 = vector.multi_reduction <add>, %32, %cst_24 [1] : vector<32x128xf32> to vector<32xf32>
      %34 = vector.shape_cast %33 : vector<32xf32> to vector<32x1xf32>
      %cst_25 = arith.constant 1.280000e+02 : f32
      %35 = vector.broadcast %cst_25 : f32 to vector<32x1xf32>
      %36 = arith.divf %34, %35 : vector<32x1xf32>
      %37 = vector.broadcast %36 : vector<32x1xf32> to vector<32x128xf32>
      %38 = arith.subf %32, %37 : vector<32x128xf32>
      %39 = arith.mulf %38, %38 : vector<32x128xf32>
      %cst_26 = arith.constant dense<0.000000e+00> : vector<32xf32>
      %40 = vector.multi_reduction <add>, %39, %cst_26 [1] : vector<32x128xf32> to vector<32xf32>
      %41 = vector.shape_cast %40 : vector<32xf32> to vector<32x1xf32>
      %cst_27 = arith.constant 1.280000e+02 : f32
      %42 = vector.broadcast %cst_27 : f32 to vector<32x1xf32>
      %43 = arith.divf %41, %42 : vector<32x1xf32>
      %44 = vector.broadcast %36 : vector<32x1xf32> to vector<32x128xf32>
      %45 = arith.subf %32, %44 : vector<32x128xf32>
      %cst_28 = arith.constant 9.99999996E-13 : f32
      %46 = vector.broadcast %cst_28 : f32 to vector<32x1xf32>
      %47 = arith.addf %43, %46 : vector<32x1xf32>
      %48 = math.rsqrt %47 : vector<32x1xf32>
      %49 = vector.broadcast %48 : vector<32x1xf32> to vector<32x128xf32>
      %50 = arith.mulf %45, %49 : vector<32x128xf32>
      %c0_29 = arith.constant 0 : index
      %c0_30 = arith.constant 0 : index
      %51 = vector.load %arg7[%c0_29, %c0_30] : memref<1x128xf32, #tpu.memory_space<vmem>>, vector<1x128xf32>
      %52 = vector.broadcast %51 : vector<1x128xf32> to vector<32x128xf32>
      %53 = arith.mulf %50, %52 : vector<32x128xf32>
      %c0_31 = arith.constant 0 : index
      %c0_32 = arith.constant 0 : index
      %54 = vector.load %arg8[%c0_31, %c0_32] : memref<1x128xf32, #tpu.memory_space<vmem>>, vector<1x128xf32>
      %55 = vector.broadcast %54 : vector<1x128xf32> to vector<32x128xf32>
      %56 = arith.addf %53, %55 : vector<32x128xf32>
      %57 = arith.truncf %56 : vector<32x128xf32> to vector<32x128xbf16>
      %c0_33 = arith.constant 0 : index
      %c0_34 = arith.constant 0 : index
      %58 = vector.load %arg9[%c0_33, %c0_34] : memref<32x128xbf16, #tpu.memory_space<vmem>>, vector<32x128xbf16>
      tpu.vector_store %arg9[%c0_33, %c0_34], %57 {strides = array<i32>} : memref<32x128xbf16, #tpu.memory_space<vmem>>, vector<32x128xbf16>,
    } else {
    }
    return
  }
  func.func @transform_0(%arg0: i32, %arg1: i32) -> (i32, i32) {
    %c0_i32 = arith.constant 0 : i32
    %c0_i32_0 = arith.constant 0 : i32
    return %arg0, %c0_i32 : i32, i32
  }
  func.func @transform_1(%arg0: i32, %arg1: i32) -> (i32, i32) {
    %c0_i32 = arith.constant 0 : i32
    %c0_i32_0 = arith.constant 0 : i32
    return %c0_i32, %arg1 : i32, i32
  }
  func.func @transform_2(%arg0: i32, %arg1: i32) -> (i32, i32) {
    %c0_i32 = arith.constant 0 : i32
    %c0_i32_0 = arith.constant 0 : i32
    return %c0_i32, %arg1 : i32, i32
  }
  func.func @transform_3(%arg0: i32, %arg1: i32) -> (i32, i32) {
    %c0_i32 = arith.constant 0 : i32
    %c0_i32_0 = arith.constant 0 : i32
    return %arg1, %c0_i32 : i32, i32
  }
  func.func @transform_4(%arg0: i32, %arg1: i32) -> (i32, i32) {
    %c0_i32 = arith.constant 0 : i32
    %c0_i32_0 = arith.constant 0 : i32
    %c0_i32_1 = arith.constant 0 : i32
    return %c0_i32, %c0_i32_0 : i32, i32
  }
  func.func @transform_5(%arg0: i32, %arg1: i32) -> (i32, i32) {
    %c0_i32 = arith.constant 0 : i32
    %c0_i32_0 = arith.constant 0 : i32
    %c0_i32_1 = arith.constant 0 : i32
    return %c0_i32, %c0_i32_0 : i32, i32
  }
  func.func @transform_6(%arg0: i32, %arg1: i32) -> (i32, i32) {
    %c0_i32 = arith.constant 0 : i32
    %c0_i32_0 = arith.constant 0 : i32
    %c0_i32_1 = arith.constant 0 : i32
    return %c0_i32, %c0_i32_0 : i32, i32
  }
  func.func @transform_7(%arg0: i32, %arg1: i32) -> (i32, i32) {
    %c0_i32 = arith.constant 0 : i32
    %c0_i32_0 = arith.constant 0 : i32
    return %arg0, %c0_i32 : i32, i32
  }
}

</mosaic_0001>

<llo_original>
// kernel: stage0_forward.9
$region0: #{stage0_forward.9}
  #allocation0 [shape = 'u32[]', space=smem, size = 0x4, offset = 0x4, fixed_abs, tag = 'smem constant byte address 0x4 - core index']
  #allocation1 [shape = 'u32[144,128]{1,0:T(1,128)}', space=vmem, size = 0x12000, scoped, tag = 'internal scratch']
  %s0 = inlined_call_operand.vmem [shape: bf16[32,128], index: 0, kind: input, shape index: {}]
  %s1 = inlined_call_operand.vmem [shape: bf16[32,128], index: 1, kind: input, shape index: {}]
  %s2 = inlined_call_operand.vmem [shape: bf16[16,128], index: 2, kind: input, shape index: {}]
  %s3 = inlined_call_operand.vmem [shape: f32[1,128], index: 3, kind: input, shape index: {}]
  %s4 = inlined_call_operand.vmem [shape: f32[1,128], index: 4, kind: input, shape index: {}]
  %s5 = inlined_call_operand.vmem [shape: bf16[32,128], index: 5, kind: output, shape index: {}]
  %s6 = sld [smem:[#allocation0]]
  $region53: #{stage0_forward.9} parent=0
    _
  %s8 = ssub.s32 1, %s6
  %s9 = scalar_select 0, %s8, %s6
  loop: start=0, step=1, limit=4
  $region2: #{stage0_forward.9} parent=0 // loop_pre_header
    _
  $region3: #{stage0_forward.9} parent=0 // loop_header
    %s11 = sphi 0, %s15
    %p12 = scmp.ge.s32.totalorder %s11, 4
    %s18 = sphi 0, %s30
    %s19 = sphi 0, %s26
    %s20 = sphi 0, %s18
    %s21 = sphi 0, %s19
    %s22 = sphi 0, %s20
    %s23 = sphi 0, %s21
    %s35 = sphi 0, %s37
    %s38 = sphi 0, %s35
    %s39 = sphi 0, %s38
    %s55 = sphi 0, %s39
    %s63 = sphi 0, %s65
    %s66 = sphi 0, %s63
    %s67 = sphi 0, %s66
    %s83 = sphi 0, %s67
    %s89 = sphi 0, %s91
    %s92 = sphi 0, %s89
    %s93 = sphi 0, %s92
    %s109 = sphi 0, %s93
    %s113 = sphi 0, %s113
    %s115 = sphi 0, %s113
    %s116 = sphi 0, %s115
    %s130 = sphi 0, %s116
    %s134 = sphi 0, %s134
    %s136 = sphi 0, %s134
    %s137 = sphi 0, %s136
    %s151 = sphi 0, %s137
    %s159 = sphi 0, %s161
    %s162 = sphi 0, %s159
    %s163 = sphi 0, %s162
    %s179 = sphi 0, %s163
  $region4: #{stage0_forward.9} parent=0 // loop_header_branch
    %14 = sbr.rel (%p12) target = $region8
  $region5: #{stage0_forward.9} parent=0 // loop_body
    %s16 = ssub.s32 %s11, 1
    %s17 = ssub.s32 %s11, 2
    %s24 = sadd.s32 1, %s19
    %p25 = scmp.ge.s32.totalorder %s24, 1
    %s26 = scalar_select %p25, 0, %s24
    %s27 = sadd.s32 1, %s18
    %s28 = scalar_select %p25, %s27, %s18
    %p29 = scmp.ge.s32.totalorder %s28, 2
    %s30 = scalar_select %p29, 0, %s28
    %s31 = sadd.s32 %s18, %s19
    %s32 = sadd.s32 %s30, %s26
    %s33 = ssub.s32 %s31, %s32
    %p34 = scmp.eq.s32.totalorder %s33, 0
    %s36 = sadd.s32 %s35, 1
    %s37 = scalar_select %p34, %s35, %s36
    %p40 = pneg %p34
    %p41 = scmp.eq.s32.totalorder %s11, 1
    %p42 = por %p40, %p41
    %p43 = scmp.ne.s32.totalorder %s35, %s38
    %p44 = scmp.eq.s32.totalorder %s11, 0
    %p45 = por %p43, %p44
    %p46 = scmp.ne.s32.totalorder %s35, %s38
    %p47 = scmp.eq.s32.totalorder %s16, 1
    %p48 = por %p46, %p47
    %p49 = scmp.ne.s32.totalorder %s38, %s39
    %p50 = scmp.eq.s32.totalorder %s16, 0
    %p51 = por %p49, %p50
    %p52 = scmp.ne.s32.totalorder %s38, %s39
    %p53 = scmp.eq.s32.totalorder %s17, 1
    %p54 = por %p52, %p53
    %p56 = scmp.ne.s32.totalorder %s39, %s55
    %p57 = scmp.eq.s32.totalorder %s17, 0
    %p58 = por %p56, %p57
    %s59 = sadd.s32 %s18, %s19
    %s60 = sadd.s32 %s30, %s26
    %s61 = ssub.s32 %s59, %s60
    %p62 = scmp.eq.s32.totalorder %s61, 0
    %s64 = sadd.s32 %s63, 1
    %s65 = scalar_select %p62, %s63, %s64
    %p68 = pneg %p62
    %p69 = scmp.eq.s32.totalorder %s11, 1
    %p70 = por %p68, %p69
    %p71 = scmp.ne.s32.totalorder %s63, %s66
    %p72 = scmp.eq.s32.totalorder %s11, 0
    %p73 = por %p71, %p72
    %p74 = scmp.ne.s32.totalorder %s63, %s66
    %p75 = scmp.eq.s32.totalorder %s16, 1
    %p76 = por %p74, %p75
    %p77 = scmp.ne.s32.totalorder %s66, %s67
    %p78 = scmp.eq.s32.totalorder %s16, 0
    %p79 = por %p77, %p78
    %p80 = scmp.ne.s32.totalorder %s66, %s67
    %p81 = scmp.eq.s32.totalorder %s17, 1
    %p82 = por %p80, %p81
    %p84 = scmp.ne.s32.totalorder %s67, %s83
    %p85 = scmp.eq.s32.totalorder %s17, 0
    %p86 = por %p84, %p85
    %s87 = ssub.s32 %s19, %s26
    %p88 = scmp.eq.s32.totalorder %s87, 0
    %s90 = sadd.s32 %s89, 1
    %s91 = scalar_select %p88, %s89, %s90
    %p94 = pneg %p88
    %p95 = scmp.eq.s32.totalorder %s11, 1
    %p96 = por %p94, %p95
    %p97 = scmp.ne.s32.totalorder %s89, %s92
    %p98 = scmp.eq.s32.totalorder %s11, 0
    %p99 = por %p97, %p98
    %p100 = scmp.ne.s32.totalorder %s89, %s92
    %p101 = scmp.eq.s32.totalorder %s16, 1
    %p102 = por %p100, %p101
    %p103 = scmp.ne.s32.totalorder %s92, %s93
    %p104 = scmp.eq.s32.totalorder %s16, 0
    %p105 = por %p103, %p104
    %p106 = scmp.ne.s32.totalorder %s92, %s93
    %p107 = scmp.eq.s32.totalorder %s17, 1
    %p108 = por %p106, %p107
    %p110 = scmp.ne.s32.totalorder %s93, %s109
    %p111 = scmp.eq.s32.totalorder %s17, 0
    %p112 = por %p110, %p111
    %s114 = sadd.s32 %s113, 1
    %p117 = scmp.eq.s32.totalorder %s11, 1
    %p118 = scmp.ne.s32.totalorder %s113, %s115
    %p119 = scmp.eq.s32.totalorder %s11, 0
    %p120 = por %p118, %p119
    %p121 = scmp.ne.s32.totalorder %s113, %s115
    %p122 = scmp.eq.s32.totalorder %s16, 1
    %p123 = por %p121, %p122
    %p124 = scmp.ne.s32.totalorder %s115, %s116
    %p125 = scmp.eq.s32.totalorder %s16, 0
    %p126 = por %p124, %p125
    %p127 = scmp.ne.s32.totalorder %s115, %s116
    %p128 = scmp.eq.s32.totalorder %s17, 1
    %p129 = por %p127, %p128
    %p131 = scmp.ne.s32.totalorder %s116, %s130
    %p132 = scmp.eq.s32.totalorder %s17, 0
    %p133 = por %p131, %p132
    %s135 = sadd.s32 %s134, 1
    %p138 = scmp.eq.s32.totalorder %s11, 1
    %p139 = scmp.ne.s32.totalorder %s134, %s136
    %p140 = scmp.eq.s32.totalorder %s11, 0
    %p141 = por %p139, %p140
    %p142 = scmp.ne.s32.totalorder %s134, %s136
    %p143 = scmp.eq.s32.totalorder %s16, 1
    %p144 = por %p142, %p143
    %p145 = scmp.ne.s32.totalorder %s136, %s137
    %p146 = scmp.eq.s32.totalorder %s16, 0
    %p147 = por %p145, %p146
    %p148 = scmp.ne.s32.totalorder %s136, %s137
    %p149 = scmp.eq.s32.totalorder %s17, 1
    %p150 = por %p148, %p149
    %p152 = scmp.ne.s32.totalorder %s137, %s151
    %p153 = scmp.eq.s32.totalorder %s17, 0
    %p154 = por %p152, %p153
    %s155 = sadd.s32 %s18, %s19
    %s156 = sadd.s32 %s30, %s26
    %s157 = ssub.s32 %s155, %s156
    %p158 = scmp.eq.s32.totalorder %s157, 0
    %s160 = sadd.s32 %s159, 1
    %s161 = scalar_select %p158, %s159, %s160
    %p164 = pneg %p158
    %p165 = scmp.eq.s32.totalorder %s11, 1
    %p166 = por %p164, %p165
    %p167 = scmp.ne.s32.totalorder %s159, %s162
    %p168 = scmp.eq.s32.totalorder %s11, 0
    %p169 = por %p167, %p168
    %p170 = scmp.ne.s32.totalorder %s159, %s162
    %p171 = scmp.eq.s32.totalorder %s16, 1
    %p172 = por %p170, %p171
    %p173 = scmp.ne.s32.totalorder %s162, %s163
    %p174 = scmp.eq.s32.totalorder %s16, 0
    %p175 = por %p173, %p174
    %p176 = scmp.ne.s32.totalorder %s162, %s163
    %p177 = scmp.eq.s32.totalorder %s17, 1
    %p178 = por %p176, %p177
    %p180 = scmp.ne.s32.totalorder %s163, %s179
    %p181 = scmp.eq.s32.totalorder %s17, 0
    %p182 = por %p180, %p181
    %p183 = scmp.le.s32.totalorder 1, %s11
    %p184 = scmp.lt.s32.totalorder %s11, 3
    %p185 = pnand %p183, %p184
    %p186 = pneg %p185
    // Predicated region
    $region9: #{stage0_forward.9} parent=5 // pred_check
      _
    $region10: #{stage0_forward.9} parent=5 // pred_check_branch
      %188 = sbr.rel (%p185) target = $region12
    $region11: #{stage0_forward.9} parent=5 // pred_region
      %s189 = ssub.s32 %s11, 1
      // Predicated region
      $region13: #{stage0_forward.9} parent=11 // pred_check
        %p190 = pneg %p105
      $region14: #{stage0_forward.9} parent=11 // pred_check_branch
        %192 = sbr.rel (%p190) target = $region16
      $region15: #{stage0_forward.9} parent=11 // pred_region
        %s193 = smul.u32 2, %s21
        %p194 = scmp.lt.s32.totalorder %s193, 1
        %s195 = scalar_select %p194, %s193, 1
        %s196 = smul.addr %s195, 4
        %s197 = scalar_lea.vmem %s2, %s196
        %s198 = smul.u32 2, %s21
      $region16: #{stage0_forward.9} parent=11 // pred_fallthru
        _
      // Predicated region
      $region17: #{stage0_forward.9} parent=11 // pred_check
        %p199 = pneg %p126
      $region18: #{stage0_forward.9} parent=11 // pred_check_branch
        %201 = sbr.rel (%p199) target = $region20
      $region19: #{stage0_forward.9} parent=11 // pred_region
        _
      $region20: #{stage0_forward.9} parent=11 // pred_fallthru
        _
      // Predicated region
      $region21: #{stage0_forward.9} parent=11 // pred_check
        %p202 = pneg %p147
      $region22: #{stage0_forward.9} parent=11 // pred_check_branch
        %204 = sbr.rel (%p202) target = $region24
      $region23: #{stage0_forward.9} parent=11 // pred_region
        _
      $region24: #{stage0_forward.9} parent=11 // pred_fallthru
        _
    $region12: #{stage0_forward.9} parent=5 // pred_fallthru
      _
    %p205 = scmp.lt.s32.totalorder %s11, 2
    // Predicated region
    $region25: #{stage0_forward.9} parent=5 // pred_check
      %p206 = pneg %p205
    $region26: #{stage0_forward.9} parent=5 // pred_check_branch
      %208 = sbr.rel (%p206) target = $region28
    $region27: #{stage0_forward.9} parent=5 // pred_region
      // Predicated region
      $region29: #{stage0_forward.9} parent=27 // pred_check
        %p209 = pneg %p45
      $region30: #{stage0_forward.9} parent=27 // pred_check_branch
        %211 = sbr.rel (%p209) target = $region32
      $region31: #{stage0_forward.9} parent=27 // pred_region
        %s212 = sadd.s32 %s18, %s19
        %s213 = smul.u32 2, %s212
        %p214 = scmp.lt.s32.totalorder %s213, 3
        %s215 = scalar_select %p214, %s213, 3
        %s216 = smul.addr %s215, 4
        %s217 = scalar_lea.vmem %s0, %s216
        %s218 = sadd.s32 %s18, %s19
        %s219 = smul.u32 2, %s218
      $region32: #{stage0_forward.9} parent=27 // pred_fallthru
        _
      // Predicated region
      $region33: #{stage0_forward.9} parent=27 // pred_check
        %p220 = pneg %p73
      $region34: #{stage0_forward.9} parent=27 // pred_check_branch
        %222 = sbr.rel (%p220) target = $region36
      $region35: #{stage0_forward.9} parent=27 // pred_region
        %s223 = sadd.s32 %s18, %s19
        %s224 = smul.u32 2, %s223
        %p225 = scmp.lt.s32.totalorder %s224, 3
        %s226 = scalar_select %p225, %s224, 3
        %s227 = smul.addr %s226, 4
        %s228 = scalar_lea.vmem %s1, %s227
        %s229 = sadd.s32 %s18, %s19
        %s230 = smul.u32 2, %s229
      $region36: #{stage0_forward.9} parent=27 // pred_fallthru
        _
    $region28: #{stage0_forward.9} parent=5 // pred_fallthru
      _
    %p231 = scmp.le.s32.totalorder 1, %s11
    %p232 = scmp.lt.s32.totalorder %s11, 3
    %p233 = pnand %p231, %p232
    %p234 = pneg %p233
    // Predicated region
    $region37: #{stage0_forward.9} parent=5 // pred_check
      _
    $region38: #{stage0_forward.9} parent=5 // pred_check_branch
      %236 = sbr.rel (%p233) target = $region40
    $region39: #{stage0_forward.9} parent=5 // pred_region
      %s237 = ssub.s32 %s11, 1
      %s238 = sadd.s32 %s20, %s21
      %s239 = smul.u32 2, %s238
      %p240 = scmp.lt.s32.totalorder %s239, 3
      %s241 = scalar_select %p240, %s239, 3
      %s242 = smul.addr %s241, 4
      %s243 = scalar_lea.vmem %s0, %s242
      %p244 = pneg %p51
      %p245 = pneg %p48
      %s246 = sadd.s32 %s20, %s21
      %s247 = smul.u32 2, %s246
      %p248 = scmp.lt.s32.totalorder %s247, 3
      %s249 = scalar_select %p248, %s247, 3
      %s250 = smul.addr %s249, 4
      %s251 = scalar_lea.vmem %s1, %s250
      %p252 = pneg %p79
      %p253 = pneg %p76
      %s254 = smul.u32 2, %s21
      %p255 = scmp.lt.s32.totalorder %s254, 1
      %s256 = scalar_select %p255, %s254, 1
      %s257 = smul.addr %s256, 4
      %s258 = scalar_lea.vmem %s2, %s257
      %p259 = pneg %p105
      %p260 = pneg %p102
      %p261 = pneg %p126
      %p262 = pneg %p123
      %p263 = pneg %p147
      %p264 = pneg %p144
      %p265 = pneg %p175
      %p266 = pneg %p172
      %s267 = sadd.s32 %s20, %s21
      %s268 = smul.u32 2, %s267
      %p269 = scmp.lt.s32.totalorder %s268, 3
      %s270 = scalar_select %p269, %s268, 3
      %s271 = smul.addr %s270, 4
      %s272 = scalar_lea.vmem %s5, %s271
      %s273 = sadd.s32 %s20, %s21
      %s274 = smul.u32 2, %s273
      %p275 = scmp.lt.s32.totalorder %s274, 3
      %s276 = scalar_select %p275, %s274, 3
      %s277 = smul.addr %s276, 4
      %s278 = scalar_lea.vmem %s0, %s277
      %s279 = sadd.s32 %s20, %s21
      %s280 = smul.u32 2, %s279
      %s281 = sadd.s32 %s20, %s21
      %s282 = smul.u32 2, %s281
      %p283 = scmp.lt.s32.totalorder %s282, 3
      %s284 = scalar_select %p283, %s282, 3
      %s285 = smul.addr %s284, 4
      %s286 = scalar_lea.vmem %s1, %s285
      %s287 = sadd.s32 %s20, %s21
      %s288 = smul.u32 2, %s287
      %s289 = smul.u32 2, %s21
      %p290 = scmp.lt.s32.totalorder %s289, 1
      %s291 = scalar_select %p290, %s289, 1
      %s292 = smul.addr %s291, 4
      %s293 = scalar_lea.vmem %s2, %s292
      %s294 = smul.u32 2, %s21
      %s295 = sadd.s32 %s20, %s21
      %s296 = smul.u32 2, %s295
      %p297 = scmp.lt.s32.totalorder %s296, 3
      %s298 = scalar_select %p297, %s296, 3
      %s299 = smul.addr %s298, 4
      %s300 = scalar_lea.vmem %s5, %s299
      %s301 = sadd.s32 %s20, %s21
      %s302 = smul.u32 2, %s301
      %v303 = vld [vmem:[%s278] sm:$0xf]
      %v304 = vld [vmem:[%s278 + $0x4] sm:$0xf]
      %v305 = vunpack.c.l.bf16 %v303
      %v306 = vunpack.c.l.bf16 %v304
      %v307 = vld [vmem:[%s286] sm:$0xf]
      %v308 = vld [vmem:[%s286 + $0x4] sm:$0xf]
      %v309 = vunpack.c.l.bf16 %v307
      %v310 = vunpack.c.l.bf16 %v308
      %v311 = vadd.f32 %v305, %v309
      %v312 = vadd.f32 %v306, %v310
      %v313 = vld [vmem:[%s293] sm:$0xf]
      %v314 = vld [vmem:[%s293 + $0x4] sm:$0xf]
      %v315 = vunpack.c.l.bf16 %v313
      %v316 = vunpack.c.l.bf16 %v314
      %v317 = vadd.f32 %v311, %v315
      %v318 = vadd.f32 %v312, %v316
      %319 = vadd.xlane.f32.xlu0 %v317
      %v320 = vpop.xlane.xlu0 %319
      %321 = vadd.xlane.f32.xlu0 %v318
      %v322 = vpop.xlane.xlu0 %321
      %v323 = vrcp.pop 128.0
      %v324 = vmul.f32 %v320, %v323
      %v325 = vmul.f32 %v322, %v323
      %v326 = vsub.f32 %v317, %v324
      %v327 = vsub.f32 %v318, %v325
      %v328 = vmul.f32 %v326, %v326
      %v329 = vmul.f32 %v327, %v327
      %330 = vadd.xlane.f32.xlu0 %v328
      %v331 = vpop.xlane.xlu0 %330
      %332 = vadd.xlane.f32.xlu0 %v329
      %v333 = vpop.xlane.xlu0 %332
      %v334 = vmul.f32 %v331, %v323
      %v335 = vmul.f32 %v333, %v323
      %v336 = vadd.f32 %v334, 1e-12
      %v337 = vadd.f32 %v335, 1e-12
      %v338 = vrsqrt.pop %v336
      %v339 = vrsqrt.pop %v337
      %v340 = vmul.f32 %v326, %v338
      %v341 = vmul.f32 %v327, %v339
      %v342 = vld [vmem:[%s3] sm:$0x1]
      %v344 = vlaneseq
      %v345 = vshrl.u32 %v344, 7
      %v346 = vsub.s32 0, %v345
      %v347 = vrot.slane %v342, %v346
      %v349 = vmul.f32 %v340, %v347
      %v350 = vmul.f32 %v341, %v347
      %v351 = vld [vmem:[%s4] sm:$0x1]
      %v353 = vlaneseq
      %v354 = vshrl.u32 %v353, 7
      %v355 = vsub.s32 0, %v354
      %v356 = vrot.slane %v351, %v355
      %v358 = vadd.f32 %v349, %v356
      %v359 = vadd.f32 %v350, %v356
      %v360 = vpack.c.bf16 %v359, %v358
      %v362 = vunpack.c.l.b16 %v360
      %v363 = vunpack.c.h.b16 %v360
      %v364 = vpack.c.b16 %v362, %v362
      %v365 = vpack.c.b16 %v363, %v363
      %368 = vst [vmem:[%s300] sm:$0xf] %v364
      %369 = vst [vmem:[%s300 + $0x4] sm:$0xf] %v365
      %s370 = sadd.s32 %s20, %s21
      %s371 = smul.u32 2, %s370
      %p372 = scmp.lt.s32.totalorder %s371, 3
      %s373 = scalar_select %p372, %s371, 3
      %s374 = smul.addr %s373, 4
      %s375 = scalar_lea.vmem %s5, %s374
      // Predicated region
      $region41: #{stage0_forward.9} parent=39 // pred_check
        %p376 = pneg %p172
      $region42: #{stage0_forward.9} parent=39 // pred_check_branch
        %378 = sbr.rel (%p376) target = $region44
      $region43: #{stage0_forward.9} parent=39 // pred_region
        %s379 = sadd.s32 %s20, %s21
        %s380 = smul.u32 2, %s379
      $region44: #{stage0_forward.9} parent=39 // pred_fallthru
        _
    $region40: #{stage0_forward.9} parent=5 // pred_fallthru
      _
    %p381 = scmp.le.s32.totalorder 2, %s11
    // Predicated region
    $region45: #{stage0_forward.9} parent=5 // pred_check
      %p382 = pneg %p381
    $region46: #{stage0_forward.9} parent=5 // pred_check_branch
      %384 = sbr.rel (%p382) target = $region48
    $region47: #{stage0_forward.9} parent=5 // pred_region
      %s385 = ssub.s32 %s11, 2
      // Predicated region
      $region49: #{stage0_forward.9} parent=47 // pred_check
        %p386 = pneg %p178
      $region50: #{stage0_forward.9} parent=47 // pred_check_branch
        %388 = sbr.rel (%p386) target = $region52
      $region51: #{stage0_forward.9} parent=47 // pred_region
        %s389 = sadd.s32 %s22, %s23
        %s390 = smul.u32 2, %s389
        %p391 = scmp.lt.s32.totalorder %s390, 3
        %s392 = scalar_select %p391, %s390, 3
        %s393 = smul.addr %s392, 4
        %s394 = scalar_lea.vmem %s5, %s393
      $region52: #{stage0_forward.9} parent=47 // pred_fallthru
        _
    $region48: #{stage0_forward.9} parent=5 // pred_fallthru
      _
  $region6: #{stage0_forward.9} parent=0 // loop_footer
    %s15 = sadd.s32 1, %s11
  $region7: #{stage0_forward.9} parent=0 // loop_footer_branch
    %10 = sbr.rel target = $region3
  $region8: #{stage0_forward.9} parent=0 // loop_exit
    _

// kernel: stage0_forward.12
$region0: #{stage0_forward.12}
  #allocation0 [shape = 'u32[]', space=smem, size = 0x4, offset = 0x4, fixed_abs, tag = 'smem constant byte address 0x4 - core index']
  #allocation1 [shape = 'u32[144,128]{1,0:T(1,128)}', space=vmem, size = 0x12000, scoped, tag = 'internal scratch']
  #allocation2 [shape = 'f32[32,128]{1,0:T(8,128)}', space=vmem, size = 0x4000, scoped, tag = 'scratch operand']
  %s0 = inlined_call_operand.vmem [shape: bf16[32,128], index: 0, kind: input, shape index: {}]
  %s1 = inlined_call_operand.vmem [shape: bf16[128,128], index: 1, kind: input, shape index: {}]
  %s2 = inlined_call_operand.vmem [shape: f32[1,128], index: 2, kind: input, shape index: {}]
  %s3 = inlined_call_operand.vmem [shape: bf16[32,128], index: 3, kind: input, shape index: {}]
  %s4 = inlined_call_operand.vmem [shape: f32[1,128], index: 4, kind: input, shape index: {}]
  %s5 = inlined_call_operand.vmem [shape: f32[1,128], index: 5, kind: input, shape index: {}]
  %s6 = inlined_call_operand.vmem [shape: bf16[32,128], index: 6, kind: output, shape index: {}]
  %s7 = sld [smem:[#allocation0]]
  $region42: #{stage0_forward.12} parent=0
    _
  %s9 = ssub.s32 1, %s7
  %s10 = scalar_select 0, %s9, %s7
  // Predicated region
  $region2: #{stage0_forward.12} parent=0 // pred_check
    _
  $region3: #{stage0_forward.12} parent=0 // pred_check_branch
    %12 = sbr.rel (0) target = $region5
  $region4: #{stage0_forward.12} parent=0 // pred_region
    _
  $region5: #{stage0_forward.12} parent=0 // pred_fallthru
    _
  // Predicated region
  $region6: #{stage0_forward.12} parent=0 // pred_check
    _
  $region7: #{stage0_forward.12} parent=0 // pred_check_branch
    %14 = sbr.rel (0) target = $region9
  $region8: #{stage0_forward.12} parent=0 // pred_region
    _
  $region9: #{stage0_forward.12} parent=0 // pred_fallthru
    _
  // Predicated region
  $region10: #{stage0_forward.12} parent=0 // pred_check
    _
  $region11: #{stage0_forward.12} parent=0 // pred_check_branch
    %16 = sbr.rel (0) target = $region13
  $region12: #{stage0_forward.12} parent=0 // pred_region
    _
  $region13: #{stage0_forward.12} parent=0 // pred_fallthru
    _
  // Predicated region
  $region14: #{stage0_forward.12} parent=0 // pred_check
    _
  $region15: #{stage0_forward.12} parent=0 // pred_check_branch
    %18 = sbr.rel (0) target = $region17
  $region16: #{stage0_forward.12} parent=0 // pred_region
    _
  $region17: #{stage0_forward.12} parent=0 // pred_fallthru
    _
  // Predicated region
  $region18: #{stage0_forward.12} parent=0 // pred_check
    _
  $region19: #{stage0_forward.12} parent=0 // pred_check_branch
    %20 = sbr.rel (0) target = $region21
  $region20: #{stage0_forward.12} parent=0 // pred_region
    _
  $region21: #{stage0_forward.12} parent=0 // pred_fallthru
    _
  // Predicated region
  $region22: #{stage0_forward.12} parent=0 // pred_check
    _
  $region23: #{stage0_forward.12} parent=0 // pred_check_branch
    %22 = sbr.rel (0) target = $region25
  $region24: #{stage0_forward.12} parent=0 // pred_region
    _
  $region25: #{stage0_forward.12} parent=0 // pred_fallthru
    _
  %p24 = scmp.eq.s32.totalorder 0, 0
  // Predicated region
  $region26: #{stage0_forward.12} parent=0 // pred_check
    %p25 = pneg %p24
  $region27: #{stage0_forward.12} parent=0 // pred_check_branch
    %27 = sbr.rel (%p25) target = $region29
  $region28: #{stage0_forward.12} parent=0 // pred_region
    %28 = vst [vmem:[#allocation2] sm:$0xff] 0.0
    %29 = vst [vmem:[#allocation2 + $0x8] sm:$0xff] 0.0
    %30 = vst [vmem:[#allocation2 + $0x10] sm:$0xff] 0.0
    %31 = vst [vmem:[#allocation2 + $0x18] sm:$0xff] 0.0
  $region29: #{stage0_forward.12} parent=0 // pred_fallthru
    _
  %v32 = vld [vmem:[#allocation2] sm:$0xff]
  %v33 = vld [vmem:[#allocation2 + $0x8] sm:$0xff]
  %v34 = vld [vmem:[#allocation2 + $0x10] sm:$0xff]
  %v35 = vld [vmem:[#allocation2 + $0x18] sm:$0xff]
  %v36 = vld [vmem:[%s0] sm:$0xf]
  %v37 = vld [vmem:[%s0 + $0x4] sm:$0xf]
  %v38 = vld [vmem:[%s0 + $0x8] sm:$0xf]
  %v39 = vld [vmem:[%s0 + $0xc] sm:$0xf]
  %v40 = vld [vmem:[%s1] sm:$0xf]
  %v41 = vld [vmem:[%s1 + $0x4] sm:$0xf]
  %v42 = vld [vmem:[%s1 + $0x8] sm:$0xf]
  %v43 = vld [vmem:[%s1 + $0xc] sm:$0xf]
  %v44 = vld [vmem:[%s1 + $0x10] sm:$0xf]
  %v45 = vld [vmem:[%s1 + $0x14] sm:$0xf]
  %v46 = vld [vmem:[%s1 + $0x18] sm:$0xf]
  %v47 = vld [vmem:[%s1 + $0x1c] sm:$0xf]
  %v48 = vld [vmem:[%s1 + $0x20] sm:$0xf]
  %v49 = vld [vmem:[%s1 + $0x24] sm:$0xf]
  %v50 = vld [vmem:[%s1 + $0x28] sm:$0xf]
  %v51 = vld [vmem:[%s1 + $0x2c] sm:$0xf]
  %v52 = vld [vmem:[%s1 + $0x30] sm:$0xf]
  %v53 = vld [vmem:[%s1 + $0x34] sm:$0xf]
  %v54 = vld [vmem:[%s1 + $0x38] sm:$0xf]
  %v55 = vld [vmem:[%s1 + $0x3c] sm:$0xf]
  %v60 = vunpack.c.l.b16 %v36
  %v61 = vunpack.c.l.b16 %v37
  %v62 = vunpack.c.l.b16 %v38
  %v63 = vunpack.c.l.b16 %v39
  %v64 = vpack.c.b16 %v61, %v60
  %v65 = vpack.c.b16 %v63, %v62
  %v84 = vunpack.c.l.b16 %v40
  %v85 = vunpack.c.l.b16 %v41
  %v86 = vunpack.c.l.b16 %v42
  %v87 = vunpack.c.l.b16 %v43
  %v88 = vunpack.c.l.b16 %v44
  %v89 = vunpack.c.l.b16 %v45
  %v90 = vunpack.c.l.b16 %v46
  %v91 = vunpack.c.l.b16 %v47
  %v92 = vunpack.c.l.b16 %v48
  %v93 = vunpack.c.l.b16 %v49
  %v94 = vunpack.c.l.b16 %v50
  %v95 = vunpack.c.l.b16 %v51
  %v96 = vunpack.c.l.b16 %v52
  %v97 = vunpack.c.l.b16 %v53
  %v98 = vunpack.c.l.b16 %v54
  %v99 = vunpack.c.l.b16 %v55
  %v100 = vpack.c.b16 %v85, %v84
  %v101 = vpack.c.b16 %v87, %v86
  %v102 = vpack.c.b16 %v89, %v88
  %v103 = vpack.c.b16 %v91, %v90
  %v104 = vpack.c.b16 %v93, %v92
  %v105 = vpack.c.b16 %v95, %v94
  %v106 = vpack.c.b16 %v97, %v96
  %v107 = vpack.c.b16 %v99, %v98
  %116 = vmatprep.subr.bf16.mxu0 0
  %117 = vmatpush1.bf16.msra.mxu0 %v100
  %118 = vmatprep.subr.bf16.mxu0 0
  %119 = vmatpush1.bf16.msra.mxu0 %v101
  %120 = vmatprep.subr.bf16.mxu0 0
  %121 = vmatpush1.bf16.msra.mxu0 %v102
  %122 = vmatprep.subr.bf16.mxu0 0
  %123 = vmatpush1.bf16.msra.mxu0 %v103
  %124 = vmatprep.subr.bf16.mxu0 0
  %125 = vmatpush1.bf16.msra.mxu0 %v104
  %126 = vmatprep.subr.bf16.mxu0 0
  %127 = vmatpush1.bf16.msra.mxu0 %v105
  %128 = vmatprep.subr.bf16.mxu0 0
  %129 = vmatpush1.bf16.msra.mxu0 %v106
  %130 = vmatprep.subr.bf16.mxu0 0
  %131 = vmatpush1.bf16.msra.mxu0 %v107
  %132 = vmatprep.subr.bf16.mxu0 0
  %133 = vmatpush1.bf16.msra.mxu0 0
  %134 = vmatprep.subr.bf16.mxu0 0
  %135 = vmatpush1.bf16.msra.mxu0 0
  %136 = vmatprep.subr.bf16.mxu0 0
  %137 = vmatpush1.bf16.msra.mxu0 0
  %138 = vmatprep.subr.bf16.mxu0 0
  %139 = vmatpush1.bf16.msra.mxu0 0
  %140 = vmatprep.subr.bf16.mxu0 0
  %141 = vmatpush1.bf16.msra.mxu0 0
  %142 = vmatprep.subr.bf16.mxu0 0
  %143 = vmatpush1.bf16.msra.mxu0 0
  %144 = vmatprep.subr.bf16.mxu0 0
  %145 = vmatpush1.bf16.msra.mxu0 0
  %146 = vmatprep.subr.bf16.mxu0 0
  %147 = vmatpush1.bf16.msra.mxu0 0
  %148 = vmatprep.mubr.bf16.mxu0 0
  %149 = vmatmul.mubr.bf16.gmra.mrb[0].mxu0 %v64
  %v150 = vpop.f32.mrb[0].mxu0
  %v151 = vadd.f32 0.0, %v150
  %v152 = vpop.f32.mrb[0].mxu0
  %v153 = vpop.f32.mrb[0].mxu0
  %v154 = vadd.f32 0.0, %v153
  %v155 = vpop.f32.mrb[0].mxu0
  %156 = vmatprep.mubr.bf16.mxu0 0
  %157 = vmatmul.mubr.bf16.gmra.mrb[0].mxu0 %v65
  %v158 = vpop.f32.mrb[0].mxu0
  %v159 = vadd.f32 0.0, %v158
  %v160 = vpop.f32.mrb[0].mxu0
  %v161 = vpop.f32.mrb[0].mxu0
  %v162 = vadd.f32 0.0, %v161
  %v163 = vpop.f32.mrb[0].mxu0
  %164 = vdwg.mxu0
  %v165 = vadd.f32 %v32, %v151
  %v166 = vadd.f32 %v33, %v154
  %v167 = vadd.f32 %v34, %v159
  %v168 = vadd.f32 %v35, %v162
  %169 = vst [vmem:[#allocation2] sm:$0xff] %v165
  %170 = vst [vmem:[#allocation2 + $0x8] sm:$0xff] %v166
  %171 = vst [vmem:[#allocation2 + $0x10] sm:$0xff] %v167
  %172 = vst [vmem:[#allocation2 + $0x18] sm:$0xff] %v168
  // Predicated region
  $region30: #{stage0_forward.12} parent=0 // pred_check
    %p173 = pneg %p24
  $region31: #{stage0_forward.12} parent=0 // pred_check_branch
    %175 = sbr.rel (%p173) target = $region33
  $region32: #{stage0_forward.12} parent=0 // pred_region
    %v176 = vld [vmem:[#allocation2] sm:$0xff]
    %v177 = vld [vmem:[#allocation2 + $0x8] sm:$0xff]
    %v178 = vld [vmem:[#allocation2 + $0x10] sm:$0xff]
    %v179 = vld [vmem:[#allocation2 + $0x18] sm:$0xff]
    %v180 = vld [vmem:[%s2] sm:$0x1]
    %v182 = vlaneseq
    %v183 = vshrl.u32 %v182, 7
    %v184 = vsub.s32 0, %v183
    %v185 = vrot.slane %v180, %v184
    %v187 = vadd.f32 %v176, %v185
    %v188 = vadd.f32 %v177, %v185
    %v189 = vadd.f32 %v178, %v185
    %v190 = vadd.f32 %v179, %v185
    %v191 = vld [vmem:[%s3] sm:$0xf]
    %v192 = vld [vmem:[%s3 + $0x4] sm:$0xf]
    %v193 = vld [vmem:[%s3 + $0x8] sm:$0xf]
    %v194 = vld [vmem:[%s3 + $0xc] sm:$0xf]
    %v195 = vunpack.c.l.bf16 %v191
    %v196 = vunpack.c.l.bf16 %v192
    %v197 = vunpack.c.l.bf16 %v193
    %v198 = vunpack.c.l.bf16 %v194
    %v199 = vadd.f32 %v187, %v195
    %v200 = vadd.f32 %v188, %v196
    %v201 = vadd.f32 %v189, %v197
    %v202 = vadd.f32 %v190, %v198
    %203 = vadd.xlane.f32.xlu0 %v199
    %v204 = vpop.xlane.xlu0 %203
    %205 = vadd.xlane.f32.xlu0 %v200
    %v206 = vpop.xlane.xlu0 %205
    %207 = vadd.xlane.f32.xlu0 %v201
    %v208 = vpop.xlane.xlu0 %207
    %209 = vadd.xlane.f32.xlu0 %v202
    %v210 = vpop.xlane.xlu0 %209
    %v211 = vrcp.pop 128.0
    %v212 = vmul.f32 %v204, %v211
    %v213 = vmul.f32 %v206, %v211
    %v214 = vmul.f32 %v208, %v211
    %v215 = vmul.f32 %v210, %v211
    %v216 = vsub.f32 %v199, %v212
    %v217 = vsub.f32 %v200, %v213
    %v218 = vsub.f32 %v201, %v214
    %v219 = vsub.f32 %v202, %v215
    %v220 = vmul.f32 %v216, %v216
    %v221 = vmul.f32 %v217, %v217
    %v222 = vmul.f32 %v218, %v218
    %v223 = vmul.f32 %v219, %v219
    %224 = vadd.xlane.f32.xlu0 %v220
    %v225 = vpop.xlane.xlu0 %224
    %226 = vadd.xlane.f32.xlu0 %v221
    %v227 = vpop.xlane.xlu0 %226
    %228 = vadd.xlane.f32.xlu0 %v222
    %v229 = vpop.xlane.xlu0 %228
    %230 = vadd.xlane.f32.xlu0 %v223
    %v231 = vpop.xlane.xlu0 %230
    %v232 = vmul.f32 %v225, %v211
    %v233 = vmul.f32 %v227, %v211
    %v234 = vmul.f32 %v229, %v211
    %v235 = vmul.f32 %v231, %v211
    %v236 = vadd.f32 %v232, 1e-12
    %v237 = vadd.f32 %v233, 1e-12
    %v238 = vadd.f32 %v234, 1e-12
    %v239 = vadd.f32 %v235, 1e-12
    %v240 = vrsqrt.pop %v236
    %v241 = vrsqrt.pop %v237
    %v242 = vrsqrt.pop %v238
    %v243 = vrsqrt.pop %v239
    %v244 = vmul.f32 %v216, %v240
    %v245 = vmul.f32 %v217, %v241
    %v246 = vmul.f32 %v218, %v242
    %v247 = vmul.f32 %v219, %v243
    %v248 = vld [vmem:[%s4] sm:$0x1]
    %v250 = vlaneseq
    %v251 = vshrl.u32 %v250, 7
    %v252 = vsub.s32 0, %v251
    %v253 = vrot.slane %v248, %v252
    %v255 = vmul.f32 %v244, %v253
    %v256 = vmul.f32 %v245, %v253
    %v257 = vmul.f32 %v246, %v253
    %v258 = vmul.f32 %v247, %v253
    %v259 = vld [vmem:[%s5] sm:$0x1]
    %v261 = vlaneseq
    %v262 = vshrl.u32 %v261, 7
    %v263 = vsub.s32 0, %v262
    %v264 = vrot.slane %v259, %v263
    %v266 = vadd.f32 %v255, %v264
    %v267 = vadd.f32 %v256, %v264
    %v268 = vadd.f32 %v257, %v264
    %v269 = vadd.f32 %v258, %v264
    %v270 = vpack.c.bf16 %v267, %v266
    %v271 = vpack.c.bf16 %v269, %v268
    %v274 = vunpack.c.l.b16 %v270
    %v275 = vunpack.c.h.b16 %v270
    %v276 = vunpack.c.l.b16 %v271
    %v277 = vunpack.c.h.b16 %v271
    %v278 = vpack.c.b16 %v274, %v274
    %v279 = vpack.c.b16 %v275, %v275
    %v280 = vpack.c.b16 %v276, %v276
    %v281 = vpack.c.b16 %v277, %v277
    %286 = vst [vmem:[%s6] sm:$0xf] %v278
    %287 = vst [vmem:[%s6 + $0x4] sm:$0xf] %v279
    %288 = vst [vmem:[%s6 + $0x8] sm:$0xf] %v280
    %289 = vst [vmem:[%s6 + $0xc] sm:$0xf] %v281
  $region33: #{stage0_forward.12} parent=0 // pred_fallthru
    _
  // Predicated region
  $region34: #{stage0_forward.12} parent=0 // pred_check
    _
  $region35: #{stage0_forward.12} parent=0 // pred_check_branch
    %291 = sbr.rel (0) target = $region37
  $region36: #{stage0_forward.12} parent=0 // pred_region
    _
  $region37: #{stage0_forward.12} parent=0 // pred_fallthru
    _
  // Predicated region
  $region38: #{stage0_forward.12} parent=0 // pred_check
    _
  $region39: #{stage0_forward.12} parent=0 // pred_check_branch
    %293 = sbr.rel (0) target = $region41
  $region40: #{stage0_forward.12} parent=0 // pred_region
    _
  $region41: #{stage0_forward.12} parent=0 // pred_fallthru
    _

// kernel: stage0_forward.10
$region0: #{stage0_forward.10}
  #allocation0 [shape = 'u32[]', space=smem, size = 0x4, offset = 0x4, fixed_abs, tag = 'smem constant byte address 0x4 - core index']
  #allocation1 [shape = 'u32[144,128]{1,0:T(1,128)}', space=vmem, size = 0x12000, scoped, tag = 'internal scratch']
  #allocation2 [shape = 'f32[32,384]{1,0:T(8,128)}', space=vmem, size = 0xc000, scoped, tag = 'scratch operand']
  %s0 = inlined_call_operand.vmem [shape: bf16[32,128], index: 0, kind: input, shape index: {}]
  %s1 = inlined_call_operand.vmem [shape: bf16[128,384], index: 1, kind: input, shape index: {}]
  %s2 = inlined_call_operand.vmem [shape: f32[1,384], index: 2, kind: input, shape index: {}]
  %s3 = inlined_call_operand.vmem [shape: bf16[32,384], index: 3, kind: output, shape index: {}]
  %s4 = sld [smem:[#allocation0]]
  $region30: #{stage0_forward.10} parent=0
    _
  %s6 = ssub.s32 1, %s4
  %s7 = scalar_select 0, %s6, %s4
  // Predicated region
  $region2: #{stage0_forward.10} parent=0 // pred_check
    _
  $region3: #{stage0_forward.10} parent=0 // pred_check_branch
    %9 = sbr.rel (0) target = $region5
  $region4: #{stage0_forward.10} parent=0 // pred_region
    _
  $region5: #{stage0_forward.10} parent=0 // pred_fallthru
    _
  // Predicated region
  $region6: #{stage0_forward.10} parent=0 // pred_check
    _
  $region7: #{stage0_forward.10} parent=0 // pred_check_branch
    %11 = sbr.rel (0) target = $region9
  $region8: #{stage0_forward.10} parent=0 // pred_region
    _
  $region9: #{stage0_forward.10} parent=0 // pred_fallthru
    _
  // Predicated region
  $region10: #{stage0_forward.10} parent=0 // pred_check
    _
  $region11: #{stage0_forward.10} parent=0 // pred_check_branch
    %13 = sbr.rel (0) target = $region13
  $region12: #{stage0_forward.10} parent=0 // pred_region
    _
  $region13: #{stage0_forward.10} parent=0 // pred_fallthru
    _
  %p15 = scmp.eq.s32.totalorder 0, 0
  // Predicated region
  $region14: #{stage0_forward.10} parent=0 // pred_check
    %p16 = pneg %p15
  $region15: #{stage0_forward.10} parent=0 // pred_check_branch
    %18 = sbr.rel (%p16) target = $region17
  $region16: #{stage0_forward.10} parent=0 // pred_region
    %19 = vst [vmem:[#allocation2] sm:$0xff] 0.0
    %20 = vst [vmem:[#allocation2 + $0x8] sm:$0xff] 0.0
    %21 = vst [vmem:[#allocation2 + $0x10] sm:$0xff] 0.0
    %22 = vst [vmem:[#allocation2 + $0x18] sm:$0xff] 0.0
    %23 = vst [vmem:[#allocation2 + $0x20] sm:$0xff] 0.0
    %24 = vst [vmem:[#allocation2 + $0x28] sm:$0xff] 0.0
    %25 = vst [vmem:[#allocation2 + $0x30] sm:$0xff] 0.0
    %26 = vst [vmem:[#allocation2 + $0x38] sm:$0xff] 0.0
    %27 = vst [vmem:[#allocation2 + $0x40] sm:$0xff] 0.0
    %28 = vst [vmem:[#allocation2 + $0x48] sm:$0xff] 0.0
    %29 = vst [vmem:[#allocation2 + $0x50] sm:$0xff] 0.0
    %30 = vst [vmem:[#allocation2 + $0x58] sm:$0xff] 0.0
  $region17: #{stage0_forward.10} parent=0 // pred_fallthru
    _
  %v31 = vld [vmem:[#allocation2] sm:$0xff]
  %v32 = vld [vmem:[#allocation2 + $0x8] sm:$0xff]
  %v33 = vld [vmem:[#allocation2 + $0x10] sm:$0xff]
  %v34 = vld [vmem:[#allocation2 + $0x18] sm:$0xff]
  %v35 = vld [vmem:[#allocation2 + $0x20] sm:$0xff]
  %v36 = vld [vmem:[#allocation2 + $0x28] sm:$0xff]
  %v37 = vld [vmem:[#allocation2 + $0x30] sm:$0xff]
  %v38 = vld [vmem:[#allocation2 + $0x38] sm:$0xff]
  %v39 = vld [vmem:[#allocation2 + $0x40] sm:$0xff]
  %v40 = vld [vmem:[#allocation2 + $0x48] sm:$0xff]
  %v41 = vld [vmem:[#allocation2 + $0x50] sm:$0xff]
  %v42 = vld [vmem:[#allocation2 + $0x58] sm:$0xff]
  %v43 = vld [vmem:[%s0] sm:$0xf]
  %v44 = vld [vmem:[%s0 + $0x4] sm:$0xf]
  %v45 = vld [vmem:[%s0 + $0x8] sm:$0xf]
  %v46 = vld [vmem:[%s0 + $0xc] sm:$0xf]
  %v47 = vld [vmem:[%s1] sm:$0xff]
  %v48 = vld [vmem:[%s1 + $0x8] sm:$0xf]
  %v49 = vld [vmem:[%s1 + $0xc] sm:$0xff]
  %v50 = vld [vmem:[%s1 + $0x14] sm:$0xf]
  %v51 = vld [vmem:[%s1 + $0x18] sm:$0xff]
  %v52 = vld [vmem:[%s1 + $0x20] sm:$0xf]
  %v53 = vld [vmem:[%s1 + $0x24] sm:$0xff]
  %v54 = vld [vmem:[%s1 + $0x2c] sm:$0xf]
  %v55 = vld [vmem:[%s1 + $0x30] sm:$0xff]
  %v56 = vld [vmem:[%s1 + $0x38] sm:$0xf]
  %v57 = vld [vmem:[%s1 + $0x3c] sm:$0xff]
  %v58 = vld [vmem:[%s1 + $0x44] sm:$0xf]
  %v59 = vld [vmem:[%s1 + $0x48] sm:$0xff]
  %v60 = vld [vmem:[%s1 + $0x50] sm:$0xf]
  %v61 = vld [vmem:[%s1 + $0x54] sm:$0xff]
  %v62 = vld [vmem:[%s1 + $0x5c] sm:$0xf]
  %v63 = vld [vmem:[%s1 + $0x60] sm:$0xff]
  %v64 = vld [vmem:[%s1 + $0x68] sm:$0xf]
  %v65 = vld [vmem:[%s1 + $0x6c] sm:$0xff]
  %v66 = vld [vmem:[%s1 + $0x74] sm:$0xf]
  %v67 = vld [vmem:[%s1 + $0x78] sm:$0xff]
  %v68 = vld [vmem:[%s1 + $0x80] sm:$0xf]
  %v69 = vld [vmem:[%s1 + $0x84] sm:$0xff]
  %v70 = vld [vmem:[%s1 + $0x8c] sm:$0xf]
  %v71 = vld [vmem:[%s1 + $0x90] sm:$0xff]
  %v72 = vld [vmem:[%s1 + $0x98] sm:$0xf]
  %v73 = vld [vmem:[%s1 + $0x9c] sm:$0xff]
  %v74 = vld [vmem:[%s1 + $0xa4] sm:$0xf]
  %v75 = vld [vmem:[%s1 + $0xa8] sm:$0xff]
  %v76 = vld [vmem:[%s1 + $0xb0] sm:$0xf]
  %v77 = vld [vmem:[%s1 + $0xb4] sm:$0xff]
  %v78 = vld [vmem:[%s1 + $0xbc] sm:$0xf]
  %v83 = vunpack.c.l.b16 %v43
  %v84 = vunpack.c.l.b16 %v44
  %v85 = vunpack.c.l.b16 %v45
  %v86 = vunpack.c.l.b16 %v46
  %v87 = vpack.c.b16 %v84, %v83
  %v88 = vpack.c.b16 %v86, %v85
  %v123 = vunpack.c.l.b16 %v47
  %v124 = vunpack.c.h.b16 %v47
  %v125 = vunpack.c.l.b16 %v48
  %v126 = vunpack.c.l.b16 %v49
  %v127 = vunpack.c.h.b16 %v49
  %v128 = vunpack.c.l.b16 %v50
  %v129 = vunpack.c.l.b16 %v51
  %v130 = vunpack.c.h.b16 %v51
  %v131 = vunpack.c.l.b16 %v52
  %v132 = vunpack.c.l.b16 %v53
  %v133 = vunpack.c.h.b16 %v53
  %v134 = vunpack.c.l.b16 %v54
  %v135 = vunpack.c.l.b16 %v55
  %v136 = vunpack.c.h.b16 %v55
  %v137 = vunpack.c.l.b16 %v56
  %v138 = vunpack.c.l.b16 %v57
  %v139 = vunpack.c.h.b16 %v57
  %v140 = vunpack.c.l.b16 %v58
  %v141 = vunpack.c.l.b16 %v59
  %v142 = vunpack.c.h.b16 %v59
  %v143 = vunpack.c.l.b16 %v60
  %v144 = vunpack.c.l.b16 %v61
  %v145 = vunpack.c.h.b16 %v61
  %v146 = vunpack.c.l.b16 %v62
  %v147 = vunpack.c.l.b16 %v63
  %v148 = vunpack.c.h.b16 %v63
  %v149 = vunpack.c.l.b16 %v64
  %v150 = vunpack.c.l.b16 %v65
  %v151 = vunpack.c.h.b16 %v65
  %v152 = vunpack.c.l.b16 %v66
  %v153 = vunpack.c.l.b16 %v67
  %v154 = vunpack.c.h.b16 %v67
  %v155 = vunpack.c.l.b16 %v68
  %v156 = vunpack.c.l.b16 %v69
  %v157 = vunpack.c.h.b16 %v69
  %v158 = vunpack.c.l.b16 %v70
  %v159 = vunpack.c.l.b16 %v71
  %v160 = vunpack.c.h.b16 %v71
  %v161 = vunpack.c.l.b16 %v72
  %v162 = vunpack.c.l.b16 %v73
  %v163 = vunpack.c.h.b16 %v73
  %v164 = vunpack.c.l.b16 %v74
  %v165 = vunpack.c.l.b16 %v75
  %v166 = vunpack.c.h.b16 %v75
  %v167 = vunpack.c.l.b16 %v76
  %v168 = vunpack.c.l.b16 %v77
  %v169 = vunpack.c.h.b16 %v77
  %v170 = vunpack.c.l.b16 %v78
  %v171 = vpack.c.b16 %v126, %v123
  %v172 = vpack.c.b16 %v127, %v124
  %v173 = vpack.c.b16 %v128, %v125
  %v174 = vpack.c.b16 %v132, %v129
  %v175 = vpack.c.b16 %v133, %v130
  %v176 = vpack.c.b16 %v134, %v131
  %v177 = vpack.c.b16 %v138, %v135
  %v178 = vpack.c.b16 %v139, %v136
  %v179 = vpack.c.b16 %v140, %v137
  %v180 = vpack.c.b16 %v144, %v141
  %v181 = vpack.c.b16 %v145, %v142
  %v182 = vpack.c.b16 %v146, %v143
  %v183 = vpack.c.b16 %v150, %v147
  %v184 = vpack.c.b16 %v151, %v148
  %v185 = vpack.c.b16 %v152, %v149
  %v186 = vpack.c.b16 %v156, %v153
  %v187 = vpack.c.b16 %v157, %v154
  %v188 = vpack.c.b16 %v158, %v155
  %v189 = vpack.c.b16 %v162, %v159
  %v190 = vpack.c.b16 %v163, %v160
  %v191 = vpack.c.b16 %v164, %v161
  %v192 = vpack.c.b16 %v168, %v165
  %v193 = vpack.c.b16 %v169, %v166
  %v194 = vpack.c.b16 %v170, %v167
  %219 = vmatprep.subr.bf16.mxu0 %v172
  %220 = vmatpush1.bf16.msra.mxu0 %v171
  %221 = vmatprep.subr.bf16.mxu0 %v175
  %222 = vmatpush1.bf16.msra.mxu0 %v174
  %223 = vmatprep.subr.bf16.mxu0 %v178
  %224 = vmatpush1.bf16.msra.mxu0 %v177
  %225 = vmatprep.subr.bf16.mxu0 %v181
  %226 = vmatpush1.bf16.msra.mxu0 %v180
  %227 = vmatprep.subr.bf16.mxu0 %v184
  %228 = vmatpush1.bf16.msra.mxu0 %v183
  %229 = vmatprep.subr.bf16.mxu0 %v187
  %230 = vmatpush1.bf16.msra.mxu0 %v186
  %231 = vmatprep.subr.bf16.mxu0 %v190
  %232 = vmatpush1.bf16.msra.mxu0 %v189
  %233 = vmatprep.subr.bf16.mxu0 %v193
  %234 = vmatpush1.bf16.msra.mxu0 %v192
  %235 = vmatprep.subr.bf16.mxu0 0
  %236 = vmatpush1.bf16.msra.mxu0 0
  %237 = vmatprep.subr.bf16.mxu0 0
  %238 = vmatpush1.bf16.msra.mxu0 0
  %239 = vmatprep.subr.bf16.mxu0 0
  %240 = vmatpush1.bf16.msra.mxu0 0
  %241 = vmatprep.subr.bf16.mxu0 0
  %242 = vmatpush1.bf16.msra.mxu0 0
  %243 = vmatprep.subr.bf16.mxu0 0
  %244 = vmatpush1.bf16.msra.mxu0 0
  %245 = vmatprep.subr.bf16.mxu0 0
  %246 = vmatpush1.bf16.msra.mxu0 0
  %247 = vmatprep.subr.bf16.mxu0 0
  %248 = vmatpush1.bf16.msra.mxu0 0
  %249 = vmatprep.subr.bf16.mxu0 0
  %250 = vmatpush1.bf16.msra.mxu0 0
  %251 = vmatprep.mubr.bf16.mxu0 0
  %252 = vmatmul.mubr.bf16.gmra.mrb[0].mxu0 %v87
  %v253 = vpop.f32.mrb[0].mxu0
  %v254 = vadd.f32 0.0, %v253
  %v255 = vpop.f32.mrb[0].mxu0
  %v256 = vadd.f32 0.0, %v255
  %v257 = vpop.f32.mrb[0].mxu0
  %v258 = vadd.f32 0.0, %v257
  %v259 = vpop.f32.mrb[0].mxu0
  %v260 = vadd.f32 0.0, %v259
  %261 = vmatprep.mubr.bf16.mxu0 0
  %262 = vmatmul.mubr.bf16.gmra.mrb[0].mxu0 %v88
  %v263 = vpop.f32.mrb[0].mxu0
  %v264 = vadd.f32 0.0, %v263
  %v265 = vpop.f32.mrb[0].mxu0
  %v266 = vadd.f32 0.0, %v265
  %v267 = vpop.f32.mrb[0].mxu0
  %v268 = vadd.f32 0.0, %v267
  %v269 = vpop.f32.mrb[0].mxu0
  %v270 = vadd.f32 0.0, %v269
  %271 = vdwg.mxu0
  %272 = vmatprep.subr.bf16.mxu0 0
  %273 = vmatpush1.bf16.msra.mxu0 %v173
  %274 = vmatprep.subr.bf16.mxu0 0
  %275 = vmatpush1.bf16.msra.mxu0 %v176
  %276 = vmatprep.subr.bf16.mxu0 0
  %277 = vmatpush1.bf16.msra.mxu0 %v179
  %278 = vmatprep.subr.bf16.mxu0 0
  %279 = vmatpush1.bf16.msra.mxu0 %v182
  %280 = vmatprep.subr.bf16.mxu0 0
  %281 = vmatpush1.bf16.msra.mxu0 %v185
  %282 = vmatprep.subr.bf16.mxu0 0
  %283 = vmatpush1.bf16.msra.mxu0 %v188
  %284 = vmatprep.subr.bf16.mxu0 0
  %285 = vmatpush1.bf16.msra.mxu0 %v191
  %286 = vmatprep.subr.bf16.mxu0 0
  %287 = vmatpush1.bf16.msra.mxu0 %v194
  %288 = vmatprep.subr.bf16.mxu0 0
  %289 = vmatpush1.bf16.msra.mxu0 0
  %290 = vmatprep.subr.bf16.mxu0 0
  %291 = vmatpush1.bf16.msra.mxu0 0
  %292 = vmatprep.subr.bf16.mxu0 0
  %293 = vmatpush1.bf16.msra.mxu0 0
  %294 = vmatprep.subr.bf16.mxu0 0
  %295 = vmatpush1.bf16.msra.mxu0 0
  %296 = vmatprep.subr.bf16.mxu0 0
  %297 = vmatpush1.bf16.msra.mxu0 0
  %298 = vmatprep.subr.bf16.mxu0 0
  %299 = vmatpush1.bf16.msra.mxu0 0
  %300 = vmatprep.subr.bf16.mxu0 0
  %301 = vmatpush1.bf16.msra.mxu0 0
  %302 = vmatprep.subr.bf16.mxu0 0
  %303 = vmatpush1.bf16.msra.mxu0 0
  %304 = vmatprep.mubr.bf16.mxu0 0
  %305 = vmatmul.mubr.bf16.gmra.mrb[0].mxu0 %v87
  %v306 = vpop.f32.mrb[0].mxu0
  %v307 = vadd.f32 0.0, %v306
  %v308 = vpop.f32.mrb[0].mxu0
  %v309 = vpop.f32.mrb[0].mxu0
  %v310 = vadd.f32 0.0, %v309
  %v311 = vpop.f32.mrb[0].mxu0
  %312 = vmatprep.mubr.bf16.mxu0 0
  %313 = vmatmul.mubr.bf16.gmra.mrb[0].mxu0 %v88
  %v314 = vpop.f32.mrb[0].mxu0
  %v315 = vadd.f32 0.0, %v314
  %v316 = vpop.f32.mrb[0].mxu0
  %v317 = vpop.f32.mrb[0].mxu0
  %v318 = vadd.f32 0.0, %v317
  %v319 = vpop.f32.mrb[0].mxu0
  %320 = vdwg.mxu0
  %v321 = vadd.f32 %v31, %v254
  %v322 = vadd.f32 %v32, %v256
  %v323 = vadd.f32 %v33, %v307
  %v324 = vadd.f32 %v34, %v258
  %v325 = vadd.f32 %v35, %v260
  %v326 = vadd.f32 %v36, %v310
  %v327 = vadd.f32 %v37, %v264
  %v328 = vadd.f32 %v38, %v266
  %v329 = vadd.f32 %v39, %v315
  %v330 = vadd.f32 %v40, %v268
  %v331 = vadd.f32 %v41, %v270
  %v332 = vadd.f32 %v42, %v318
  %333 = vst [vmem:[#allocation2] sm:$0xff] %v321
  %334 = vst [vmem:[#allocation2 + $0x8] sm:$0xff] %v322
  %335 = vst [vmem:[#allocation2 + $0x10] sm:$0xff] %v323
  %336 = vst [vmem:[#allocation2 + $0x18] sm:$0xff] %v324
  %337 = vst [vmem:[#allocation2 + $0x20] sm:$0xff] %v325
  %338 = vst [vmem:[#allocation2 + $0x28] sm:$0xff] %v326
  %339 = vst [vmem:[#allocation2 + $0x30] sm:$0xff] %v327
  %340 = vst [vmem:[#allocation2 + $0x38] sm:$0xff] %v328
  %341 = vst [vmem:[#allocation2 + $0x40] sm:$0xff] %v329
  %342 = vst [vmem:[#allocation2 + $0x48] sm:$0xff] %v330
  %343 = vst [vmem:[#allocation2 + $0x50] sm:$0xff] %v331
  %344 = vst [vmem:[#allocation2 + $0x58] sm:$0xff] %v332
  // Predicated region
  $region18: #{stage0_forward.10} parent=0 // pred_check
    %p345 = pneg %p15
  $region19: #{stage0_forward.10} parent=0 // pred_check_branch
    %347 = sbr.rel (%p345) target = $region21
  $region20: #{stage0_forward.10} parent=0 // pred_region
    %v348 = vld [vmem:[#allocation2] sm:$0xff]
    %v349 = vld [vmem:[#allocation2 + $0x8] sm:$0xff]
    %v350 = vld [vmem:[#allocation2 + $0x10] sm:$0xff]
    %v351 = vld [vmem:[#allocation2 + $0x18] sm:$0xff]
    %v352 = vld [vmem:[#allocation2 + $0x20] sm:$0xff]
    %v353 = vld [vmem:[#allocation2 + $0x28] sm:$0xff]
    %v354 = vld [vmem:[#allocation2 + $0x30] sm:$0xff]
    %v355 = vld [vmem:[#allocation2 + $0x38] sm:$0xff]
    %v356 = vld [vmem:[#allocation2 + $0x40] sm:$0xff]
    %v357 = vld [vmem:[#allocation2 + $0x48] sm:$0xff]
    %v358 = vld [vmem:[#allocation2 + $0x50] sm:$0xff]
    %v359 = vld [vmem:[#allocation2 + $0x58] sm:$0xff]
    %v360 = vld [vmem:[%s2] sm:$0x7]
    %v362 = vlaneseq
    %v363 = vshrl.u32 %v362, 7
    %v364 = vsub.s32 0, %v363
    %v365 = vrot.slane %v360, %v364
    %v366 = vlaneseq
    %v367 = vshrl.u32 %v366, 7
    %v368 = vsub.s32 1, %v367
    %v369 = vrot.slane %v360, %v368
    %v370 = vlaneseq
    %v371 = vshrl.u32 %v370, 7
    %v372 = vsub.s32 2, %v371
    %v373 = vrot.slane %v360, %v372
    %v377 = vadd.f32 %v348, %v365
    %v378 = vadd.f32 %v349, %v369
    %v379 = vadd.f32 %v350, %v373
    %v380 = vadd.f32 %v351, %v365
    %v381 = vadd.f32 %v352, %v369
    %v382 = vadd.f32 %v353, %v373
    %v383 = vadd.f32 %v354, %v365
    %v384 = vadd.f32 %v355, %v369
    %v385 = vadd.f32 %v356, %v373
    %v386 = vadd.f32 %v357, %v365
    %v387 = vadd.f32 %v358, %v369
    %v388 = vadd.f32 %v359, %v373
    %v389 = vpack.c.bf16 %v380, %v377
    %v390 = vpack.c.bf16 %v381, %v378
    %v391 = vpack.c.bf16 %v382, %v379
    %v392 = vpack.c.bf16 %v386, %v383
    %v393 = vpack.c.bf16 %v387, %v384
    %v394 = vpack.c.bf16 %v388, %v385
    %v401 = vunpack.c.l.b16 %v389
    %v402 = vunpack.c.l.b16 %v390
    %v403 = vunpack.c.l.b16 %v391
    %v404 = vunpack.c.h.b16 %v389
    %v405 = vunpack.c.h.b16 %v390
    %v406 = vunpack.c.h.b16 %v391
    %v407 = vunpack.c.l.b16 %v392
    %v408 = vunpack.c.l.b16 %v393
    %v409 = vunpack.c.l.b16 %v394
    %v410 = vunpack.c.h.b16 %v392
    %v411 = vunpack.c.h.b16 %v393
    %v412 = vunpack.c.h.b16 %v394
    %v413 = vpack.c.b16 %v402, %v401
    %v414 = vpack.c.b16 %v403, %v403
    %v415 = vpack.c.b16 %v405, %v404
    %v416 = vpack.c.b16 %v406, %v406
    %v417 = vpack.c.b16 %v408, %v407
    %v418 = vpack.c.b16 %v409, %v409
    %v419 = vpack.c.b16 %v411, %v410
    %v420 = vpack.c.b16 %v412, %v412
    %429 = vst [vmem:[%s3] sm:$0xff] %v413
    %430 = vst [vmem:[%s3 + $0x8] sm:$0xf] %v414
    %431 = vst [vmem:[%s3 + $0xc] sm:$0xff] %v415
    %432 = vst [vmem:[%s3 + $0x14] sm:$0xf] %v416
    %433 = vst [vmem:[%s3 + $0x18] sm:$0xff] %v417
    %434 = vst [vmem:[%s3 + $0x20] sm:$0xf] %v418
    %435 = vst [vmem:[%s3 + $0x24] sm:$0xff] %v419
    %436 = vst [vmem:[%s3 + $0x2c] sm:$0xf] %v420
  $region21: #{stage0_forward.10} parent=0 // pred_fallthru
    _
  // Predicated region
  $region22: #{stage0_forward.10} parent=0 // pred_check
    _
  $region23: #{stage0_forward.10} parent=0 // pred_check_branch
    %438 = sbr.rel (0) target = $region25
  $region24: #{stage0_forward.10} parent=0 // pred_region
    _
  $region25: #{stage0_forward.10} parent=0 // pred_fallthru
    _
  // Predicated region
  $region26: #{stage0_forward.10} parent=0 // pred_check
    _
  $region27: #{stage0_forward.10} parent=0 // pred_check_branch
    %440 = sbr.rel (0) target = $region29
  $region28: #{stage0_forward.10} parent=0 // pred_region
    _
  $region29: #{stage0_forward.10} parent=0 // pred_fallthru
    _

// kernel: stage0_forward.11
$region0: #{stage0_forward.11}
  #allocation0 [shape = 'u32[]', space=smem, size = 0x4, offset = 0x4, fixed_abs, tag = 'smem constant byte address 0x4 - core index']
  #allocation1 [shape = 'u32[144,128]{1,0:T(1,128)}', space=vmem, size = 0x12000, scoped, tag = 'internal scratch']
  #allocation2 [shape = 'f32[2,16,1]{2,1,0:T(8,128)}', space=vmem, size = 0x4000, scoped, tag = 'scratch operand']
  #allocation3 [shape = 'f32[2,16,1]{2,1,0:T(8,128)}', space=vmem, size = 0x4000, scoped, tag = 'scratch operand']
  #allocation4 [shape = 'f32[16,128]{1,0:T(8,128)}', space=vmem, size = 0x2000, scoped, tag = 'scratch operand']
  %s0 = inlined_call_operand.vmem [shape: bf16[32,384], index: 0, kind: input, shape index: {}, may-alias: {0,1,2}]
  %s1 = inlined_call_operand.vmem [shape: bf16[32,384], index: 1, kind: input, shape index: {}, may-alias: {0,1,2}]
  %s2 = inlined_call_operand.vmem [shape: bf16[32,384], index: 2, kind: input, shape index: {}, may-alias: {0,1,2}]
  %s3 = inlined_call_operand.vmem [shape: bf16[32,128], index: 3, kind: output, shape index: {}]
  %s4 = sld [smem:[#allocation0]]
  $region176: #{stage0_forward.11} parent=0
    _
  %s6 = ssub.s32 1, %s4
  %s7 = scalar_select 0, %s6, %s4
  $region1: #{stage0_forward.11} parent=0
    #allocation5 [shape = 'u8[8192]{0}', space=vmem, size = 0x2000, scoped, tag = 'input window, operand 0']
    #allocation6 [shape = 'u8[8192]{0}', space=vmem, size = 0x2000, scoped, tag = 'input window, operand 1']
    #allocation7 [shape = 'u8[8192]{0}', space=vmem, size = 0x2000, scoped, tag = 'input window, operand 2']
    loop: start=0, step=1, limit=4
    $region2: #{stage0_forward.11} parent=1 // loop_pre_header
      _
    $region3: #{stage0_forward.11} parent=1 // loop_header
      %s9 = sphi 0, %s13
      %p10 = scmp.ge.s32.totalorder %s9, 4
      %s16 = sphi 0, %s35
      %s17 = sphi 0, %s31
      %s18 = sphi 0, %s27
      %s19 = sphi 0, %s16
      %s20 = sphi 0, %s17
      %s21 = sphi 0, %s18
      %s22 = sphi 0, %s19
      %s23 = sphi 0, %s20
      %s24 = sphi 0, %s21
      %s40 = sphi 0, %s42
      %s43 = sphi 0, %s40
      %s44 = sphi 0, %s43
      %s60 = sphi 0, %s44
      %s72 = sphi 0, %s74
      %s75 = sphi 0, %s72
      %s76 = sphi 0, %s75
      %s92 = sphi 0, %s76
      %s104 = sphi 0, %s106
      %s107 = sphi 0, %s104
      %s108 = sphi 0, %s107
      %s124 = sphi 0, %s108
      %s132 = sphi 0, %s134
      %s135 = sphi 0, %s132
      %s136 = sphi 0, %s135
      %s152 = sphi 0, %s136
    $region4: #{stage0_forward.11} parent=1 // loop_header_branch
      %12 = sbr.rel (%p10) target = $region8
    $region5: #{stage0_forward.11} parent=1 // loop_body
      %s14 = ssub.s32 %s9, 1
      %s15 = ssub.s32 %s9, 2
      %s25 = sadd.s32 1, %s18
      %p26 = scmp.ge.s32.totalorder %s25, 1
      %s27 = scalar_select %p26, 0, %s25
      %s28 = sadd.s32 1, %s17
      %s29 = scalar_select %p26, %s28, %s17
      %p30 = scmp.ge.s32.totalorder %s29, 1
      %s31 = scalar_select %p30, 0, %s29
      %s32 = sadd.s32 1, %s16
      %s33 = scalar_select %p30, %s32, %s16
      %p34 = scmp.ge.s32.totalorder %s33, 2
      %s35 = scalar_select %p34, 0, %s33
      %s36 = ssub.s32 %s16, %s35
      %s37 = ssub.s32 %s17, %s31
      %s38 = sor.u32 %s36, %s37
      %p39 = scmp.eq.s32.totalorder %s38, 0
      %s41 = sadd.s32 %s40, 1
      %s42 = scalar_select %p39, %s40, %s41
      %p45 = pneg %p39
      %p46 = scmp.eq.s32.totalorder %s9, 1
      %p47 = por %p45, %p46
      %p48 = scmp.ne.s32.totalorder %s40, %s43
      %p49 = scmp.eq.s32.totalorder %s9, 0
      %p50 = por %p48, %p49
      %p51 = scmp.ne.s32.totalorder %s40, %s43
      %p52 = scmp.eq.s32.totalorder %s14, 1
      %p53 = por %p51, %p52
      %p54 = scmp.ne.s32.totalorder %s43, %s44
      %p55 = scmp.eq.s32.totalorder %s14, 0
      %p56 = por %p54, %p55
      %p57 = scmp.ne.s32.totalorder %s43, %s44
      %p58 = scmp.eq.s32.totalorder %s15, 1
      %p59 = por %p57, %p58
      %p61 = scmp.ne.s32.totalorder %s44, %s60
      %p62 = scmp.eq.s32.totalorder %s15, 0
      %p63 = por %p61, %p62
      %s64 = sadd.s32 %s16, %s18
      %s65 = sadd.s32 %s17, 1
      %s66 = sadd.s32 %s35, %s27
      %s67 = sadd.s32 %s31, 1
      %s68 = ssub.s32 %s64, %s66
      %s69 = ssub.s32 %s65, %s67
      %s70 = sor.u32 %s68, %s69
      %p71 = scmp.eq.s32.totalorder %s70, 0
      %s73 = sadd.s32 %s72, 1
      %s74 = scalar_select %p71, %s72, %s73
      %p77 = pneg %p71
      %p78 = scmp.eq.s32.totalorder %s9, 1
      %p79 = por %p77, %p78
      %p80 = scmp.ne.s32.totalorder %s72, %s75
      %p81 = scmp.eq.s32.totalorder %s9, 0
      %p82 = por %p80, %p81
      %p83 = scmp.ne.s32.totalorder %s72, %s75
      %p84 = scmp.eq.s32.totalorder %s14, 1
      %p85 = por %p83, %p84
      %p86 = scmp.ne.s32.totalorder %s75, %s76
      %p87 = scmp.eq.s32.totalorder %s14, 0
      %p88 = por %p86, %p87
      %p89 = scmp.ne.s32.totalorder %s75, %s76
      %p90 = scmp.eq.s32.totalorder %s15, 1
      %p91 = por %p89, %p90
      %p93 = scmp.ne.s32.totalorder %s76, %s92
      %p94 = scmp.eq.s32.totalorder %s15, 0
      %p95 = por %p93, %p94
      %s96 = sadd.s32 %s16, %s18
      %s97 = sadd.s32 %s17, 2
      %s98 = sadd.s32 %s35, %s27
      %s99 = sadd.s32 %s31, 2
      %s100 = ssub.s32 %s96, %s98
      %s101 = ssub.s32 %s97, %s99
      %s102 = sor.u32 %s100, %s101
      %p103 = scmp.eq.s32.totalorder %s102, 0
      %s105 = sadd.s32 %s104, 1
      %s106 = scalar_select %p103, %s104, %s105
      %p109 = pneg %p103
      %p110 = scmp.eq.s32.totalorder %s9, 1
      %p111 = por %p109, %p110
      %p112 = scmp.ne.s32.totalorder %s104, %s107
      %p113 = scmp.eq.s32.totalorder %s9, 0
      %p114 = por %p112, %p113
      %p115 = scmp.ne.s32.totalorder %s104, %s107
      %p116 = scmp.eq.s32.totalorder %s14, 1
      %p117 = por %p115, %p116
      %p118 = scmp.ne.s32.totalorder %s107, %s108
      %p119 = scmp.eq.s32.totalorder %s14, 0
      %p120 = por %p118, %p119
      %p121 = scmp.ne.s32.totalorder %s107, %s108
      %p122 = scmp.eq.s32.totalorder %s15, 1
      %p123 = por %p121, %p122
      %p125 = scmp.ne.s32.totalorder %s108, %s124
      %p126 = scmp.eq.s32.totalorder %s15, 0
      %p127 = por %p125, %p126
      %s128 = ssub.s32 %s16, %s35
      %s129 = ssub.s32 %s17, %s31
      %s130 = sor.u32 %s128, %s129
      %p131 = scmp.eq.s32.totalorder %s130, 0
      %s133 = sadd.s32 %s132, 1
      %s134 = scalar_select %p131, %s132, %s133
      %p137 = pneg %p131
      %p138 = scmp.eq.s32.totalorder %s9, 1
      %p139 = por %p137, %p138
      %p140 = scmp.ne.s32.totalorder %s132, %s135
      %p141 = scmp.eq.s32.totalorder %s9, 0
      %p142 = por %p140, %p141
      %p143 = scmp.ne.s32.totalorder %s132, %s135
      %p144 = scmp.eq.s32.totalorder %s14, 1
      %p145 = por %p143, %p144
      %p146 = scmp.ne.s32.totalorder %s135, %s136
      %p147 = scmp.eq.s32.totalorder %s14, 0
      %p148 = por %p146, %p147
      %p149 = scmp.ne.s32.totalorder %s135, %s136
      %p150 = scmp.eq.s32.totalorder %s15, 1
      %p151 = por %p149, %p150
      %p153 = scmp.ne.s32.totalorder %s136, %s152
      %p154 = scmp.eq.s32.totalorder %s15, 0
      %p155 = por %p153, %p154
      %p156 = scmp.le.s32.totalorder 1, %s9
      %p157 = scmp.lt.s32.totalorder %s9, 3
      %p158 = pnand %p156, %p157
      %p159 = pneg %p158
      // Predicated region
      $region9: #{stage0_forward.11} parent=5 // pred_check
        _
      $region10: #{stage0_forward.11} parent=5 // pred_check_branch
        %161 = sbr.rel (%p158) target = $region12
      $region11: #{stage0_forward.11} parent=5 // pred_region
        %s162 = ssub.s32 %s9, 1
      $region12: #{stage0_forward.11} parent=5 // pred_fallthru
        _
      %p163 = scmp.lt.s32.totalorder %s9, 2
      // Predicated region
      $region13: #{stage0_forward.11} parent=5 // pred_check
        %p164 = pneg %p163
      $region14: #{stage0_forward.11} parent=5 // pred_check_branch
        %166 = sbr.rel (%p164) target = $region16
      $region15: #{stage0_forward.11} parent=5 // pred_region
        // Predicated region
        $region17: #{stage0_forward.11} parent=15 // pred_check
          %p167 = pneg %p50
        $region18: #{stage0_forward.11} parent=15 // pred_check_branch
          %169 = sbr.rel (%p167) target = $region20
        $region19: #{stage0_forward.11} parent=15 // pred_region
          %s170 = sand.u32 %s40, 1
          %s171 = sand.u32 %s40, 1
          %s172 = smul.addr %s171, 8
          %s173 = scalar_lea.vmem [#allocation5], %s172
          %s174 = smul.u32 2, %s16
          %s175 = smul.addr %s174, 3
          %s176 = sadd.s32 %s17, %s175
          %s177 = smul.addr %s176, 4
          %s178 = scalar_lea.vmem %s0, %s177
          // Predicated region
          $region21: #{stage0_forward.11} parent=19 // pred_check
            _
          $region22: #{stage0_forward.11} parent=19 // pred_check_branch
            %180 = sbr.rel (0) target = $region24
          $region23: #{stage0_forward.11} parent=19 // pred_region
            // Predicated region
            $region25: #{stage0_forward.11} parent=23 // pred_check
              _
            $region26: #{stage0_forward.11} parent=23 // pred_check_branch
              %182 = sbr.rel target = $region28
            $region27: #{stage0_forward.11} parent=23 // pred_region
              // Predicated region
              $region40: #{stage0_forward.11} parent=27 // pred_check
                _
              $region41: #{stage0_forward.11} parent=27 // pred_check_branch
                %199 = sbr.rel (0) target = $region43
              $region42: #{stage0_forward.11} parent=27 // pred_region
                loop: start=0, step=1, limit=1
                $region44: #{stage0_forward.11} parent=42 // loop_pre_header
                  _
                $region45: #{stage0_forward.11} parent=42 // loop_header
                  %s201 = sphi 0, %s205
                  %p202 = scmp.ge.s32.totalorder %s201, 1
                  %s206 = sphi %s178, %s178
                  %s207 = sphi %s173, %s173
                $region46: #{stage0_forward.11} parent=42 // loop_header_branch
                  %204 = sbr.rel (%p202) target = $region50
                $region47: #{stage0_forward.11} parent=42 // loop_body
                  _
                $region48: #{stage0_forward.11} parent=42 // loop_footer
                  %s205 = sadd.s32 1, %s201
                $region49: #{stage0_forward.11} parent=42 // loop_footer_branch
                  %200 = sbr.rel target = $region45
                $region50: #{stage0_forward.11} parent=42 // loop_exit
                  _
                loop: start=0, step=1, limit=1
                $region51: #{stage0_forward.11} parent=42 // loop_pre_header
                  _
                $region52: #{stage0_forward.11} parent=42 // loop_header
                  %s210 = sphi 0, %s214
                  %p211 = scmp.ge.s32.totalorder %s210, 1
                  %s215 = sphi %s178, %s178
                  %s216 = sphi %s173, %s173
                $region53: #{stage0_forward.11} parent=42 // loop_header_branch
                  %213 = sbr.rel (%p211) target = $region57
                $region54: #{stage0_forward.11} parent=42 // loop_body
                  %v217 = vld [vmem:[%s215] sm:$0xf]
                  %218 = vst [vmem:[%s216] sm:$0xf] %v217
                  %v219 = vld [vmem:[%s215 + $0xc] sm:$0xf]
                  %220 = vst [vmem:[%s216 + $0x4] sm:$0xf] %v219
                $region55: #{stage0_forward.11} parent=42 // loop_footer
                  %s214 = sadd.s32 1, %s210
                $region56: #{stage0_forward.11} parent=42 // loop_footer_branch
                  %209 = sbr.rel target = $region52
                $region57: #{stage0_forward.11} parent=42 // loop_exit
                  _
              $region43: #{stage0_forward.11} parent=27 // pred_fallthru
                _
            $region28: #{stage0_forward.11} parent=23 // pred_fallthru
              _
            // Predicated region
            $region29: #{stage0_forward.11} parent=23 // pred_check
              _
            $region30: #{stage0_forward.11} parent=23 // pred_check_branch
              %184 = sbr.rel (0) target = $region32
            $region31: #{stage0_forward.11} parent=23 // pred_region
              loop: start=0, step=1, limit=1
              $region33: #{stage0_forward.11} parent=31 // loop_pre_header
                _
              $region34: #{stage0_forward.11} parent=31 // loop_header
                %s187 = sphi 0, %s191
                %p188 = scmp.ge.s32.totalorder %s187, 1
                %s192 = sphi %s178, %s178
                %s193 = sphi %s173, %s173
              $region35: #{stage0_forward.11} parent=31 // loop_header_branch
                %190 = sbr.rel (%p188) target = $region39
              $region36: #{stage0_forward.11} parent=31 // loop_body
                %v194 = vld [vmem:[%s192] sm:$0xf]
                %195 = vst [vmem:[%s193] sm:$0xf] %v194
                %v196 = vld [vmem:[%s192 + $0xc] sm:$0xf]
                %197 = vst [vmem:[%s193 + $0x4] sm:$0xf] %v196
              $region37: #{stage0_forward.11} parent=31 // loop_footer
                %s191 = sadd.s32 1, %s187
              $region38: #{stage0_forward.11} parent=31 // loop_footer_branch
                %186 = sbr.rel target = $region34
              $region39: #{stage0_forward.11} parent=31 // loop_exit
                _
            $region32: #{stage0_forward.11} parent=23 // pred_fallthru
              _
          $region24: #{stage0_forward.11} parent=19 // pred_fallthru
            _
          %221 = vnop
        $region20: #{stage0_forward.11} parent=15 // pred_fallthru
          _
        // Predicated region
        $region58: #{stage0_forward.11} parent=15 // pred_check
          %p222 = pneg %p82
        $region59: #{stage0_forward.11} parent=15 // pred_check_branch
          %224 = sbr.rel (%p222) target = $region61
        $region60: #{stage0_forward.11} parent=15 // pred_region
          %s225 = sand.u32 %s72, 1
          %s226 = sand.u32 %s72, 1
          %s227 = smul.addr %s226, 8
          %s228 = scalar_lea.vmem [#allocation6], %s227
          %s229 = sadd.s32 %s16, %s18
          %s230 = sadd.s32 %s17, 1
          %s231 = smul.u32 2, %s229
          %s232 = smul.addr %s231, 3
          %s233 = sadd.s32 %s230, %s232
          %s234 = smul.addr %s233, 4
          %s235 = scalar_lea.vmem %s1, %s234
          // Predicated region
          $region62: #{stage0_forward.11} parent=60 // pred_check
            _
          $region63: #{stage0_forward.11} parent=60 // pred_check_branch
            %237 = sbr.rel (0) target = $region65
          $region64: #{stage0_forward.11} parent=60 // pred_region
            // Predicated region
            $region66: #{stage0_forward.11} parent=64 // pred_check
              _
            $region67: #{stage0_forward.11} parent=64 // pred_check_branch
              %239 = sbr.rel target = $region69
            $region68: #{stage0_forward.11} parent=64 // pred_region
              // Predicated region
              $region81: #{stage0_forward.11} parent=68 // pred_check
                _
              $region82: #{stage0_forward.11} parent=68 // pred_check_branch
                %256 = sbr.rel (0) target = $region84
              $region83: #{stage0_forward.11} parent=68 // pred_region
                loop: start=0, step=1, limit=1
                $region85: #{stage0_forward.11} parent=83 // loop_pre_header
                  _
                $region86: #{stage0_forward.11} parent=83 // loop_header
                  %s258 = sphi 0, %s262
                  %p259 = scmp.ge.s32.totalorder %s258, 1
                  %s263 = sphi %s235, %s235
                  %s264 = sphi %s228, %s228
                $region87: #{stage0_forward.11} parent=83 // loop_header_branch
                  %261 = sbr.rel (%p259) target = $region91
                $region88: #{stage0_forward.11} parent=83 // loop_body
                  _
                $region89: #{stage0_forward.11} parent=83 // loop_footer
                  %s262 = sadd.s32 1, %s258
                $region90: #{stage0_forward.11} parent=83 // loop_footer_branch
                  %257 = sbr.rel target = $region86
                $region91: #{stage0_forward.11} parent=83 // loop_exit
                  _
                loop: start=0, step=1, limit=1
                $region92: #{stage0_forward.11} parent=83 // loop_pre_header
                  _
                $region93: #{stage0_forward.11} parent=83 // loop_header
                  %s267 = sphi 0, %s271
                  %p268 = scmp.ge.s32.totalorder %s267, 1
                  %s272 = sphi %s235, %s235
                  %s273 = sphi %s228, %s228
                $region94: #{stage0_forward.11} parent=83 // loop_header_branch
                  %270 = sbr.rel (%p268) target = $region98
                $region95: #{stage0_forward.11} parent=83 // loop_body
                  %v274 = vld [vmem:[%s272] sm:$0xf]
                  %275 = vst [vmem:[%s273] sm:$0xf] %v274
                  %v276 = vld [vmem:[%s272 + $0xc] sm:$0xf]
                  %277 = vst [vmem:[%s273 + $0x4] sm:$0xf] %v276
                $region96: #{stage0_forward.11} parent=83 // loop_footer
                  %s271 = sadd.s32 1, %s267
                $region97: #{stage0_forward.11} parent=83 // loop_footer_branch
                  %266 = sbr.rel target = $region93
                $region98: #{stage0_forward.11} parent=83 // loop_exit
                  _
              $region84: #{stage0_forward.11} parent=68 // pred_fallthru
                _
            $region69: #{stage0_forward.11} parent=64 // pred_fallthru
              _
            // Predicated region
            $region70: #{stage0_forward.11} parent=64 // pred_check
              _
            $region71: #{stage0_forward.11} parent=64 // pred_check_branch
              %241 = sbr.rel (0) target = $region73
            $region72: #{stage0_forward.11} parent=64 // pred_region
              loop: start=0, step=1, limit=1
              $region74: #{stage0_forward.11} parent=72 // loop_pre_header
                _
              $region75: #{stage0_forward.11} parent=72 // loop_header
                %s244 = sphi 0, %s248
                %p245 = scmp.ge.s32.totalorder %s244, 1
                %s249 = sphi %s235, %s235
                %s250 = sphi %s228, %s228
              $region76: #{stage0_forward.11} parent=72 // loop_header_branch
                %247 = sbr.rel (%p245) target = $region80
              $region77: #{stage0_forward.11} parent=72 // loop_body
                %v251 = vld [vmem:[%s249] sm:$0xf]
                %252 = vst [vmem:[%s250] sm:$0xf] %v251
                %v253 = vld [vmem:[%s249 + $0xc] sm:$0xf]
                %254 = vst [vmem:[%s250 + $0x4] sm:$0xf] %v253
              $region78: #{stage0_forward.11} parent=72 // loop_footer
                %s248 = sadd.s32 1, %s244
              $region79: #{stage0_forward.11} parent=72 // loop_footer_branch
                %243 = sbr.rel target = $region75
              $region80: #{stage0_forward.11} parent=72 // loop_exit
                _
            $region73: #{stage0_forward.11} parent=64 // pred_fallthru
              _
          $region65: #{stage0_forward.11} parent=60 // pred_fallthru
            _
          %278 = vnop
        $region61: #{stage0_forward.11} parent=15 // pred_fallthru
          _
        // Predicated region
        $region99: #{stage0_forward.11} parent=15 // pred_check
          %p279 = pneg %p114
        $region100: #{stage0_forward.11} parent=15 // pred_check_branch
          %281 = sbr.rel (%p279) target = $region102
        $region101: #{stage0_forward.11} parent=15 // pred_region
          %s282 = sand.u32 %s104, 1
          %s283 = sand.u32 %s104, 1
          %s284 = smul.addr %s283, 8
          %s285 = scalar_lea.vmem [#allocation7], %s284
          %s286 = sadd.s32 %s16, %s18
          %s287 = sadd.s32 %s17, 2
          %s288 = smul.u32 2, %s286
          %s289 = smul.addr %s288, 3
          %s290 = sadd.s32 %s287, %s289
          %s291 = smul.addr %s290, 4
          %s292 = scalar_lea.vmem %s2, %s291
          // Predicated region
          $region103: #{stage0_forward.11} parent=101 // pred_check
            _
          $region104: #{stage0_forward.11} parent=101 // pred_check_branch
            %294 = sbr.rel (0) target = $region106
          $region105: #{stage0_forward.11} parent=101 // pred_region
            // Predicated region
            $region107: #{stage0_forward.11} parent=105 // pred_check
              _
            $region108: #{stage0_forward.11} parent=105 // pred_check_branch
              %296 = sbr.rel target = $region110
            $region109: #{stage0_forward.11} parent=105 // pred_region
              // Predicated region
              $region122: #{stage0_forward.11} parent=109 // pred_check
                _
              $region123: #{stage0_forward.11} parent=109 // pred_check_branch
                %313 = sbr.rel (0) target = $region125
              $region124: #{stage0_forward.11} parent=109 // pred_region
                loop: start=0, step=1, limit=1
                $region126: #{stage0_forward.11} parent=124 // loop_pre_header
                  _
                $region127: #{stage0_forward.11} parent=124 // loop_header
                  %s315 = sphi 0, %s319
                  %p316 = scmp.ge.s32.totalorder %s315, 1
                  %s320 = sphi %s292, %s292
                  %s321 = sphi %s285, %s285
                $region128: #{stage0_forward.11} parent=124 // loop_header_branch
                  %318 = sbr.rel (%p316) target = $region132
                $region129: #{stage0_forward.11} parent=124 // loop_body
                  _
                $region130: #{stage0_forward.11} parent=124 // loop_footer
                  %s319 = sadd.s32 1, %s315
                $region131: #{stage0_forward.11} parent=124 // loop_footer_branch
                  %314 = sbr.rel target = $region127
                $region132: #{stage0_forward.11} parent=124 // loop_exit
                  _
                loop: start=0, step=1, limit=1
                $region133: #{stage0_forward.11} parent=124 // loop_pre_header
                  _
                $region134: #{stage0_forward.11} parent=124 // loop_header
                  %s324 = sphi 0, %s328
                  %p325 = scmp.ge.s32.totalorder %s324, 1
                  %s329 = sphi %s292, %s292
                  %s330 = sphi %s285, %s285
                $region135: #{stage0_forward.11} parent=124 // loop_header_branch
                  %327 = sbr.rel (%p325) target = $region139
                $region136: #{stage0_forward.11} parent=124 // loop_body
                  %v331 = vld [vmem:[%s329] sm:$0xf]
                  %332 = vst [vmem:[%s330] sm:$0xf] %v331
                  %v333 = vld [vmem:[%s329 + $0xc] sm:$0xf]
                  %334 = vst [vmem:[%s330 + $0x4] sm:$0xf] %v333
                $region137: #{stage0_forward.11} parent=124 // loop_footer
                  %s328 = sadd.s32 1, %s324
                $region138: #{stage0_forward.11} parent=124 // loop_footer_branch
                  %323 = sbr.rel target = $region134
                $region139: #{stage0_forward.11} parent=124 // loop_exit
                  _
              $region125: #{stage0_forward.11} parent=109 // pred_fallthru
                _
            $region110: #{stage0_forward.11} parent=105 // pred_fallthru
              _
            // Predicated region
            $region111: #{stage0_forward.11} parent=105 // pred_check
              _
            $region112: #{stage0_forward.11} parent=105 // pred_check_branch
              %298 = sbr.rel (0) target = $region114
            $region113: #{stage0_forward.11} parent=105 // pred_region
              loop: start=0, step=1, limit=1
              $region115: #{stage0_forward.11} parent=113 // loop_pre_header
                _
              $region116: #{stage0_forward.11} parent=113 // loop_header
                %s301 = sphi 0, %s305
                %p302 = scmp.ge.s32.totalorder %s301, 1
                %s306 = sphi %s292, %s292
                %s307 = sphi %s285, %s285
              $region117: #{stage0_forward.11} parent=113 // loop_header_branch
                %304 = sbr.rel (%p302) target = $region121
              $region118: #{stage0_forward.11} parent=113 // loop_body
                %v308 = vld [vmem:[%s306] sm:$0xf]
                %309 = vst [vmem:[%s307] sm:$0xf] %v308
                %v310 = vld [vmem:[%s306 + $0xc] sm:$0xf]
                %311 = vst [vmem:[%s307 + $0x4] sm:$0xf] %v310
              $region119: #{stage0_forward.11} parent=113 // loop_footer
                %s305 = sadd.s32 1, %s301
              $region120: #{stage0_forward.11} parent=113 // loop_footer_branch
                %300 = sbr.rel target = $region116
              $region121: #{stage0_forward.11} parent=113 // loop_exit
                _
            $region114: #{stage0_forward.11} parent=105 // pred_fallthru
              _
          $region106: #{stage0_forward.11} parent=101 // pred_fallthru
            _
          %335 = vnop
        $region102: #{stage0_forward.11} parent=15 // pred_fallthru
          _
      $region16: #{stage0_forward.11} parent=5 // pred_fallthru
        _
      %p336 = scmp.le.s32.totalorder 1, %s9
      %p337 = scmp.lt.s32.totalorder %s9, 3
      %p338 = pnand %p336, %p337
      %p339 = pneg %p338
      // Predicated region
      $region140: #{stage0_forward.11} parent=5 // pred_check
        _
      $region141: #{stage0_forward.11} parent=5 // pred_check_branch
        %341 = sbr.rel (%p338) target = $region143
      $region142: #{stage0_forward.11} parent=5 // pred_region
        %s342 = ssub.s32 %s9, 1
        %s343 = sand.u32 %s43, 1
        %s344 = sand.u32 %s43, 1
        %s345 = smul.addr %s344, 8
        %s346 = scalar_lea.vmem [#allocation5], %s345
        // Predicated region
        $region144: #{stage0_forward.11} parent=142 // pred_check
          %p347 = pneg %p56
        $region145: #{stage0_forward.11} parent=142 // pred_check_branch
          %349 = sbr.rel (%p347) target = $region147
        $region146: #{stage0_forward.11} parent=142 // pred_region
          _
        $region147: #{stage0_forward.11} parent=142 // pred_fallthru
          _
        %s350 = sand.u32 %s75, 1
        %s351 = sand.u32 %s75, 1
        %s352 = smul.addr %s351, 8
        %s353 = scalar_lea.vmem [#allocation6], %s352
        // Predicated region
        $region148: #{stage0_forward.11} parent=142 // pred_check
          %p354 = pneg %p88
        $region149: #{stage0_forward.11} parent=142 // pred_check_branch
          %356 = sbr.rel (%p354) target = $region151
        $region150: #{stage0_forward.11} parent=142 // pred_region
          _
        $region151: #{stage0_forward.11} parent=142 // pred_fallthru
          _
        %s357 = sand.u32 %s107, 1
        %s358 = sand.u32 %s107, 1
        %s359 = smul.addr %s358, 8
        %s360 = scalar_lea.vmem [#allocation7], %s359
        // Predicated region
        $region152: #{stage0_forward.11} parent=142 // pred_check
          %p361 = pneg %p120
        $region153: #{stage0_forward.11} parent=142 // pred_check_branch
          %363 = sbr.rel (%p361) target = $region155
        $region154: #{stage0_forward.11} parent=142 // pred_region
          _
        $region155: #{stage0_forward.11} parent=142 // pred_fallthru
          _
        %s364 = sand.u32 %s43, 1
        %s365 = sand.u32 %s43, 1
        %s366 = smul.addr %s365, 8
        %s367 = scalar_lea.vmem [#allocation5], %s366
        %p368 = pneg %p56
        %p369 = pneg %p53
        %s370 = sand.u32 %s75, 1
        %s371 = sand.u32 %s75, 1
        %s372 = smul.addr %s371, 8
        %s373 = scalar_lea.vmem [#allocation6], %s372
        %p374 = pneg %p88
        %p375 = pneg %p85
        %s376 = sand.u32 %s107, 1
        %s377 = sand.u32 %s107, 1
        %s378 = smul.addr %s377, 8
        %s379 = scalar_lea.vmem [#allocation7], %s378
        %p380 = pneg %p120
        %p381 = pneg %p117
        %p382 = pneg %p148
        %p383 = pneg %p145
        %s384 = smul.u32 2, %s19
        %p385 = scmp.lt.s32.totalorder %s384, 3
        %s386 = scalar_select %p385, %s384, 3
        %p387 = scmp.lt.s32.totalorder %s20, 0
        %s388 = scalar_select %p387, %s20, 0
        %s389 = sadd.s32 %s388, %s386
        %s390 = smul.addr %s389, 4
        %s391 = scalar_lea.vmem %s3, %s390
        %s392 = smul.u32 2, %s19
        %s393 = sadd.s32 %s19, %s21
        %s394 = sadd.s32 %s20, 1
        %s395 = smul.u32 2, %s393
        %s396 = sadd.s32 %s19, %s21
        %s397 = sadd.s32 %s20, 2
        %s398 = smul.u32 2, %s396
        %s399 = smul.u32 2, %s19
        %p400 = scmp.lt.s32.totalorder %s399, 3
        %s401 = scalar_select %p400, %s399, 3
        %p402 = scmp.lt.s32.totalorder %s20, 0
        %s403 = scalar_select %p402, %s20, 0
        %s404 = sadd.s32 %s403, %s401
        %s405 = smul.addr %s404, 4
        %s406 = scalar_lea.vmem %s3, %s405
        %s407 = smul.u32 2, %s19
        %p409 = scmp.eq.s32.totalorder %s21, 0
        // Predicated region
        $region156: #{stage0_forward.11} parent=142 // pred_check
          %p410 = pneg %p409
        $region157: #{stage0_forward.11} parent=142 // pred_check_branch
          %412 = sbr.rel (%p410) target = $region159
        $region158: #{stage0_forward.11} parent=142 // pred_region
          %vm413 = vcmask 7168
          %414 = vst.msk [vmem:[#allocation2] sm:$0xff] %vm413, -inf
          %415 = vst.msk [vmem:[#allocation2 + $0x8] sm:$0xff] %vm413, -inf
          %416 = vst.msk [vmem:[#allocation2 + $0x10] sm:$0xff] %vm413, -inf
          %417 = vst.msk [vmem:[#allocation2 + $0x18] sm:$0xff] %vm413, -inf
          %418 = vst.msk [vmem:[#allocation3] sm:$0xff] %vm413, 0.0
          %419 = vst.msk [vmem:[#allocation3 + $0x8] sm:$0xff] %vm413, 0.0
          %420 = vst.msk [vmem:[#allocation3 + $0x10] sm:$0xff] %vm413, 0.0
          %421 = vst.msk [vmem:[#allocation3 + $0x18] sm:$0xff] %vm413, 0.0
          %422 = vst [vmem:[#allocation4] sm:$0xff] 0.0
          %423 = vst [vmem:[#allocation4 + $0x8] sm:$0xff] 0.0
        $region159: #{stage0_forward.11} parent=142 // pred_fallthru
          _
        %v424 = vld [vmem:[%s353] sm:$0xf]
        %v425 = vld [vmem:[%s353 + $0x4] sm:$0xf]
        %v426 = vld [vmem:[%s360] sm:$0xf]
        %v427 = vld [vmem:[%s360 + $0x4] sm:$0xf]
        %v428 = vld [vmem:[%s346] sm:$0xf]
        %v429 = vld [vmem:[%s346 + $0x4] sm:$0xf]
        %v432 = vunpack.c.l.b16 %v428
        %v433 = vunpack.c.l.b16 %v429
        %v434 = vpack.c.b16 %v433, %v432
        %v437 = vunpack.c.l.b16 %v424
        %v438 = vunpack.c.l.b16 %v425
        %v439 = vpack.c.b16 %v438, %v437
        %vm440 = vcmask 523264
        %v442 = vsel %vm440, %v434, 0
        %v445 = vsel %vm440, %v439, 0
        %447 = vmatprep.subr.bf16.mxu0 0
        %448 = vmatpush1.bf16.xpose.msra.mxu0 %v445
        %449 = vmatprep.subr.bf16.mxu0 0
        %450 = vmatpush1.bf16.xpose.msra.mxu0 0
        %451 = vmatprep.subr.bf16.mxu0 0
        %452 = vmatpush1.bf16.xpose.msra.mxu0 0
        %453 = vmatprep.subr.bf16.mxu0 0
        %454 = vmatpush1.bf16.xpose.msra.mxu0 0
        %455 = vmatprep.subr.bf16.mxu0 0
        %456 = vmatpush1.bf16.xpose.msra.mxu0 0
        %457 = vmatprep.subr.bf16.mxu0 0
        %458 = vmatpush1.bf16.xpose.msra.mxu0 0
        %459 = vmatprep.subr.bf16.mxu0 0
        %460 = vmatpush1.bf16.xpose.msra.mxu0 0
        %461 = vmatprep.subr.bf16.mxu0 0
        %462 = vmatpush1.bf16.xpose.msra.mxu0 0
        %463 = vmatprep.subr.bf16.mxu0 0
        %464 = vmatpush1.bf16.xpose.msra.mxu0 0
        %465 = vmatprep.subr.bf16.mxu0 0
        %466 = vmatpush1.bf16.xpose.msra.mxu0 0
        %467 = vmatprep.subr.bf16.mxu0 0
        %468 = vmatpush1.bf16.xpose.msra.mxu0 0
        %469 = vmatprep.subr.bf16.mxu0 0
        %470 = vmatpush1.bf16.xpose.msra.mxu0 0
        %471 = vmatprep.subr.bf16.mxu0 0
        %472 = vmatpush1.bf16.xpose.msra.mxu0 0
        %473 = vmatprep.subr.bf16.mxu0 0
        %474 = vmatpush1.bf16.xpose.msra.mxu0 0
        %475 = vmatprep.subr.bf16.mxu0 0
        %476 = vmatpush1.bf16.xpose.msra.mxu0 0
        %477 = vmatprep.subr.bf16.mxu0 0
        %478 = vmatpush1.bf16.xpose.msra.mxu0 0
        %479 = vmatprep.mubr.bf16.mxu0 0
        %480 = vmatmul.mubr.bf16.gmra.mrb[0].mxu0 %v442
        %v481 = vpop.f32.mrb[0].mxu0
        %v482 = vadd.f32 0.0, %v481
        %v483 = vpop.f32.mrb[0].mxu0
        %v484 = vpop.f32.mrb[0].mxu0
        %v485 = vadd.f32 0.0, %v484
        %v486 = vpop.f32.mrb[0].mxu0
        %487 = vdwg.mxu0
        %v488 = vld [vmem:[#allocation2] sm:$0xff]
        %v489 = vld [vmem:[#allocation2 + $0x8] sm:$0xff]
        %vm490 = vcmask 130048
        %v491 = vsel %vm490, %v482, -inf
        %492 = vmax.xlane.f32.xlu0 %v491
        %v493 = vpop.xlane.xlu0 %492
        %v494 = vsel %vm490, %v485, -inf
        %495 = vmax.xlane.f32.xlu0 %v494
        %v496 = vpop.xlane.xlu0 %495
        %v497 = vmax.f32 %v488, %v493
        %v498 = vmax.f32 %v489, %v496
        %v499 = vsub.f32 %v488, %v497
        %v500 = vsub.f32 %v489, %v498
        %v501 = vmul.f32 %v499, 1.442695
        %v502 = vpow.pop %v501
        %v503 = vmul.f32 %v500, 1.442695
        %v504 = vpow.pop %v503
        %506 = vset.pattern.permute.xlu0 0
        %507 = vperm.xlu0 %506, %v497
        %v508 = vpop.permute.xlu0 %507
        %511 = vset.pattern.permute.xlu0 0
        %512 = vperm.xlu0 %511, %v498
        %v513 = vpop.permute.xlu0 %512
        %v515 = vsub.f32 %v482, %v508
        %v516 = vsub.f32 %v485, %v513
        %v517 = vmul.f32 %v515, 1.442695
        %v518 = vpow.pop %v517
        %v519 = vmul.f32 %v516, 1.442695
        %v520 = vpow.pop %v519
        %v521 = vld [vmem:[#allocation3] sm:$0xff]
        %v522 = vld [vmem:[#allocation3 + $0x8] sm:$0xff]
        %v523 = vmul.f32 %v502, %v521
        %v524 = vmul.f32 %v504, %v522
        %v525 = vsel %vm490, %v518, 0.0
        %526 = vadd.xlane.f32.xlu0 %v525
        %v527 = vpop.xlane.xlu0 %526
        %v528 = vsel %vm490, %v520, 0.0
        %529 = vadd.xlane.f32.xlu0 %v528
        %v530 = vpop.xlane.xlu0 %529
        %v531 = vadd.f32 %v523, %v527
        %v532 = vadd.f32 %v524, %v530
        %vm533 = vcmask 7168
        %534 = vst.msk [vmem:[#allocation3] sm:$0xff] %vm533, %v531
        %535 = vst.msk [vmem:[#allocation3 + $0x8] sm:$0xff] %vm533, %v532
        %v536 = vld [vmem:[#allocation4] sm:$0xff]
        %v537 = vld [vmem:[#allocation4 + $0x8] sm:$0xff]
        %539 = vset.pattern.permute.xlu0 0
        %540 = vperm.xlu0 %539, %v502
        %v541 = vpop.permute.xlu0 %540
        %544 = vset.pattern.permute.xlu0 0
        %545 = vperm.xlu0 %544, %v504
        %v546 = vpop.permute.xlu0 %545
        %v548 = vmul.f32 %v541, %v536
        %v549 = vmul.f32 %v546, %v537
        %v550 = vpack.c.bf16 %v520, %v518
        %v553 = vunpack.c.l.b16 %v426
        %v554 = vunpack.c.l.b16 %v427
        %v555 = vpack.c.b16 %v554, %v553
        %v558 = vsel %vm490, %v550, 0
        %560 = vmatprep.subr.bf16.mxu0 0
        %561 = vmatpush1.bf16.msra.mxu0 %v555
        %562 = vmatprep.subr.bf16.mxu0 0
        %563 = vmatpush1.bf16.msra.mxu0 0
        %564 = vmatprep.subr.bf16.mxu0 0
        %565 = vmatpush1.bf16.msra.mxu0 0
        %566 = vmatprep.subr.bf16.mxu0 0
        %567 = vmatpush1.bf16.msra.mxu0 0
        %568 = vmatprep.subr.bf16.mxu0 0
        %569 = vmatpush1.bf16.msra.mxu0 0
        %570 = vmatprep.subr.bf16.mxu0 0
        %571 = vmatpush1.bf16.msra.mxu0 0
        %572 = vmatprep.subr.bf16.mxu0 0
        %573 = vmatpush1.bf16.msra.mxu0 0
        %574 = vmatprep.subr.bf16.mxu0 0
        %575 = vmatpush1.bf16.msra.mxu0 0
        %576 = vmatprep.subr.bf16.mxu0 0
        %577 = vmatpush1.bf16.msra.mxu0 0
        %578 = vmatprep.subr.bf16.mxu0 0
        %579 = vmatpush1.bf16.msra.mxu0 0
        %580 = vmatprep.subr.bf16.mxu0 0
        %581 = vmatpush1.bf16.msra.mxu0 0
        %582 = vmatprep.subr.bf16.mxu0 0
        %583 = vmatpush1.bf16.msra.mxu0 0
        %584 = vmatprep.subr.bf16.mxu0 0
        %585 = vmatpush1.bf16.msra.mxu0 0
        %586 = vmatprep.subr.bf16.mxu0 0
        %587 = vmatpush1.bf16.msra.mxu0 0
        %588 = vmatprep.subr.bf16.mxu0 0
        %589 = vmatpush1.bf16.msra.mxu0 0
        %590 = vmatprep.subr.bf16.mxu0 0
        %591 = vmatpush1.bf16.msra.mxu0 0
        %592 = vmatprep.mubr.bf16.mxu0 0
        %593 = vmatmul.mubr.bf16.gmra.mrb[0].mxu0 %v558
        %v594 = vpop.f32.mrb[0].mxu0
        %v595 = vadd.f32 0.0, %v594
        %v596 = vpop.f32.mrb[0].mxu0
        %v597 = vpop.f32.mrb[0].mxu0
        %v598 = vadd.f32 0.0, %v597
        %v599 = vpop.f32.mrb[0].mxu0
        %600 = vdwg.mxu0
        %v601 = vadd.f32 %v548, %v595
        %v602 = vadd.f32 %v549, %v598
        %603 = vst.msk [vmem:[#allocation4] sm:$0xff] %vm440, %v601
        %604 = vst.msk [vmem:[#allocation4 + $0x8] sm:$0xff] %vm440, %v602
        %605 = vst.msk [vmem:[#allocation2] sm:$0xff] %vm533, %v497
        %606 = vst.msk [vmem:[#allocation2 + $0x8] sm:$0xff] %vm533, %v498
        %v607 = vld [vmem:[%s346] sm:$0xf]
        %v608 = vld [vmem:[%s346 + $0x4] sm:$0xf]
        %v611 = vunpack.c.l.b16 %v607
        %v612 = vunpack.c.l.b16 %v608
        %v613 = vpack.c.b16 %v612, %v611
        %614 = vrot.lane.b32.xlu0 %v613, 64
        %v615 = vpop.permute.xlu0 %614
        %616 = vrot.lane.b32.xlu0 %v439, 64
        %v617 = vpop.permute.xlu0 %616
        %v619 = vsel %vm440, %v615, 0
        %v622 = vsel %vm440, %v617, 0
        %624 = vmatprep.subr.bf16.mxu0 0
        %625 = vmatpush1.bf16.xpose.msra.mxu0 %v622
        %626 = vmatprep.subr.bf16.mxu0 0
        %627 = vmatpush1.bf16.xpose.msra.mxu0 0
        %628 = vmatprep.subr.bf16.mxu0 0
        %629 = vmatpush1.bf16.xpose.msra.mxu0 0
        %630 = vmatprep.subr.bf16.mxu0 0
        %631 = vmatpush1.bf16.xpose.msra.mxu0 0
        %632 = vmatprep.subr.bf16.mxu0 0
        %633 = vmatpush1.bf16.xpose.msra.mxu0 0
        %634 = vmatprep.subr.bf16.mxu0 0
        %635 = vmatpush1.bf16.xpose.msra.mxu0 0
        %636 = vmatprep.subr.bf16.mxu0 0
        %637 = vmatpush1.bf16.xpose.msra.mxu0 0
        %638 = vmatprep.subr.bf16.mxu0 0
        %639 = vmatpush1.bf16.xpose.msra.mxu0 0
        %640 = vmatprep.subr.bf16.mxu0 0
        %641 = vmatpush1.bf16.xpose.msra.mxu0 0
        %642 = vmatprep.subr.bf16.mxu0 0
        %643 = vmatpush1.bf16.xpose.msra.mxu0 0
        %644 = vmatprep.subr.bf16.mxu0 0
        %645 = vmatpush1.bf16.xpose.msra.mxu0 0
        %646 = vmatprep.subr.bf16.mxu0 0
        %647 = vmatpush1.bf16.xpose.msra.mxu0 0
        %648 = vmatprep.subr.bf16.mxu0 0
        %649 = vmatpush1.bf16.xpose.msra.mxu0 0
        %650 = vmatprep.subr.bf16.mxu0 0
        %651 = vmatpush1.bf16.xpose.msra.mxu0 0
        %652 = vmatprep.subr.bf16.mxu0 0
        %653 = vmatpush1.bf16.xpose.msra.mxu0 0
        %654 = vmatprep.subr.bf16.mxu0 0
        %655 = vmatpush1.bf16.xpose.msra.mxu0 0
        %656 = vmatprep.mubr.bf16.mxu0 0
        %657 = vmatmul.mubr.bf16.gmra.mrb[0].mxu0 %v619
        %v658 = vpop.f32.mrb[0].mxu0
        %v659 = vadd.f32 0.0, %v658
        %v660 = vpop.f32.mrb[0].mxu0
        %v661 = vpop.f32.mrb[0].mxu0
        %v662 = vadd.f32 0.0, %v661
        %v663 = vpop.f32.mrb[0].mxu0
        %664 = vdwg.mxu0
        %s665 = scalar_lea.vmem [#allocation2], 16
        %v666 = vld [vmem:[%s665] sm:$0xff]
        %v667 = vld [vmem:[%s665 + $0x8] sm:$0xff]
        %v668 = vsel %vm490, %v659, -inf
        %669 = vmax.xlane.f32.xlu0 %v668
        %v670 = vpop.xlane.xlu0 %669
        %v671 = vsel %vm490, %v662, -inf
        %672 = vmax.xlane.f32.xlu0 %v671
        %v673 = vpop.xlane.xlu0 %672
        %v674 = vmax.f32 %v666, %v670
        %v675 = vmax.f32 %v667, %v673
        %v676 = vsub.f32 %v666, %v674
        %v677 = vsub.f32 %v667, %v675
        %v678 = vmul.f32 %v676, 1.442695
        %v679 = vpow.pop %v678
        %v680 = vmul.f32 %v677, 1.442695
        %v681 = vpow.pop %v680
        %683 = vset.pattern.permute.xlu0 0
        %684 = vperm.xlu0 %683, %v674
        %v685 = vpop.permute.xlu0 %684
        %688 = vset.pattern.permute.xlu0 0
        %689 = vperm.xlu0 %688, %v675
        %v690 = vpop.permute.xlu0 %689
        %v692 = vsub.f32 %v659, %v685
        %v693 = vsub.f32 %v662, %v690
        %v694 = vmul.f32 %v692, 1.442695
        %v695 = vpow.pop %v694
        %v696 = vmul.f32 %v693, 1.442695
        %v697 = vpow.pop %v696
        %s698 = scalar_lea.vmem [#allocation3], 16
        %v699 = vld [vmem:[%s698] sm:$0xff]
        %v700 = vld [vmem:[%s698 + $0x8] sm:$0xff]
        %v701 = vmul.f32 %v679, %v699
        %v702 = vmul.f32 %v681, %v700
        %v703 = vsel %vm490, %v695, 0.0
        %704 = vadd.xlane.f32.xlu0 %v703
        %v705 = vpop.xlane.xlu0 %704
        %v706 = vsel %vm490, %v697, 0.0
        %707 = vadd.xlane.f32.xlu0 %v706
        %v708 = vpop.xlane.xlu0 %707
        %v709 = vadd.f32 %v701, %v705
        %v710 = vadd.f32 %v702, %v708
        %711 = vst.msk [vmem:[%s698] sm:$0xff] %vm533, %v709
        %712 = vst.msk [vmem:[%s698 + $0x8] sm:$0xff] %vm533, %v710
        %v713 = vld [vmem:[#allocation4] sm:$0xff]
        %v714 = vld [vmem:[#allocation4 + $0x8] sm:$0xff]
        %716 = vset.pattern.permute.xlu0 0
        %717 = vperm.xlu0 %716, %v679
        %v718 = vpop.permute.xlu0 %717
        %721 = vset.pattern.permute.xlu0 0
        %722 = vperm.xlu0 %721, %v681
        %v723 = vpop.permute.xlu0 %722
        %v725 = vmul.f32 %v718, %v713
        %v726 = vmul.f32 %v723, %v714
        %v727 = vpack.c.bf16 %v697, %v695
        %728 = vrot.lane.b32.xlu0 %v555, 64
        %v729 = vpop.permute.xlu0 %728
        %v732 = vsel %vm490, %v727, 0
        %734 = vmatprep.subr.bf16.mxu0 0
        %735 = vmatpush1.bf16.msra.mxu0 %v729
        %736 = vmatprep.subr.bf16.mxu0 0
        %737 = vmatpush1.bf16.msra.mxu0 0
        %738 = vmatprep.subr.bf16.mxu0 0
        %739 = vmatpush1.bf16.msra.mxu0 0
        %740 = vmatprep.subr.bf16.mxu0 0
        %741 = vmatpush1.bf16.msra.mxu0 0
        %742 = vmatprep.subr.bf16.mxu0 0
        %743 = vmatpush1.bf16.msra.mxu0 0
        %744 = vmatprep.subr.bf16.mxu0 0
        %745 = vmatpush1.bf16.msra.mxu0 0
        %746 = vmatprep.subr.bf16.mxu0 0
        %747 = vmatpush1.bf16.msra.mxu0 0
        %748 = vmatprep.subr.bf16.mxu0 0
        %749 = vmatpush1.bf16.msra.mxu0 0
        %750 = vmatprep.subr.bf16.mxu0 0
        %751 = vmatpush1.bf16.msra.mxu0 0
        %752 = vmatprep.subr.bf16.mxu0 0
        %753 = vmatpush1.bf16.msra.mxu0 0
        %754 = vmatprep.subr.bf16.mxu0 0
        %755 = vmatpush1.bf16.msra.mxu0 0
        %756 = vmatprep.subr.bf16.mxu0 0
        %757 = vmatpush1.bf16.msra.mxu0 0
        %758 = vmatprep.subr.bf16.mxu0 0
        %759 = vmatpush1.bf16.msra.mxu0 0
        %760 = vmatprep.subr.bf16.mxu0 0
        %761 = vmatpush1.bf16.msra.mxu0 0
        %762 = vmatprep.subr.bf16.mxu0 0
        %763 = vmatpush1.bf16.msra.mxu0 0
        %764 = vmatprep.subr.bf16.mxu0 0
        %765 = vmatpush1.bf16.msra.mxu0 0
        %766 = vmatprep.mubr.bf16.mxu0 0
        %767 = vmatmul.mubr.bf16.gmra.mrb[0].mxu0 %v732
        %v768 = vpop.f32.mrb[0].mxu0
        %v769 = vadd.f32 0.0, %v768
        %v770 = vpop.f32.mrb[0].mxu0
        %v771 = vpop.f32.mrb[0].mxu0
        %v772 = vadd.f32 0.0, %v771
        %v773 = vpop.f32.mrb[0].mxu0
        %774 = vdwg.mxu0
        %777 = vrot.lane.b32.xlu0 %v769, 64
        %v778 = vpop.permute.xlu0 %777
        %779 = vrot.lane.b32.xlu0 %v772, 64
        %v780 = vpop.permute.xlu0 %779
        %v783 = vadd.f32 %v725, %v778
        %v784 = vadd.f32 %v726, %v780
        %vm785 = vcmask 1048064
        %786 = vst.msk [vmem:[#allocation4] sm:$0xff] %vm785, %v783
        %787 = vst.msk [vmem:[#allocation4 + $0x8] sm:$0xff] %vm785, %v784
        %788 = vst.msk [vmem:[%s665] sm:$0xff] %vm533, %v674
        %789 = vst.msk [vmem:[%s665 + $0x8] sm:$0xff] %vm533, %v675
        // Predicated region
        $region160: #{stage0_forward.11} parent=142 // pred_check
          %p790 = pneg %p409
        $region161: #{stage0_forward.11} parent=142 // pred_check_branch
          %792 = sbr.rel (%p790) target = $region163
        $region162: #{stage0_forward.11} parent=142 // pred_region
          %v793 = vld [vmem:[#allocation3] sm:$0xff]
          %v794 = vld [vmem:[#allocation3 + $0x8] sm:$0xff]
          %v795 = vrcp.pop %v793
          %v796 = vrcp.pop %v794
          %v797 = vld [vmem:[#allocation4] sm:$0xff]
          %v798 = vld [vmem:[#allocation4 + $0x8] sm:$0xff]
          %800 = vset.pattern.permute.xlu0 0
          %801 = vperm.xlu0 %800, %v795
          %v802 = vpop.permute.xlu0 %801
          %805 = vset.pattern.permute.xlu0 0
          %806 = vperm.xlu0 %805, %v796
          %v807 = vpop.permute.xlu0 %806
          %v809 = vmul.f32 %v797, %v802
          %v810 = vmul.f32 %v798, %v807
          %v811 = vpack.c.bf16 %v810, %v809
          %v813 = vunpack.c.l.b16 %v811
          %v814 = vunpack.c.h.b16 %v811
          %v815 = vpack.c.b16 %v813, %v813
          %v816 = vpack.c.b16 %v814, %v814
          %vm819 = vcmask 519168
          %820 = vst.msk [vmem:[%s406] sm:$0xf] %vm819, %v815
          %821 = vst.msk [vmem:[%s406 + $0x4] sm:$0xf] %vm819, %v816
          %v822 = vld [vmem:[%s698] sm:$0xff]
          %v823 = vld [vmem:[%s698 + $0x8] sm:$0xff]
          %v824 = vrcp.pop %v822
          %v825 = vrcp.pop %v823
          %v826 = vld [vmem:[#allocation4] sm:$0xff]
          %v827 = vld [vmem:[#allocation4 + $0x8] sm:$0xff]
          %829 = vset.pattern.permute.xlu0 0
          %830 = vperm.xlu0 %829, %v824
          %v831 = vpop.permute.xlu0 %830
          %834 = vset.pattern.permute.xlu0 0
          %835 = vperm.xlu0 %834, %v825
          %v836 = vpop.permute.xlu0 %835
          %v838 = vmul.f32 %v826, %v831
          %v839 = vmul.f32 %v827, %v836
          %v840 = vpack.c.bf16 %v839, %v838
          %v842 = vunpack.c.l.b16 %v840
          %v843 = vunpack.c.h.b16 %v840
          %v844 = vpack.c.b16 %v842, %v842
          %v845 = vpack.c.b16 %v843, %v843
          %vm848 = vcmask 1043968
          %849 = vst.msk [vmem:[%s406] sm:$0xf] %vm848, %v844
          %850 = vst.msk [vmem:[%s406 + $0x4] sm:$0xf] %vm848, %v845
        $region163: #{stage0_forward.11} parent=142 // pred_fallthru
          _
        %s851 = smul.u32 2, %s19
        %p852 = scmp.lt.s32.totalorder %s851, 3
        %s853 = scalar_select %p852, %s851, 3
        %p854 = scmp.lt.s32.totalorder %s20, 0
        %s855 = scalar_select %p854, %s20, 0
        %s856 = sadd.s32 %s855, %s853
        %s857 = smul.addr %s856, 4
        %s858 = scalar_lea.vmem %s3, %s857
        // Predicated region
        $region164: #{stage0_forward.11} parent=142 // pred_check
          %p859 = pneg %p145
        $region165: #{stage0_forward.11} parent=142 // pred_check_branch
          %861 = sbr.rel (%p859) target = $region167
        $region166: #{stage0_forward.11} parent=142 // pred_region
          %s862 = smul.u32 2, %s19
        $region167: #{stage0_forward.11} parent=142 // pred_fallthru
          _
      $region143: #{stage0_forward.11} parent=5 // pred_fallthru
        _
      %p863 = scmp.le.s32.totalorder 2, %s9
      // Predicated region
      $region168: #{stage0_forward.11} parent=5 // pred_check
        %p864 = pneg %p863
      $region169: #{stage0_forward.11} parent=5 // pred_check_branch
        %866 = sbr.rel (%p864) target = $region171
      $region170: #{stage0_forward.11} parent=5 // pred_region
        %s867 = ssub.s32 %s9, 2
        // Predicated region
        $region172: #{stage0_forward.11} parent=170 // pred_check
          %p868 = pneg %p151
        $region173: #{stage0_forward.11} parent=170 // pred_check_branch
          %870 = sbr.rel (%p868) target = $region175
        $region174: #{stage0_forward.11} parent=170 // pred_region
          %s871 = smul.u32 2, %s22
          %p872 = scmp.lt.s32.totalorder %s871, 3
          %s873 = scalar_select %p872, %s871, 3
          %p874 = scmp.lt.s32.totalorder %s23, 0
          %s875 = scalar_select %p874, %s23, 0
          %s876 = sadd.s32 %s875, %s873
          %s877 = smul.addr %s876, 4
          %s878 = scalar_lea.vmem %s3, %s877
        $region175: #{stage0_forward.11} parent=170 // pred_fallthru
          _
      $region171: #{stage0_forward.11} parent=5 // pred_fallthru
        _
    $region6: #{stage0_forward.11} parent=1 // loop_footer
      %s13 = sadd.s32 1, %s9
    $region7: #{stage0_forward.11} parent=1 // loop_footer_branch
      %8 = sbr.rel target = $region3
    $region8: #{stage0_forward.11} parent=1 // loop_exit
      _

// kernel: stage0_forward.13
$region0: #{stage0_forward.13}
  #allocation0 [shape = 'u32[]', space=smem, size = 0x4, offset = 0x4, fixed_abs, tag = 'smem constant byte address 0x4 - core index']
  #allocation1 [shape = 'u32[144,128]{1,0:T(1,128)}', space=vmem, size = 0x12000, scoped, tag = 'internal scratch']
  #allocation2 [shape = 'f32[32,128]{1,0:T(8,128)}', space=vmem, size = 0x4000, scoped, tag = 'scratch operand']
  %s0 = inlined_call_operand.vmem [shape: bf16[32,128], index: 0, kind: input, shape index: {}]
  %s1 = inlined_call_operand.vmem [shape: bf16[128,512], index: 1, kind: input, shape index: {}]
  %s2 = inlined_call_operand.vmem [shape: f32[1,512], index: 2, kind: input, shape index: {}]
  %s3 = inlined_call_operand.vmem [shape: bf16[512,128], index: 3, kind: input, shape index: {}]
  %s4 = inlined_call_operand.vmem [shape: f32[1,128], index: 4, kind: input, shape index: {}]
  %s5 = inlined_call_operand.vmem [shape: f32[1,128], index: 5, kind: input, shape index: {}]
  %s6 = inlined_call_operand.vmem [shape: f32[1,128], index: 6, kind: input, shape index: {}]
  %s7 = inlined_call_operand.vmem [shape: bf16[32,128], index: 7, kind: output, shape index: {}]
  %s8 = sld [smem:[#allocation0]]
  $region46: #{stage0_forward.13} parent=0
    _
  %s10 = ssub.s32 1, %s8
  %s11 = scalar_select 0, %s10, %s8
  // Predicated region
  $region2: #{stage0_forward.13} parent=0 // pred_check
    _
  $region3: #{stage0_forward.13} parent=0 // pred_check_branch
    %13 = sbr.rel (0) target = $region5
  $region4: #{stage0_forward.13} parent=0 // pred_region
    _
  $region5: #{stage0_forward.13} parent=0 // pred_fallthru
    _
  // Predicated region
  $region6: #{stage0_forward.13} parent=0 // pred_check
    _
  $region7: #{stage0_forward.13} parent=0 // pred_check_branch
    %15 = sbr.rel (0) target = $region9
  $region8: #{stage0_forward.13} parent=0 // pred_region
    _
  $region9: #{stage0_forward.13} parent=0 // pred_fallthru
    _
  // Predicated region
  $region10: #{stage0_forward.13} parent=0 // pred_check
    _
  $region11: #{stage0_forward.13} parent=0 // pred_check_branch
    %17 = sbr.rel (0) target = $region13
  $region12: #{stage0_forward.13} parent=0 // pred_region
    _
  $region13: #{stage0_forward.13} parent=0 // pred_fallthru
    _
  // Predicated region
  $region14: #{stage0_forward.13} parent=0 // pred_check
    _
  $region15: #{stage0_forward.13} parent=0 // pred_check_branch
    %19 = sbr.rel (0) target = $region17
  $region16: #{stage0_forward.13} parent=0 // pred_region
    _
  $region17: #{stage0_forward.13} parent=0 // pred_fallthru
    _
  // Predicated region
  $region18: #{stage0_forward.13} parent=0 // pred_check
    _
  $region19: #{stage0_forward.13} parent=0 // pred_check_branch
    %21 = sbr.rel (0) target = $region21
  $region20: #{stage0_forward.13} parent=0 // pred_region
    _
  $region21: #{stage0_forward.13} parent=0 // pred_fallthru
    _
  // Predicated region
  $region22: #{stage0_forward.13} parent=0 // pred_check
    _
  $region23: #{stage0_forward.13} parent=0 // pred_check_branch
    %23 = sbr.rel (0) target = $region25
  $region24: #{stage0_forward.13} parent=0 // pred_region
    _
  $region25: #{stage0_forward.13} parent=0 // pred_fallthru
    _
  // Predicated region
  $region26: #{stage0_forward.13} parent=0 // pred_check
    _
  $region27: #{stage0_forward.13} parent=0 // pred_check_branch
    %25 = sbr.rel (0) target = $region29
  $region28: #{stage0_forward.13} parent=0 // pred_region
    _
  $region29: #{stage0_forward.13} parent=0 // pred_fallthru
    _
  %p27 = scmp.eq.s32.totalorder 0, 0
  // Predicated region
  $region30: #{stage0_forward.13} parent=0 // pred_check
    %p28 = pneg %p27
  $region31: #{stage0_forward.13} parent=0 // pred_check_branch
    %30 = sbr.rel (%p28) target = $region33
  $region32: #{stage0_forward.13} parent=0 // pred_region
    %31 = vst [vmem:[#allocation2] sm:$0xff] 0.0
    %32 = vst [vmem:[#allocation2 + $0x8] sm:$0xff] 0.0
    %33 = vst [vmem:[#allocation2 + $0x10] sm:$0xff] 0.0
    %34 = vst [vmem:[#allocation2 + $0x18] sm:$0xff] 0.0
  $region33: #{stage0_forward.13} parent=0 // pred_fallthru
    _
  %v35 = vld [vmem:[%s0] sm:$0xf]
  %v36 = vld [vmem:[%s0 + $0x4] sm:$0xf]
  %v37 = vld [vmem:[%s0 + $0x8] sm:$0xf]
  %v38 = vld [vmem:[%s0 + $0xc] sm:$0xf]
  %v39 = vld [vmem:[%s1] sm:$0xff]
  %v40 = vld [vmem:[%s1 + $0x8] sm:$0xff]
  %v41 = vld [vmem:[%s1 + $0x10] sm:$0xff]
  %v42 = vld [vmem:[%s1 + $0x18] sm:$0xff]
  %v43 = vld [vmem:[%s1 + $0x20] sm:$0xff]
  %v44 = vld [vmem:[%s1 + $0x28] sm:$0xff]
  %v45 = vld [vmem:[%s1 + $0x30] sm:$0xff]
  %v46 = vld [vmem:[%s1 + $0x38] sm:$0xff]
  %v47 = vld [vmem:[%s1 + $0x40] sm:$0xff]
  %v48 = vld [vmem:[%s1 + $0x48] sm:$0xff]
  %v49 = vld [vmem:[%s1 + $0x50] sm:$0xff]
  %v50 = vld [vmem:[%s1 + $0x58] sm:$0xff]
  %v51 = vld [vmem:[%s1 + $0x60] sm:$0xff]
  %v52 = vld [vmem:[%s1 + $0x68] sm:$0xff]
  %v53 = vld [vmem:[%s1 + $0x70] sm:$0xff]
  %v54 = vld [vmem:[%s1 + $0x78] sm:$0xff]
  %v55 = vld [vmem:[%s1 + $0x80] sm:$0xff]
  %v56 = vld [vmem:[%s1 + $0x88] sm:$0xff]
  %v57 = vld [vmem:[%s1 + $0x90] sm:$0xff]
  %v58 = vld [vmem:[%s1 + $0x98] sm:$0xff]
  %v59 = vld [vmem:[%s1 + $0xa0] sm:$0xff]
  %v60 = vld [vmem:[%s1 + $0xa8] sm:$0xff]
  %v61 = vld [vmem:[%s1 + $0xb0] sm:$0xff]
  %v62 = vld [vmem:[%s1 + $0xb8] sm:$0xff]
  %v63 = vld [vmem:[%s1 + $0xc0] sm:$0xff]
  %v64 = vld [vmem:[%s1 + $0xc8] sm:$0xff]
  %v65 = vld [vmem:[%s1 + $0xd0] sm:$0xff]
  %v66 = vld [vmem:[%s1 + $0xd8] sm:$0xff]
  %v67 = vld [vmem:[%s1 + $0xe0] sm:$0xff]
  %v68 = vld [vmem:[%s1 + $0xe8] sm:$0xff]
  %v69 = vld [vmem:[%s1 + $0xf0] sm:$0xff]
  %v70 = vld [vmem:[%s1 + $0xf8] sm:$0xff]
  %v71 = vld [vmem:[%s2] sm:$0xf]
  %v73 = vlaneseq
  %v74 = vshrl.u32 %v73, 7
  %v75 = vsub.s32 0, %v74
  %v76 = vrot.slane %v71, %v75
  %v77 = vlaneseq
  %v78 = vshrl.u32 %v77, 7
  %v79 = vsub.s32 1, %v78
  %v80 = vrot.slane %v71, %v79
  %v81 = vlaneseq
  %v82 = vshrl.u32 %v81, 7
  %v83 = vsub.s32 2, %v82
  %v84 = vrot.slane %v71, %v83
  %v85 = vlaneseq
  %v86 = vshrl.u32 %v85, 7
  %v87 = vsub.s32 3, %v86
  %v88 = vrot.slane %v71, %v87
  %v97 = vunpack.c.l.b16 %v35
  %v98 = vunpack.c.l.b16 %v36
  %v99 = vunpack.c.l.b16 %v37
  %v100 = vunpack.c.l.b16 %v38
  %v101 = vpack.c.b16 %v98, %v97
  %v102 = vpack.c.b16 %v100, %v99
  %v137 = vunpack.c.l.b16 %v39
  %v138 = vunpack.c.h.b16 %v39
  %v139 = vunpack.c.l.b16 %v40
  %v140 = vunpack.c.h.b16 %v40
  %v141 = vunpack.c.l.b16 %v41
  %v142 = vunpack.c.h.b16 %v41
  %v143 = vunpack.c.l.b16 %v42
  %v144 = vunpack.c.h.b16 %v42
  %v145 = vunpack.c.l.b16 %v43
  %v146 = vunpack.c.h.b16 %v43
  %v147 = vunpack.c.l.b16 %v44
  %v148 = vunpack.c.h.b16 %v44
  %v149 = vunpack.c.l.b16 %v45
  %v150 = vunpack.c.h.b16 %v45
  %v151 = vunpack.c.l.b16 %v46
  %v152 = vunpack.c.h.b16 %v46
  %v153 = vunpack.c.l.b16 %v47
  %v154 = vunpack.c.h.b16 %v47
  %v155 = vunpack.c.l.b16 %v48
  %v156 = vunpack.c.h.b16 %v48
  %v157 = vunpack.c.l.b16 %v49
  %v158 = vunpack.c.h.b16 %v49
  %v159 = vunpack.c.l.b16 %v50
  %v160 = vunpack.c.h.b16 %v50
  %v161 = vunpack.c.l.b16 %v51
  %v162 = vunpack.c.h.b16 %v51
  %v163 = vunpack.c.l.b16 %v52
  %v164 = vunpack.c.h.b16 %v52
  %v165 = vunpack.c.l.b16 %v53
  %v166 = vunpack.c.h.b16 %v53
  %v167 = vunpack.c.l.b16 %v54
  %v168 = vunpack.c.h.b16 %v54
  %v169 = vunpack.c.l.b16 %v55
  %v170 = vunpack.c.h.b16 %v55
  %v171 = vunpack.c.l.b16 %v56
  %v172 = vunpack.c.h.b16 %v56
  %v173 = vunpack.c.l.b16 %v57
  %v174 = vunpack.c.h.b16 %v57
  %v175 = vunpack.c.l.b16 %v58
  %v176 = vunpack.c.h.b16 %v58
  %v177 = vunpack.c.l.b16 %v59
  %v178 = vunpack.c.h.b16 %v59
  %v179 = vunpack.c.l.b16 %v60
  %v180 = vunpack.c.h.b16 %v60
  %v181 = vunpack.c.l.b16 %v61
  %v182 = vunpack.c.h.b16 %v61
  %v183 = vunpack.c.l.b16 %v62
  %v184 = vunpack.c.h.b16 %v62
  %v185 = vunpack.c.l.b16 %v63
  %v186 = vunpack.c.h.b16 %v63
  %v187 = vunpack.c.l.b16 %v64
  %v188 = vunpack.c.h.b16 %v64
  %v189 = vunpack.c.l.b16 %v65
  %v190 = vunpack.c.h.b16 %v65
  %v191 = vunpack.c.l.b16 %v66
  %v192 = vunpack.c.h.b16 %v66
  %v193 = vunpack.c.l.b16 %v67
  %v194 = vunpack.c.h.b16 %v67
  %v195 = vunpack.c.l.b16 %v68
  %v196 = vunpack.c.h.b16 %v68
  %v197 = vunpack.c.l.b16 %v69
  %v198 = vunpack.c.h.b16 %v69
  %v199 = vunpack.c.l.b16 %v70
  %v200 = vunpack.c.h.b16 %v70
  %v201 = vpack.c.b16 %v141, %v137
  %v202 = vpack.c.b16 %v142, %v138
  %v203 = vpack.c.b16 %v143, %v139
  %v204 = vpack.c.b16 %v144, %v140
  %v205 = vpack.c.b16 %v149, %v145
  %v206 = vpack.c.b16 %v150, %v146
  %v207 = vpack.c.b16 %v151, %v147
  %v208 = vpack.c.b16 %v152, %v148
  %v209 = vpack.c.b16 %v157, %v153
  %v210 = vpack.c.b16 %v158, %v154
  %v211 = vpack.c.b16 %v159, %v155
  %v212 = vpack.c.b16 %v160, %v156
  %v213 = vpack.c.b16 %v165, %v161
  %v214 = vpack.c.b16 %v166, %v162
  %v215 = vpack.c.b16 %v167, %v163
  %v216 = vpack.c.b16 %v168, %v164
  %v217 = vpack.c.b16 %v173, %v169
  %v218 = vpack.c.b16 %v174, %v170
  %v219 = vpack.c.b16 %v175, %v171
  %v220 = vpack.c.b16 %v176, %v172
  %v221 = vpack.c.b16 %v181, %v177
  %v222 = vpack.c.b16 %v182, %v178
  %v223 = vpack.c.b16 %v183, %v179
  %v224 = vpack.c.b16 %v184, %v180
  %v225 = vpack.c.b16 %v189, %v185
  %v226 = vpack.c.b16 %v190, %v186
  %v227 = vpack.c.b16 %v191, %v187
  %v228 = vpack.c.b16 %v192, %v188
  %v229 = vpack.c.b16 %v197, %v193
  %v230 = vpack.c.b16 %v198, %v194
  %v231 = vpack.c.b16 %v199, %v195
  %v232 = vpack.c.b16 %v200, %v196
  %265 = vmatprep.subr.bf16.mxu0 %v202
  %266 = vmatpush1.bf16.msra.mxu0 %v201
  %267 = vmatprep.subr.bf16.mxu0 %v206
  %268 = vmatpush1.bf16.msra.mxu0 %v205
  %269 = vmatprep.subr.bf16.mxu0 %v210
  %270 = vmatpush1.bf16.msra.mxu0 %v209
  %271 = vmatprep.subr.bf16.mxu0 %v214
  %272 = vmatpush1.bf16.msra.mxu0 %v213
  %273 = vmatprep.subr.bf16.mxu0 %v218
  %274 = vmatpush1.bf16.msra.mxu0 %v217
  %275 = vmatprep.subr.bf16.mxu0 %v222
  %276 = vmatpush1.bf16.msra.mxu0 %v221
  %277 = vmatprep.subr.bf16.mxu0 %v226
  %278 = vmatpush1.bf16.msra.mxu0 %v225
  %279 = vmatprep.subr.bf16.mxu0 %v230
  %280 = vmatpush1.bf16.msra.mxu0 %v229
  %281 = vmatprep.subr.bf16.mxu0 0
  %282 = vmatpush1.bf16.msra.mxu0 0
  %283 = vmatprep.subr.bf16.mxu0 0
  %284 = vmatpush1.bf16.msra.mxu0 0
  %285 = vmatprep.subr.bf16.mxu0 0
  %286 = vmatpush1.bf16.msra.mxu0 0
  %287 = vmatprep.subr.bf16.mxu0 0
  %288 = vmatpush1.bf16.msra.mxu0 0
  %289 = vmatprep.subr.bf16.mxu0 0
  %290 = vmatpush1.bf16.msra.mxu0 0
  %291 = vmatprep.subr.bf16.mxu0 0
  %292 = vmatpush1.bf16.msra.mxu0 0
  %293 = vmatprep.subr.bf16.mxu0 0
  %294 = vmatpush1.bf16.msra.mxu0 0
  %295 = vmatprep.subr.bf16.mxu0 0
  %296 = vmatpush1.bf16.msra.mxu0 0
  %297 = vmatprep.mubr.bf16.mxu0 0
  %298 = vmatmul.mubr.bf16.gmra.mrb[0].mxu0 %v101
  %v299 = vpop.f32.mrb[0].mxu0
  %v300 = vadd.f32 %v76, %v299
  %v301 = vpop.f32.mrb[0].mxu0
  %v302 = vadd.f32 %v80, %v301
  %v303 = vpop.f32.mrb[0].mxu0
  %v304 = vadd.f32 %v76, %v303
  %v305 = vpop.f32.mrb[0].mxu0
  %v306 = vadd.f32 %v80, %v305
  %307 = vmatprep.mubr.bf16.mxu0 0
  %308 = vmatmul.mubr.bf16.gmra.mrb[0].mxu0 %v102
  %v309 = vpop.f32.mrb[0].mxu0
  %v310 = vadd.f32 %v76, %v309
  %v311 = vpop.f32.mrb[0].mxu0
  %v312 = vadd.f32 %v80, %v311
  %v313 = vpop.f32.mrb[0].mxu0
  %v314 = vadd.f32 %v76, %v313
  %v315 = vpop.f32.mrb[0].mxu0
  %v316 = vadd.f32 %v80, %v315
  %317 = vdwg.mxu0
  %318 = vmatprep.subr.bf16.mxu0 %v204
  %319 = vmatpush1.bf16.msra.mxu0 %v203
  %320 = vmatprep.subr.bf16.mxu0 %v208
  %321 = vmatpush1.bf16.msra.mxu0 %v207
  %322 = vmatprep.subr.bf16.mxu0 %v212
  %323 = vmatpush1.bf16.msra.mxu0 %v211
  %324 = vmatprep.subr.bf16.mxu0 %v216
  %325 = vmatpush1.bf16.msra.mxu0 %v215
  %326 = vmatprep.subr.bf16.mxu0 %v220
  %327 = vmatpush1.bf16.msra.mxu0 %v219
  %328 = vmatprep.subr.bf16.mxu0 %v224
  %329 = vmatpush1.bf16.msra.mxu0 %v223
  %330 = vmatprep.subr.bf16.mxu0 %v228
  %331 = vmatpush1.bf16.msra.mxu0 %v227
  %332 = vmatprep.subr.bf16.mxu0 %v232
  %333 = vmatpush1.bf16.msra.mxu0 %v231
  %334 = vmatprep.subr.bf16.mxu0 0
  %335 = vmatpush1.bf16.msra.mxu0 0
  %336 = vmatprep.subr.bf16.mxu0 0
  %337 = vmatpush1.bf16.msra.mxu0 0
  %338 = vmatprep.subr.bf16.mxu0 0
  %339 = vmatpush1.bf16.msra.mxu0 0
  %340 = vmatprep.subr.bf16.mxu0 0
  %341 = vmatpush1.bf16.msra.mxu0 0
  %342 = vmatprep.subr.bf16.mxu0 0
  %343 = vmatpush1.bf16.msra.mxu0 0
  %344 = vmatprep.subr.bf16.mxu0 0
  %345 = vmatpush1.bf16.msra.mxu0 0
  %346 = vmatprep.subr.bf16.mxu0 0
  %347 = vmatpush1.bf16.msra.mxu0 0
  %348 = vmatprep.subr.bf16.mxu0 0
  %349 = vmatpush1.bf16.msra.mxu0 0
  %350 = vmatprep.mubr.bf16.mxu0 0
  %351 = vmatmul.mubr.bf16.gmra.mrb[0].mxu0 %v101
  %v352 = vpop.f32.mrb[0].mxu0
  %v353 = vadd.f32 %v84, %v352
  %v354 = vpop.f32.mrb[0].mxu0
  %v355 = vadd.f32 %v88, %v354
  %v356 = vpop.f32.mrb[0].mxu0
  %v357 = vadd.f32 %v84, %v356
  %v358 = vpop.f32.mrb[0].mxu0
  %v359 = vadd.f32 %v88, %v358
  %360 = vmatprep.mubr.bf16.mxu0 0
  %361 = vmatmul.mubr.bf16.gmra.mrb[0].mxu0 %v102
  %v362 = vpop.f32.mrb[0].mxu0
  %v363 = vadd.f32 %v84, %v362
  %v364 = vpop.f32.mrb[0].mxu0
  %v365 = vadd.f32 %v88, %v364
  %v366 = vpop.f32.mrb[0].mxu0
  %v367 = vadd.f32 %v84, %v366
  %v368 = vpop.f32.mrb[0].mxu0
  %v369 = vadd.f32 %v88, %v368
  %370 = vdwg.mxu0
  %v371 = vmul.f32 %v300, 0.5
  %v372 = vmul.f32 %v302, 0.5
  %v373 = vmul.f32 %v353, 0.5
  %v374 = vmul.f32 %v355, 0.5
  %v375 = vmul.f32 %v304, 0.5
  %v376 = vmul.f32 %v306, 0.5
  %v377 = vmul.f32 %v357, 0.5
  %v378 = vmul.f32 %v359, 0.5
  %v379 = vmul.f32 %v310, 0.5
  %v380 = vmul.f32 %v312, 0.5
  %v381 = vmul.f32 %v363, 0.5
  %v382 = vmul.f32 %v365, 0.5
  %v383 = vmul.f32 %v314, 0.5
  %v384 = vmul.f32 %v316, 0.5
  %v385 = vmul.f32 %v367, 0.5
  %v386 = vmul.f32 %v369, 0.5
  %v387 = vmul.f32 %v300, 0.70710677
  %v388 = vmul.f32 %v302, 0.70710677
  %v389 = vmul.f32 %v353, 0.70710677
  %v390 = vmul.f32 %v355, 0.70710677
  %v391 = vmul.f32 %v304, 0.70710677
  %v392 = vmul.f32 %v306, 0.70710677
  %v393 = vmul.f32 %v357, 0.70710677
  %v394 = vmul.f32 %v359, 0.70710677
  %v395 = vmul.f32 %v310, 0.70710677
  %v396 = vmul.f32 %v312, 0.70710677
  %v397 = vmul.f32 %v363, 0.70710677
  %v398 = vmul.f32 %v365, 0.70710677
  %v399 = vmul.f32 %v314, 0.70710677
  %v400 = vmul.f32 %v316, 0.70710677
  %v401 = vmul.f32 %v367, 0.70710677
  %v402 = vmul.f32 %v369, 0.70710677
  %v403 = verf.f32.pop %v387
  %v404 = verf.f32.pop %v388
  %v405 = verf.f32.pop %v389
  %v406 = verf.f32.pop %v390
  %v407 = verf.f32.pop %v391
  %v408 = verf.f32.pop %v392
  %v409 = verf.f32.pop %v393
  %v410 = verf.f32.pop %v394
  %v411 = verf.f32.pop %v395
  %v412 = verf.f32.pop %v396
  %v413 = verf.f32.pop %v397
  %v414 = verf.f32.pop %v398
  %v415 = verf.f32.pop %v399
  %v416 = verf.f32.pop %v400
  %v417 = verf.f32.pop %v401
  %v418 = verf.f32.pop %v402
  %v419 = vadd.f32 %v403, 1.0
  %v420 = vadd.f32 %v404, 1.0
  %v421 = vadd.f32 %v405, 1.0
  %v422 = vadd.f32 %v406, 1.0
  %v423 = vadd.f32 %v407, 1.0
  %v424 = vadd.f32 %v408, 1.0
  %v425 = vadd.f32 %v409, 1.0
  %v426 = vadd.f32 %v410, 1.0
  %v427 = vadd.f32 %v411, 1.0
  %v428 = vadd.f32 %v412, 1.0
  %v429 = vadd.f32 %v413, 1.0
  %v430 = vadd.f32 %v414, 1.0
  %v431 = vadd.f32 %v415, 1.0
  %v432 = vadd.f32 %v416, 1.0
  %v433 = vadd.f32 %v417, 1.0
  %v434 = vadd.f32 %v418, 1.0
  %v435 = vmul.f32 %v371, %v419
  %v436 = vmul.f32 %v372, %v420
  %v437 = vmul.f32 %v373, %v421
  %v438 = vmul.f32 %v374, %v422
  %v439 = vmul.f32 %v375, %v423
  %v440 = vmul.f32 %v376, %v424
  %v441 = vmul.f32 %v377, %v425
  %v442 = vmul.f32 %v378, %v426
  %v443 = vmul.f32 %v379, %v427
  %v444 = vmul.f32 %v380, %v428
  %v445 = vmul.f32 %v381, %v429
  %v446 = vmul.f32 %v382, %v430
  %v447 = vmul.f32 %v383, %v431
  %v448 = vmul.f32 %v384, %v432
  %v449 = vmul.f32 %v385, %v433
  %v450 = vmul.f32 %v386, %v434
  %v451 = vld [vmem:[#allocation2] sm:$0xff]
  %v452 = vld [vmem:[#allocation2 + $0x8] sm:$0xff]
  %v453 = vld [vmem:[#allocation2 + $0x10] sm:$0xff]
  %v454 = vld [vmem:[#allocation2 + $0x18] sm:$0xff]
  %v455 = vpack.c.bf16 %v439, %v435
  %v456 = vpack.c.bf16 %v440, %v436
  %v457 = vpack.c.bf16 %v441, %v437
  %v458 = vpack.c.bf16 %v442, %v438
  %v459 = vpack.c.bf16 %v447, %v443
  %v460 = vpack.c.bf16 %v448, %v444
  %v461 = vpack.c.bf16 %v449, %v445
  %v462 = vpack.c.bf16 %v450, %v446
  %v463 = vld [vmem:[%s3] sm:$0xf]
  %v464 = vld [vmem:[%s3 + $0x4] sm:$0xf]
  %v465 = vld [vmem:[%s3 + $0x8] sm:$0xf]
  %v466 = vld [vmem:[%s3 + $0xc] sm:$0xf]
  %v467 = vld [vmem:[%s3 + $0x10] sm:$0xf]
  %v468 = vld [vmem:[%s3 + $0x14] sm:$0xf]
  %v469 = vld [vmem:[%s3 + $0x18] sm:$0xf]
  %v470 = vld [vmem:[%s3 + $0x1c] sm:$0xf]
  %v471 = vld [vmem:[%s3 + $0x20] sm:$0xf]
  %v472 = vld [vmem:[%s3 + $0x24] sm:$0xf]
  %v473 = vld [vmem:[%s3 + $0x28] sm:$0xf]
  %v474 = vld [vmem:[%s3 + $0x2c] sm:$0xf]
  %v475 = vld [vmem:[%s3 + $0x30] sm:$0xf]
  %v476 = vld [vmem:[%s3 + $0x34] sm:$0xf]
  %v477 = vld [vmem:[%s3 + $0x38] sm:$0xf]
  %v478 = vld [vmem:[%s3 + $0x3c] sm:$0xf]
  %v479 = vld [vmem:[%s3 + $0x40] sm:$0xf]
  %v480 = vld [vmem:[%s3 + $0x44] sm:$0xf]
  %v481 = vld [vmem:[%s3 + $0x48] sm:$0xf]
  %v482 = vld [vmem:[%s3 + $0x4c] sm:$0xf]
  %v483 = vld [vmem:[%s3 + $0x50] sm:$0xf]
  %v484 = vld [vmem:[%s3 + $0x54] sm:$0xf]
  %v485 = vld [vmem:[%s3 + $0x58] sm:$0xf]
  %v486 = vld [vmem:[%s3 + $0x5c] sm:$0xf]
  %v487 = vld [vmem:[%s3 + $0x60] sm:$0xf]
  %v488 = vld [vmem:[%s3 + $0x64] sm:$0xf]
  %v489 = vld [vmem:[%s3 + $0x68] sm:$0xf]
  %v490 = vld [vmem:[%s3 + $0x6c] sm:$0xf]
  %v491 = vld [vmem:[%s3 + $0x70] sm:$0xf]
  %v492 = vld [vmem:[%s3 + $0x74] sm:$0xf]
  %v493 = vld [vmem:[%s3 + $0x78] sm:$0xf]
  %v494 = vld [vmem:[%s3 + $0x7c] sm:$0xf]
  %v495 = vld [vmem:[%s3 + $0x80] sm:$0xf]
  %v496 = vld [vmem:[%s3 + $0x84] sm:$0xf]
  %v497 = vld [vmem:[%s3 + $0x88] sm:$0xf]
  %v498 = vld [vmem:[%s3 + $0x8c] sm:$0xf]
  %v499 = vld [vmem:[%s3 + $0x90] sm:$0xf]
  %v500 = vld [vmem:[%s3 + $0x94] sm:$0xf]
  %v501 = vld [vmem:[%s3 + $0x98] sm:$0xf]
  %v502 = vld [vmem:[%s3 + $0x9c] sm:$0xf]
  %v503 = vld [vmem:[%s3 + $0xa0] sm:$0xf]
  %v504 = vld [vmem:[%s3 + $0xa4] sm:$0xf]
  %v505 = vld [vmem:[%s3 + $0xa8] sm:$0xf]
  %v506 = vld [vmem:[%s3 + $0xac] sm:$0xf]
  %v507 = vld [vmem:[%s3 + $0xb0] sm:$0xf]
  %v508 = vld [vmem:[%s3 + $0xb4] sm:$0xf]
  %v509 = vld [vmem:[%s3 + $0xb8] sm:$0xf]
  %v510 = vld [vmem:[%s3 + $0xbc] sm:$0xf]
  %v511 = vld [vmem:[%s3 + $0xc0] sm:$0xf]
  %v512 = vld [vmem:[%s3 + $0xc4] sm:$0xf]
  %v513 = vld [vmem:[%s3 + $0xc8] sm:$0xf]
  %v514 = vld [vmem:[%s3 + $0xcc] sm:$0xf]
  %v515 = vld [vmem:[%s3 + $0xd0] sm:$0xf]
  %v516 = vld [vmem:[%s3 + $0xd4] sm:$0xf]
  %v517 = vld [vmem:[%s3 + $0xd8] sm:$0xf]
  %v518 = vld [vmem:[%s3 + $0xdc] sm:$0xf]
  %v519 = vld [vmem:[%s3 + $0xe0] sm:$0xf]
  %v520 = vld [vmem:[%s3 + $0xe4] sm:$0xf]
  %v521 = vld [vmem:[%s3 + $0xe8] sm:$0xf]
  %v522 = vld [vmem:[%s3 + $0xec] sm:$0xf]
  %v523 = vld [vmem:[%s3 + $0xf0] sm:$0xf]
  %v524 = vld [vmem:[%s3 + $0xf4] sm:$0xf]
  %v525 = vld [vmem:[%s3 + $0xf8] sm:$0xf]
  %v526 = vld [vmem:[%s3 + $0xfc] sm:$0xf]
  %v591 = vunpack.c.l.b16 %v463
  %v592 = vunpack.c.l.b16 %v464
  %v593 = vunpack.c.l.b16 %v465
  %v594 = vunpack.c.l.b16 %v466
  %v595 = vunpack.c.l.b16 %v467
  %v596 = vunpack.c.l.b16 %v468
  %v597 = vunpack.c.l.b16 %v469
  %v598 = vunpack.c.l.b16 %v470
  %v599 = vunpack.c.l.b16 %v471
  %v600 = vunpack.c.l.b16 %v472
  %v601 = vunpack.c.l.b16 %v473
  %v602 = vunpack.c.l.b16 %v474
  %v603 = vunpack.c.l.b16 %v475
  %v604 = vunpack.c.l.b16 %v476
  %v605 = vunpack.c.l.b16 %v477
  %v606 = vunpack.c.l.b16 %v478
  %v607 = vunpack.c.l.b16 %v479
  %v608 = vunpack.c.l.b16 %v480
  %v609 = vunpack.c.l.b16 %v481
  %v610 = vunpack.c.l.b16 %v482
  %v611 = vunpack.c.l.b16 %v483
  %v612 = vunpack.c.l.b16 %v484
  %v613 = vunpack.c.l.b16 %v485
  %v614 = vunpack.c.l.b16 %v486
  %v615 = vunpack.c.l.b16 %v487
  %v616 = vunpack.c.l.b16 %v488
  %v617 = vunpack.c.l.b16 %v489
  %v618 = vunpack.c.l.b16 %v490
  %v619 = vunpack.c.l.b16 %v491
  %v620 = vunpack.c.l.b16 %v492
  %v621 = vunpack.c.l.b16 %v493
  %v622 = vunpack.c.l.b16 %v494
  %v623 = vunpack.c.l.b16 %v495
  %v624 = vunpack.c.l.b16 %v496
  %v625 = vunpack.c.l.b16 %v497
  %v626 = vunpack.c.l.b16 %v498
  %v627 = vunpack.c.l.b16 %v499
  %v628 = vunpack.c.l.b16 %v500
  %v629 = vunpack.c.l.b16 %v501
  %v630 = vunpack.c.l.b16 %v502
  %v631 = vunpack.c.l.b16 %v503
  %v632 = vunpack.c.l.b16 %v504
  %v633 = vunpack.c.l.b16 %v505
  %v634 = vunpack.c.l.b16 %v506
  %v635 = vunpack.c.l.b16 %v507
  %v636 = vunpack.c.l.b16 %v508
  %v637 = vunpack.c.l.b16 %v509
  %v638 = vunpack.c.l.b16 %v510
  %v639 = vunpack.c.l.b16 %v511
  %v640 = vunpack.c.l.b16 %v512
  %v641 = vunpack.c.l.b16 %v513
  %v642 = vunpack.c.l.b16 %v514
  %v643 = vunpack.c.l.b16 %v515
  %v644 = vunpack.c.l.b16 %v516
  %v645 = vunpack.c.l.b16 %v517
  %v646 = vunpack.c.l.b16 %v518
  %v647 = vunpack.c.l.b16 %v519
  %v648 = vunpack.c.l.b16 %v520
  %v649 = vunpack.c.l.b16 %v521
  %v650 = vunpack.c.l.b16 %v522
  %v651 = vunpack.c.l.b16 %v523
  %v652 = vunpack.c.l.b16 %v524
  %v653 = vunpack.c.l.b16 %v525
  %v654 = vunpack.c.l.b16 %v526
  %v655 = vpack.c.b16 %v592, %v591
  %v656 = vpack.c.b16 %v594, %v593
  %v657 = vpack.c.b16 %v596, %v595
  %v658 = vpack.c.b16 %v598, %v597
  %v659 = vpack.c.b16 %v600, %v599
  %v660 = vpack.c.b16 %v602, %v601
  %v661 = vpack.c.b16 %v604, %v603
  %v662 = vpack.c.b16 %v606, %v605
  %v663 = vpack.c.b16 %v608, %v607
  %v664 = vpack.c.b16 %v610, %v609
  %v665 = vpack.c.b16 %v612, %v611
  %v666 = vpack.c.b16 %v614, %v613
  %v667 = vpack.c.b16 %v616, %v615
  %v668 = vpack.c.b16 %v618, %v617
  %v669 = vpack.c.b16 %v620, %v619
  %v670 = vpack.c.b16 %v622, %v621
  %v671 = vpack.c.b16 %v624, %v623
  %v672 = vpack.c.b16 %v626, %v625
  %v673 = vpack.c.b16 %v628, %v627
  %v674 = vpack.c.b16 %v630, %v629
  %v675 = vpack.c.b16 %v632, %v631
  %v676 = vpack.c.b16 %v634, %v633
  %v677 = vpack.c.b16 %v636, %v635
  %v678 = vpack.c.b16 %v638, %v637
  %v679 = vpack.c.b16 %v640, %v639
  %v680 = vpack.c.b16 %v642, %v641
  %v681 = vpack.c.b16 %v644, %v643
  %v682 = vpack.c.b16 %v646, %v645
  %v683 = vpack.c.b16 %v648, %v647
  %v684 = vpack.c.b16 %v650, %v649
  %v685 = vpack.c.b16 %v652, %v651
  %v686 = vpack.c.b16 %v654, %v653
  %719 = vmatprep.subr.bf16.mxu0 0
  %720 = vmatpush1.bf16.msra.mxu0 %v655
  %721 = vmatprep.subr.bf16.mxu0 0
  %722 = vmatpush1.bf16.msra.mxu0 %v656
  %723 = vmatprep.subr.bf16.mxu0 0
  %724 = vmatpush1.bf16.msra.mxu0 %v657
  %725 = vmatprep.subr.bf16.mxu0 0
  %726 = vmatpush1.bf16.msra.mxu0 %v658
  %727 = vmatprep.subr.bf16.mxu0 0
  %728 = vmatpush1.bf16.msra.mxu0 %v659
  %729 = vmatprep.subr.bf16.mxu0 0
  %730 = vmatpush1.bf16.msra.mxu0 %v660
  %731 = vmatprep.subr.bf16.mxu0 0
  %732 = vmatpush1.bf16.msra.mxu0 %v661
  %733 = vmatprep.subr.bf16.mxu0 0
  %734 = vmatpush1.bf16.msra.mxu0 %v662
  %735 = vmatprep.subr.bf16.mxu0 0
  %736 = vmatpush1.bf16.msra.mxu0 %v663
  %737 = vmatprep.subr.bf16.mxu0 0
  %738 = vmatpush1.bf16.msra.mxu0 %v664
  %739 = vmatprep.subr.bf16.mxu0 0
  %740 = vmatpush1.bf16.msra.mxu0 %v665
  %741 = vmatprep.subr.bf16.mxu0 0
  %742 = vmatpush1.bf16.msra.mxu0 %v666
  %743 = vmatprep.subr.bf16.mxu0 0
  %744 = vmatpush1.bf16.msra.mxu0 %v667
  %745 = vmatprep.subr.bf16.mxu0 0
  %746 = vmatpush1.bf16.msra.mxu0 %v668
  %747 = vmatprep.subr.bf16.mxu0 0
  %748 = vmatpush1.bf16.msra.mxu0 %v669
  %749 = vmatprep.subr.bf16.mxu0 0
  %750 = vmatpush1.bf16.msra.mxu0 %v670
  %751 = vmatprep.mubr.bf16.mxu0 %v456
  %752 = vmatmul.mubr.bf16.gmra.mrb[0].mxu0 %v455
  %v753 = vpop.f32.mrb[0].mxu0
  %v754 = vadd.f32 0.0, %v753
  %v755 = vpop.f32.mrb[0].mxu0
  %v756 = vpop.f32.mrb[0].mxu0
  %v757 = vadd.f32 0.0, %v756
  %v758 = vpop.f32.mrb[0].mxu0
  %759 = vmatprep.mubr.bf16.mxu0 %v460
  %760 = vmatmul.mubr.bf16.gmra.mrb[0].mxu0 %v459
  %v761 = vpop.f32.mrb[0].mxu0
  %v762 = vadd.f32 0.0, %v761
  %v763 = vpop.f32.mrb[0].mxu0
  %v764 = vpop.f32.mrb[0].mxu0
  %v765 = vadd.f32 0.0, %v764
  %v766 = vpop.f32.mrb[0].mxu0
  %767 = vdwg.mxu0
  %768 = vmatprep.subr.bf16.mxu0 0
  %769 = vmatpush1.bf16.msra.mxu0 %v671
  %770 = vmatprep.subr.bf16.mxu0 0
  %771 = vmatpush1.bf16.msra.mxu0 %v672
  %772 = vmatprep.subr.bf16.mxu0 0
  %773 = vmatpush1.bf16.msra.mxu0 %v673
  %774 = vmatprep.subr.bf16.mxu0 0
  %775 = vmatpush1.bf16.msra.mxu0 %v674
  %776 = vmatprep.subr.bf16.mxu0 0
  %777 = vmatpush1.bf16.msra.mxu0 %v675
  %778 = vmatprep.subr.bf16.mxu0 0
  %779 = vmatpush1.bf16.msra.mxu0 %v676
  %780 = vmatprep.subr.bf16.mxu0 0
  %781 = vmatpush1.bf16.msra.mxu0 %v677
  %782 = vmatprep.subr.bf16.mxu0 0
  %783 = vmatpush1.bf16.msra.mxu0 %v678
  %784 = vmatprep.subr.bf16.mxu0 0
  %785 = vmatpush1.bf16.msra.mxu0 %v679
  %786 = vmatprep.subr.bf16.mxu0 0
  %787 = vmatpush1.bf16.msra.mxu0 %v680
  %788 = vmatprep.subr.bf16.mxu0 0
  %789 = vmatpush1.bf16.msra.mxu0 %v681
  %790 = vmatprep.subr.bf16.mxu0 0
  %791 = vmatpush1.bf16.msra.mxu0 %v682
  %792 = vmatprep.subr.bf16.mxu0 0
  %793 = vmatpush1.bf16.msra.mxu0 %v683
  %794 = vmatprep.subr.bf16.mxu0 0
  %795 = vmatpush1.bf16.msra.mxu0 %v684
  %796 = vmatprep.subr.bf16.mxu0 0
  %797 = vmatpush1.bf16.msra.mxu0 %v685
  %798 = vmatprep.subr.bf16.mxu0 0
  %799 = vmatpush1.bf16.msra.mxu0 %v686
  %800 = vmatprep.mubr.bf16.mxu0 %v458
  %801 = vmatmul.mubr.bf16.gmra.mrb[0].mxu0 %v457
  %v802 = vpop.f32.mrb[0].mxu0
  %v803 = vadd.f32 %v754, %v802
  %v804 = vpop.f32.mrb[0].mxu0
  %v805 = vpop.f32.mrb[0].mxu0
  %v806 = vadd.f32 %v757, %v805
  %v807 = vpop.f32.mrb[0].mxu0
  %808 = vmatprep.mubr.bf16.mxu0 %v462
  %809 = vmatmul.mubr.bf16.gmra.mrb[0].mxu0 %v461
  %v810 = vpop.f32.mrb[0].mxu0
  %v811 = vadd.f32 %v762, %v810
  %v812 = vpop.f32.mrb[0].mxu0
  %v813 = vpop.f32.mrb[0].mxu0
  %v814 = vadd.f32 %v765, %v813
  %v815 = vpop.f32.mrb[0].mxu0
  %816 = vdwg.mxu0
  %v817 = vadd.f32 %v451, %v803
  %v818 = vadd.f32 %v452, %v806
  %v819 = vadd.f32 %v453, %v811
  %v820 = vadd.f32 %v454, %v814
  %821 = vst [vmem:[#allocation2] sm:$0xff] %v817
  %822 = vst [vmem:[#allocation2 + $0x8] sm:$0xff] %v818
  %823 = vst [vmem:[#allocation2 + $0x10] sm:$0xff] %v819
  %824 = vst [vmem:[#allocation2 + $0x18] sm:$0xff] %v820
  // Predicated region
  $region34: #{stage0_forward.13} parent=0 // pred_check
    %p825 = pneg %p27
  $region35: #{stage0_forward.13} parent=0 // pred_check_branch
    %827 = sbr.rel (%p825) target = $region37
  $region36: #{stage0_forward.13} parent=0 // pred_region
    %v828 = vld [vmem:[#allocation2] sm:$0xff]
    %v829 = vld [vmem:[#allocation2 + $0x8] sm:$0xff]
    %v830 = vld [vmem:[#allocation2 + $0x10] sm:$0xff]
    %v831 = vld [vmem:[#allocation2 + $0x18] sm:$0xff]
    %v832 = vld [vmem:[%s4] sm:$0x1]
    %v834 = vlaneseq
    %v835 = vshrl.u32 %v834, 7
    %v836 = vsub.s32 0, %v835
    %v837 = vrot.slane %v832, %v836
    %v839 = vadd.f32 %v828, %v837
    %v840 = vadd.f32 %v829, %v837
    %v841 = vadd.f32 %v830, %v837
    %v842 = vadd.f32 %v831, %v837
    %v843 = vld [vmem:[%s0] sm:$0xf]
    %v844 = vld [vmem:[%s0 + $0x4] sm:$0xf]
    %v845 = vld [vmem:[%s0 + $0x8] sm:$0xf]
    %v846 = vld [vmem:[%s0 + $0xc] sm:$0xf]
    %v847 = vunpack.c.l.bf16 %v843
    %v848 = vunpack.c.l.bf16 %v844
    %v849 = vunpack.c.l.bf16 %v845
    %v850 = vunpack.c.l.bf16 %v846
    %v851 = vadd.f32 %v839, %v847
    %v852 = vadd.f32 %v840, %v848
    %v853 = vadd.f32 %v841, %v849
    %v854 = vadd.f32 %v842, %v850
    %855 = vadd.xlane.f32.xlu0 %v851
    %v856 = vpop.xlane.xlu0 %855
    %857 = vadd.xlane.f32.xlu0 %v852
    %v858 = vpop.xlane.xlu0 %857
    %859 = vadd.xlane.f32.xlu0 %v853
    %v860 = vpop.xlane.xlu0 %859
    %861 = vadd.xlane.f32.xlu0 %v854
    %v862 = vpop.xlane.xlu0 %861
    %v863 = vrcp.pop 128.0
    %v864 = vmul.f32 %v856, %v863
    %v865 = vmul.f32 %v858, %v863
    %v866 = vmul.f32 %v860, %v863
    %v867 = vmul.f32 %v862, %v863
    %v868 = vsub.f32 %v851, %v864
    %v869 = vsub.f32 %v852, %v865
    %v870 = vsub.f32 %v853, %v866
    %v871 = vsub.f32 %v854, %v867
    %v872 = vmul.f32 %v868, %v868
    %v873 = vmul.f32 %v869, %v869
    %v874 = vmul.f32 %v870, %v870
    %v875 = vmul.f32 %v871, %v871
    %876 = vadd.xlane.f32.xlu0 %v872
    %v877 = vpop.xlane.xlu0 %876
    %878 = vadd.xlane.f32.xlu0 %v873
    %v879 = vpop.xlane.xlu0 %878
    %880 = vadd.xlane.f32.xlu0 %v874
    %v881 = vpop.xlane.xlu0 %880
    %882 = vadd.xlane.f32.xlu0 %v875
    %v883 = vpop.xlane.xlu0 %882
    %v884 = vmul.f32 %v877, %v863
    %v885 = vmul.f32 %v879, %v863
    %v886 = vmul.f32 %v881, %v863
    %v887 = vmul.f32 %v883, %v863
    %v888 = vadd.f32 %v884, 1e-12
    %v889 = vadd.f32 %v885, 1e-12
    %v890 = vadd.f32 %v886, 1e-12
    %v891 = vadd.f32 %v887, 1e-12
    %v892 = vrsqrt.pop %v888
    %v893 = vrsqrt.pop %v889
    %v894 = vrsqrt.pop %v890
    %v895 = vrsqrt.pop %v891
    %v896 = vmul.f32 %v868, %v892
    %v897 = vmul.f32 %v869, %v893
    %v898 = vmul.f32 %v870, %v894
    %v899 = vmul.f32 %v871, %v895
    %v900 = vld [vmem:[%s5] sm:$0x1]
    %v902 = vlaneseq
    %v903 = vshrl.u32 %v902, 7
    %v904 = vsub.s32 0, %v903
    %v905 = vrot.slane %v900, %v904
    %v907 = vmul.f32 %v896, %v905
    %v908 = vmul.f32 %v897, %v905
    %v909 = vmul.f32 %v898, %v905
    %v910 = vmul.f32 %v899, %v905
    %v911 = vld [vmem:[%s6] sm:$0x1]
    %v913 = vlaneseq
    %v914 = vshrl.u32 %v913, 7
    %v915 = vsub.s32 0, %v914
    %v916 = vrot.slane %v911, %v915
    %v918 = vadd.f32 %v907, %v916
    %v919 = vadd.f32 %v908, %v916
    %v920 = vadd.f32 %v909, %v916
    %v921 = vadd.f32 %v910, %v916
    %v922 = vpack.c.bf16 %v919, %v918
    %v923 = vpack.c.bf16 %v921, %v920
    %v926 = vunpack.c.l.b16 %v922
    %v927 = vunpack.c.h.b16 %v922
    %v928 = vunpack.c.l.b16 %v923
    %v929 = vunpack.c.h.b16 %v923
    %v930 = vpack.c.b16 %v926, %v926
    %v931 = vpack.c.b16 %v927, %v927
    %v932 = vpack.c.b16 %v928, %v928
    %v933 = vpack.c.b16 %v929, %v929
    %938 = vst [vmem:[%s7] sm:$0xf] %v930
    %939 = vst [vmem:[%s7 + $0x4] sm:$0xf] %v931
    %940 = vst [vmem:[%s7 + $0x8] sm:$0xf] %v932
    %941 = vst [vmem:[%s7 + $0xc] sm:$0xf] %v933
  $region37: #{stage0_forward.13} parent=0 // pred_fallthru
    _
  // Predicated region
  $region38: #{stage0_forward.13} parent=0 // pred_check
    _
  $region39: #{stage0_forward.13} parent=0 // pred_check_branch
    %943 = sbr.rel (0) target = $region41
  $region40: #{stage0_forward.13} parent=0 // pred_region
    _
  $region41: #{stage0_forward.13} parent=0 // pred_fallthru
    _
  // Predicated region
  $region42: #{stage0_forward.13} parent=0 // pred_check
    _
  $region43: #{stage0_forward.13} parent=0 // pred_check_branch
    %945 = sbr.rel (0) target = $region45
  $region44: #{stage0_forward.13} parent=0 // pred_region
    _
  $region45: #{stage0_forward.13} parent=0 // pred_fallthru
    _

</llo_original>
